<compile_context>
chip_gen: v7x
topology: tpu7x:2x2x1
jax: 0.10.0
libtpu: 0.0.40
codegen_flags: <defaults>
</compile_context>

<pallas_src>
import jax
import jax.numpy as jnp
from jax.experimental import pallas as pl
from jax.experimental.pallas import tpu as pltpu

# ----------------------------- config -----------------------------
B = 2             # batch
L = 8             # session length
K = 4             # number of neighbor sessions
D = 32            # embedding dim
HEAD = 4
D_K = D // HEAD
ITEM_NUM = 64
SESSION_NUM = 32
LAYERS = 2        # self_attention_layers
ALPHA = 0.5
EPS = 1e-5        # torch.nn.LayerNorm default eps
BL = B * L
ITEM_PAD = 128    # pad item axis to a lane-dense multiple of 128
MASK_NEG = -1e30  # finite "-inf": identical softmax zeros, no NaN if fully masked
# dropout = 0 in this synthetic config -> identity, omitted.


# ----------------------- fused forward kernel -----------------------
def cosan_fused_kernel(item_ref, nemb_ref, nw_ref, bias_ref,
                       wqkv_ref, w1_ref, w2_ref, vec_ref, itemT_ref,
                       scores_ref, attn_scr):
    # ---- collaborative item embedding fusion ----
    ne = nemb_ref[...]                            # (BL, K, D)
    nw = nw_ref[...]                              # (BL, K)
    f = jnp.sum(nw[:, :, None] * ne, axis=1)      # (BL, D) == (1,K)@(K,D) per position
    x = item_ref[...] + jnp.float32(ALPHA) * f    # (BL, D)

    bias_all = bias_ref[...]                      # (BL, L) additive key-mask bias
    inv_sqrt_dk = jnp.float32(1.0 / (D_K ** 0.5))

    # ---- stacked encoder layers (static loop, weights VMEM-resident) ----
    for l in range(LAYERS):
        wqkv = wqkv_ref[l]                        # (D, 3D)
        w1 = w1_ref[l]                            # (D, D)
        w2 = w2_ref[l]                            # (D, D)
        vecs = vec_ref[l]                         # (4, D): gamma, beta, b1, b2
        gamma = jnp.broadcast_to(vecs[0:1, :], (BL, D))   # hoisted broadcasts:
        beta = jnp.broadcast_to(vecs[1:2, :], (BL, D))    # reused by both layernorms
        b1 = vecs[2:3, :]                         # (1, D)
        b2 = vecs[3:4, :]                         # (1, D)

        def layer_norm(v):
            mu = jnp.mean(v, axis=-1, keepdims=True)
            var = jnp.mean((v - mu) ** 2, axis=-1, keepdims=True)
            return (v - mu) * jax.lax.rsqrt(var + EPS) * gamma + beta

        xn = layer_norm(x)

        # fused QKV projection; q gets ReLU per the reference
        qkv = jnp.dot(xn, wqkv, preferred_element_type=jnp.float32)   # (BL, 3D)
        q = jnp.maximum(qkv[:, 0:D], 0.0)
        k = qkv[:, D:2 * D]
        v = qkv[:, 2 * D:3 * D]

        # multi-head self-attention: static loops over (batch, head); each
        # head's (L, D_K) result lands in its column slice of the VMEM scratch.
        for b in range(B):
            r0 = b * L
            qb = q[r0:r0 + L, :]
            kb = k[r0:r0 + L, :]
            vb = v[r0:r0 + L, :]
            bias_b = bias_all[r0:r0 + L, :]       # (L, L), key mask for this batch
            for h in range(HEAD):
                c0 = h * D_K
                qh = qb[:, c0:c0 + D_K]
                kh = kb[:, c0:c0 + D_K]
                vh = vb[:, c0:c0 + D_K]
                s = jnp.dot(qh, kh.T, preferred_element_type=jnp.float32) * inv_sqrt_dk
                s = s + bias_b
                s = s - jnp.max(s, axis=-1, keepdims=True)
                p = jnp.exp(s)
                p = p * pl.reciprocal(jnp.sum(p, axis=-1, keepdims=True), approx=True)
                attn_scr[r0:r0 + L, c0:c0 + D_K] = jnp.dot(
                    p, vh, preferred_element_type=jnp.float32)

        # residual 1 is on the normed x, as in the reference Encoder
        h1 = xn + attn_scr[...]

        # FFN on LayerNorm(h1), residual 2
        h1n = layer_norm(h1)
        hidden = jnp.maximum(
            jnp.dot(h1n, w1, preferred_element_type=jnp.float32) + b1, 0.0)
        ffn = jnp.dot(hidden, w2, preferred_element_type=jnp.float32) + b2
        x = h1 + ffn

    # ---- final-position embedding + item scoring (lane-dense padded output) ----
    final = x.reshape(B, L, D)[:, L - 1, :]        # (B, D)
    scores_ref[...] = jnp.dot(final, itemT_ref[...],
                              preferred_element_type=jnp.float32)


# ----------------------------- parameters -----------------------------
def init_params(key):
    keys = jax.random.split(key, 2 + LAYERS)
    item_emb = 0.1 * jax.random.normal(keys[0], (ITEM_NUM, D), jnp.float32)
    item_emb = item_emb.at[0].set(0.0)            # padding_idx=0
    sess_emb = 0.1 * jax.random.normal(keys[1], (SESSION_NUM, D), jnp.float32)
    sess_emb = sess_emb.at[0].set(0.0)            # padding_idx=0

    wqkv_all, w1_all, w2_all, vec_all = [], [], [], []
    for l in range(LAYERS):
        lk = jax.random.split(keys[2 + l], 7)
        wq = 0.1 * jax.random.normal(lk[0], (D, D), jnp.float32)
        wk = 0.1 * jax.random.normal(lk[1], (D, D), jnp.float32)
        wv = 0.1 * jax.random.normal(lk[2], (D, D), jnp.float32)
        w1 = 0.1 * jax.random.normal(lk[3], (D, D), jnp.float32)
        b1 = 0.1 * jax.random.normal(lk[4], (D,), jnp.float32)
        w2 = 0.1 * jax.random.normal(lk[5], (D, D), jnp.float32)
        b2 = 0.1 * jax.random.normal(lk[6], (D,), jnp.float32)
        gamma = jnp.ones((D,), jnp.float32)       # LayerNorm default init
        beta = jnp.zeros((D,), jnp.float32)
        wqkv_all.append(jnp.concatenate([wq, wk, wv], axis=1))  # (D, 3D)
        w1_all.append(w1)
        w2_all.append(w2)
        vec_all.append(jnp.stack([gamma, beta, b1, b2], axis=0))  # (4, D)

    # NOTE: `predict_linear` exists in the reference __init__ but is unused in forward.
    return {
        "item_embedding": item_emb,
        "session_embedding": sess_emb,
        "wqkv": jnp.stack(wqkv_all),   # (LAYERS, D, 3D)
        "w1": jnp.stack(w1_all),       # (LAYERS, D, D)
        "w2": jnp.stack(w2_all),       # (LAYERS, D, D)
        "vec": jnp.stack(vec_all),     # (LAYERS, 4, D)
    }


# ----------------------------- forward -----------------------------
def cosan_forward(params, session_id, session, neighbor_id, neighbor_weight):
    del session_id  # present in the reference signature but unused in forward
    item_table = params["item_embedding"]          # (ITEM_NUM, D)
    sess_table = params["session_embedding"]       # (SESSION_NUM, D)

    # embedding gathers + layout plumbing (plain-JAX glue)
    item_emb = item_table[session].reshape(BL, D)                  # (BL, D)
    neighbor_emb = sess_table[neighbor_id].reshape(BL, K, D)       # (BL, K, D)
    nw = neighbor_weight.reshape(BL, K).astype(jnp.float32)        # (BL, K)

    # additive key mask, broadcast to (L, L) per batch here (free plumbing)
    key_mask = (session != 0)                                      # (B, L)
    bias = jnp.where(key_mask, 0.0, MASK_NEG).astype(jnp.float32)
    bias_mat = jnp.broadcast_to(bias[:, None, :], (B, L, L)).reshape(BL, L)

    # item table transposed and zero-padded to a lane-dense 128-wide slab
    item_t_pad = jnp.zeros((D, ITEM_PAD), jnp.float32).at[:, :ITEM_NUM].set(item_table.T)

    def full(shape):
        return pl.BlockSpec(shape, lambda i: (0,) * len(shape))

    scores_pad = pl.pallas_call(
        cosan_fused_kernel,
        out_shape=jax.ShapeDtypeStruct((B, ITEM_PAD), jnp.float32),
        grid=(1,),
        in_specs=[
            full((BL, D)),             # item embeddings (flattened batch)
            full((BL, K, D)),          # neighbor session embeddings
            full((BL, K)),             # neighbor weights
            full((BL, L)),             # additive key-mask bias
            full((LAYERS, D, 3 * D)),  # fused Wqkv per layer
            full((LAYERS, D, D)),      # W1 per layer
            full((LAYERS, D, D)),      # W2 per layer
            full((LAYERS, 4, D)),      # gamma, beta, b1, b2 per layer
            full((D, ITEM_PAD)),       # item_table.T, lane-padded
        ],
        out_specs=full((B, ITEM_PAD)),
        scratch_shapes=[pltpu.VMEM((BL, D), jnp.float32)],   # per-head attn assembly
        compiler_params=pltpu.CompilerParams(
            dimension_semantics=("arbitrary",),
            vmem_limit_bytes=16 * 1024 * 1024,   # working set << 1 MiB; explicit budget
        ),
    )(item_emb, neighbor_emb, nw, bias_mat,
      params["wqkv"], params["w1"], params["w2"], params["vec"], item_t_pad)

    return scores_pad[:, :ITEM_NUM]


cosan_forward_jit = jax.jit(cosan_forward)


# ----------------------------- main -----------------------------
if __name__ == "__main__":
    key = jax.random.PRNGKey(0)
    pk, k1, k2, k3 = jax.random.split(key, 4)

    params = init_params(pk)

    session_id = jnp.arange(1, B + 1, dtype=jnp.int32)                       # (B,)
    session = jax.random.randint(k1, (B, L), 1, ITEM_NUM, dtype=jnp.int32)   # (B, L)
    session = session.at[0, 0].set(0)  # exercise the padding mask
    neighbor_id = jax.random.randint(k2, (B, L, K), 1, SESSION_NUM, dtype=jnp.int32)
    neighbor_weight = jax.random.uniform(k3, (B, L, K), jnp.float32)
    neighbor_weight = neighbor_weight / jnp.sum(neighbor_weight, axis=-1, keepdims=True)

    scores = cosan_forward_jit(params, session_id, session, neighbor_id, neighbor_weight)
    scores = jax.block_until_ready(scores)
    assert scores.shape == (B, ITEM_NUM)
    assert bool(jnp.all(jnp.isfinite(scores)))
    print("KERNEL_OK")
</pallas_src>

<mosaic_0001>
module attributes {stable_mosaic.version = 11 : i64} {
  func.func @cosan_fused_kernel(%arg0: i32, %arg1: memref<16x32xf32, #tpu.memory_space<vmem>>, %arg2: memref<16x4x32xf32, #tpu.memory_space<vmem>>, %arg3: memref<16x4xf32, #tpu.memory_space<vmem>>, %arg4: memref<16x8xf32, #tpu.memory_space<vmem>>, %arg5: memref<2x32x96xf32, #tpu.memory_space<vmem>>, %arg6: memref<2x32x32xf32, #tpu.memory_space<vmem>>, %arg7: memref<2x32x32xf32, #tpu.memory_space<vmem>>, %arg8: memref<2x4x32xf32, #tpu.memory_space<vmem>>, %arg9: memref<32x128xf32, #tpu.memory_space<vmem>>, %arg10: memref<2x128xf32, #tpu.memory_space<vmem>>, %arg11: memref<16x32xf32, #tpu.memory_space<vmem>>) attributes {dimension_semantics = [#tpu.dimension_semantics<arbitrary>], iteration_bounds = array<i64: 1>, scalar_prefetch = 0 : i64, scratch_operands = 1 : i64, tpu.core_type = #tpu.core_type<tc>, window_params = [{pipeline_mode = #tpu.pipeline_mode<synchronous>, transform_indices = @transform_0, window_bounds = array<i64: 16, 32>}, {pipeline_mode = #tpu.pipeline_mode<synchronous>, transform_indices = @transform_1, window_bounds = array<i64: 16, 4, 32>}, {pipeline_mode = #tpu.pipeline_mode<synchronous>, transform_indices = @transform_2, window_bounds = array<i64: 16, 4>}, {pipeline_mode = #tpu.pipeline_mode<synchronous>, transform_indices = @transform_3, window_bounds = array<i64: 16, 8>}, {pipeline_mode = #tpu.pipeline_mode<synchronous>, transform_indices = @transform_4, window_bounds = array<i64: 2, 32, 96>}, {pipeline_mode = #tpu.pipeline_mode<synchronous>, transform_indices = @transform_5, window_bounds = array<i64: 2, 32, 32>}, {pipeline_mode = #tpu.pipeline_mode<synchronous>, transform_indices = @transform_6, window_bounds = array<i64: 2, 32, 32>}, {pipeline_mode = #tpu.pipeline_mode<synchronous>, transform_indices = @transform_7, window_bounds = array<i64: 2, 4, 32>}, {pipeline_mode = #tpu.pipeline_mode<synchronous>, transform_indices = @transform_8, window_bounds = array<i64: 32, 128>}, {pipeline_mode = #tpu.pipeline_mode<synchronous>, transform_indices = @transform_9, window_bounds = array<i64: 2, 128>}]} {
    %c0 = arith.constant 0 : index
    %c0_0 = arith.constant 0 : index
    %c0_1 = arith.constant 0 : index
    %0 = vector.load %arg2[%c0, %c0_0, %c0_1] : memref<16x4x32xf32, #tpu.memory_space<vmem>>, vector<16x4x32xf32>
    %c0_2 = arith.constant 0 : index
    %c0_3 = arith.constant 0 : index
    %1 = vector.load %arg3[%c0_2, %c0_3] : memref<16x4xf32, #tpu.memory_space<vmem>>, vector<16x4xf32>
    %2 = vector.shape_cast %1 : vector<16x4xf32> to vector<16x4x1xf32>
    %3 = vector.broadcast %2 : vector<16x4x1xf32> to vector<16x4x32xf32>
    %4 = arith.mulf %3, %0 : vector<16x4x32xf32>
    %cst = arith.constant dense<0.000000e+00> : vector<16x32xf32>
    %5 = vector.multi_reduction <add>, %4, %cst [1] : vector<16x4x32xf32> to vector<16x32xf32>
    %c0_4 = arith.constant 0 : index
    %c0_5 = arith.constant 0 : index
    %6 = vector.load %arg1[%c0_4, %c0_5] : memref<16x32xf32, #tpu.memory_space<vmem>>, vector<16x32xf32>
    %cst_6 = arith.constant 5.000000e-01 : f32
    %7 = vector.broadcast %cst_6 : f32 to vector<16x32xf32>
    %8 = arith.mulf %7, %5 : vector<16x32xf32>
    %9 = arith.addf %6, %8 : vector<16x32xf32>
    %c0_7 = arith.constant 0 : index
    %c0_8 = arith.constant 0 : index
    %10 = vector.load %arg4[%c0_7, %c0_8] : memref<16x8xf32, #tpu.memory_space<vmem>>, vector<16x8xf32>
    %c0_9 = arith.constant 0 : index
    %c0_10 = arith.constant 0 : index
    %c0_11 = arith.constant 0 : index
    %11 = vector.load %arg5[%c0_9, %c0_10, %c0_11] : memref<2x32x96xf32, #tpu.memory_space<vmem>>, vector<1x32x96xf32>
    %12 = vector.shape_cast %11 : vector<1x32x96xf32> to vector<32x96xf32>
    %c0_12 = arith.constant 0 : index
    %c0_13 = arith.constant 0 : index
    %c0_14 = arith.constant 0 : index
    %13 = vector.load %arg6[%c0_12, %c0_13, %c0_14] : memref<2x32x32xf32, #tpu.memory_space<vmem>>, vector<1x32x32xf32>
    %14 = vector.shape_cast %13 : vector<1x32x32xf32> to vector<32x32xf32>
    %c0_15 = arith.constant 0 : index
    %c0_16 = arith.constant 0 : index
    %c0_17 = arith.constant 0 : index
    %15 = vector.load %arg7[%c0_15, %c0_16, %c0_17] : memref<2x32x32xf32, #tpu.memory_space<vmem>>, vector<1x32x32xf32>
    %16 = vector.shape_cast %15 : vector<1x32x32xf32> to vector<32x32xf32>
    %c0_18 = arith.constant 0 : index
    %c0_19 = arith.constant 0 : index
    %c0_20 = arith.constant 0 : index
    %17 = vector.load %arg8[%c0_18, %c0_19, %c0_20] : memref<2x4x32xf32, #tpu.memory_space<vmem>>, vector<1x4x32xf32>
    %18 = vector.shape_cast %17 : vector<1x4x32xf32> to vector<4x32xf32>
    %19 = vector.extract_strided_slice %18 {offsets = [0, 0], sizes = [1, 32], strides = [1, 1]} : vector<4x32xf32> to vector<1x32xf32>
    %20 = vector.shape_cast %19 : vector<1x32xf32> to vector<1x32xf32>
    %21 = vector.broadcast %20 : vector<1x32xf32> to vector<16x32xf32>
    %22 = vector.extract_strided_slice %18 {offsets = [1, 0], sizes = [1, 32], strides = [1, 1]} : vector<4x32xf32> to vector<1x32xf32>
    %23 = vector.shape_cast %22 : vector<1x32xf32> to vector<1x32xf32>
    %24 = vector.broadcast %23 : vector<1x32xf32> to vector<16x32xf32>
    %25 = vector.extract_strided_slice %18 {offsets = [2, 0], sizes = [1, 32], strides = [1, 1]} : vector<4x32xf32> to vector<1x32xf32>
    %26 = vector.extract_strided_slice %18 {offsets = [3, 0], sizes = [1, 32], strides = [1, 1]} : vector<4x32xf32> to vector<1x32xf32>
    %cst_21 = arith.constant dense<0.000000e+00> : vector<16xf32>
    %27 = vector.multi_reduction <add>, %9, %cst_21 [1] : vector<16x32xf32> to vector<16xf32>
    %28 = vector.shape_cast %27 : vector<16xf32> to vector<16x1xf32>
    %cst_22 = arith.constant 3.200000e+01 : f32
    %29 = vector.broadcast %cst_22 : f32 to vector<16x1xf32>
    %30 = arith.divf %28, %29 : vector<16x1xf32>
    %31 = vector.broadcast %30 : vector<16x1xf32> to vector<16x32xf32>
    %32 = arith.subf %9, %31 : vector<16x32xf32>
    %33 = arith.mulf %32, %32 : vector<16x32xf32>
    %cst_23 = arith.constant dense<0.000000e+00> : vector<16xf32>
    %34 = vector.multi_reduction <add>, %33, %cst_23 [1] : vector<16x32xf32> to vector<16xf32>
    %35 = vector.shape_cast %34 : vector<16xf32> to vector<16x1xf32>
    %cst_24 = arith.constant 3.200000e+01 : f32
    %36 = vector.broadcast %cst_24 : f32 to vector<16x1xf32>
    %37 = arith.divf %35, %36 : vector<16x1xf32>
    %38 = vector.broadcast %30 : vector<16x1xf32> to vector<16x32xf32>
    %39 = arith.subf %9, %38 : vector<16x32xf32>
    %cst_25 = arith.constant 9.99999974E-6 : f32
    %40 = vector.broadcast %cst_25 : f32 to vector<16x1xf32>
    %41 = arith.addf %37, %40 : vector<16x1xf32>
    %42 = math.rsqrt %41 : vector<16x1xf32>
    %43 = vector.broadcast %42 : vector<16x1xf32> to vector<16x32xf32>
    %44 = arith.mulf %39, %43 : vector<16x32xf32>
    %45 = arith.mulf %44, %21 : vector<16x32xf32>
    %46 = arith.addf %45, %24 : vector<16x32xf32>
    %cst_26 = arith.constant dense<0.000000e+00> : vector<16x96xf32>
    %47 = tpu.matmul %46, %12, %cst_26 {dimension_numbers = #tpu.dot_dimension_numbers<[1], [0], [0], [1], [0, 0, 1, 1], [], []>} : vector<16x32xf32>, vector<32x96xf32>, vector<16x96xf32> -> vector<16x96xf32>
    %48 = vector.extract_strided_slice %47 {offsets = [0, 0], sizes = [16, 32], strides = [1, 1]} : vector<16x96xf32> to vector<16x32xf32>
    %cst_27 = arith.constant 0.000000e+00 : f32
    %49 = vector.broadcast %cst_27 : f32 to vector<16x32xf32>
    %50 = arith.maximumf %48, %49 : vector<16x32xf32>
    %51 = vector.extract_strided_slice %47 {offsets = [0, 32], sizes = [16, 32], strides = [1, 1]} : vector<16x96xf32> to vector<16x32xf32>
    %52 = vector.extract_strided_slice %47 {offsets = [0, 64], sizes = [16, 32], strides = [1, 1]} : vector<16x96xf32> to vector<16x32xf32>
    %53 = vector.extract_strided_slice %50 {offsets = [0, 0], sizes = [8, 32], strides = [1, 1]} : vector<16x32xf32> to vector<8x32xf32>
    %54 = vector.extract_strided_slice %51 {offsets = [0, 0], sizes = [8, 32], strides = [1, 1]} : vector<16x32xf32> to vector<8x32xf32>
    %55 = vector.extract_strided_slice %52 {offsets = [0, 0], sizes = [8, 32], strides = [1, 1]} : vector<16x32xf32> to vector<8x32xf32>
    %56 = vector.extract_strided_slice %10 {offsets = [0, 0], sizes = [8, 8], strides = [1, 1]} : vector<16x8xf32> to vector<8x8xf32>
    %57 = vector.extract_strided_slice %53 {offsets = [0, 0], sizes = [8, 8], strides = [1, 1]} : vector<8x32xf32> to vector<8x8xf32>
    %58 = vector.extract_strided_slice %54 {offsets = [0, 0], sizes = [8, 8], strides = [1, 1]} : vector<8x32xf32> to vector<8x8xf32>
    %59 = vector.extract_strided_slice %55 {offsets = [0, 0], sizes = [8, 8], strides = [1, 1]} : vector<8x32xf32> to vector<8x8xf32>
    %60 = tpu.transpose %58, [1, 0] : vector<8x8xf32> -> vector<8x8xf32>
    %cst_28 = arith.constant dense<0.000000e+00> : vector<8x8xf32>
    %61 = tpu.matmul %57, %60, %cst_28 {dimension_numbers = #tpu.dot_dimension_numbers<[1], [0], [0], [1], [0, 0, 1, 1], [], []>} : vector<8x8xf32>, vector<8x8xf32>, vector<8x8xf32> -> vector<8x8xf32>
    %cst_29 = arith.constant 0.353553385 : f32
    %62 = vector.broadcast %cst_29 : f32 to vector<8x8xf32>
    %63 = arith.mulf %61, %62 : vector<8x8xf32>
    %64 = arith.addf %63, %56 : vector<8x8xf32>
    %cst_30 = arith.constant dense<0xFF800000> : vector<8xf32>
    %65 = vector.multi_reduction <maximumf>, %64, %cst_30 [1] : vector<8x8xf32> to vector<8xf32>
    %66 = vector.shape_cast %65 : vector<8xf32> to vector<8x1xf32>
    %67 = vector.broadcast %66 : vector<8x1xf32> to vector<8x8xf32>
    %68 = arith.subf %64, %67 : vector<8x8xf32>
    %69 = math.exp %68 : vector<8x8xf32>
    %cst_31 = arith.constant dense<0.000000e+00> : vector<8xf32>
    %70 = vector.multi_reduction <add>, %69, %cst_31 [1] : vector<8x8xf32> to vector<8xf32>
    %71 = vector.shape_cast %70 : vector<8xf32> to vector<8x1xf32>
    %72 = tpu.reciprocal %71 {approx = true} : vector<8x1xf32> -> vector<8x1xf32>
    %73 = vector.broadcast %72 : vector<8x1xf32> to vector<8x8xf32>
    %74 = arith.mulf %69, %73 : vector<8x8xf32>
    %cst_32 = arith.constant dense<0.000000e+00> : vector<8x8xf32>
    %75 = tpu.matmul %74, %59, %cst_32 {dimension_numbers = #tpu.dot_dimension_numbers<[1], [0], [0], [1], [0, 0, 1, 1], [], []>} : vector<8x8xf32>, vector<8x8xf32>, vector<8x8xf32> -> vector<8x8xf32>
    %c0_33 = arith.constant 0 : index
    %c0_34 = arith.constant 0 : index
    %76 = vector.load %arg11[%c0_33, %c0_34] : memref<16x32xf32, #tpu.memory_space<vmem>>, vector<8x8xf32>
    tpu.vector_store %arg11[%c0_33, %c0_34], %75 {strides = array<i32>} : memref<16x32xf32, #tpu.memory_space<vmem>>, vector<8x8xf32>,
    %77 = vector.extract_strided_slice %53 {offsets = [0, 8], sizes = [8, 8], strides = [1, 1]} : vector<8x32xf32> to vector<8x8xf32>
    %78 = vector.extract_strided_slice %54 {offsets = [0, 8], sizes = [8, 8], strides = [1, 1]} : vector<8x32xf32> to vector<8x8xf32>
    %79 = vector.extract_strided_slice %55 {offsets = [0, 8], sizes = [8, 8], strides = [1, 1]} : vector<8x32xf32> to vector<8x8xf32>
    %80 = tpu.transpose %78, [1, 0] : vector<8x8xf32> -> vector<8x8xf32>
    %cst_35 = arith.constant dense<0.000000e+00> : vector<8x8xf32>
    %81 = tpu.matmul %77, %80, %cst_35 {dimension_numbers = #tpu.dot_dimension_numbers<[1], [0], [0], [1], [0, 0, 1, 1], [], []>} : vector<8x8xf32>, vector<8x8xf32>, vector<8x8xf32> -> vector<8x8xf32>
    %cst_36 = arith.constant 0.353553385 : f32
    %82 = vector.broadcast %cst_36 : f32 to vector<8x8xf32>
    %83 = arith.mulf %81, %82 : vector<8x8xf32>
    %84 = arith.addf %83, %56 : vector<8x8xf32>
    %cst_37 = arith.constant dense<0xFF800000> : vector<8xf32>
    %85 = vector.multi_reduction <maximumf>, %84, %cst_37 [1] : vector<8x8xf32> to vector<8xf32>
    %86 = vector.shape_cast %85 : vector<8xf32> to vector<8x1xf32>
    %87 = vector.broadcast %86 : vector<8x1xf32> to vector<8x8xf32>
    %88 = arith.subf %84, %87 : vector<8x8xf32>
    %89 = math.exp %88 : vector<8x8xf32>
    %cst_38 = arith.constant dense<0.000000e+00> : vector<8xf32>
    %90 = vector.multi_reduction <add>, %89, %cst_38 [1] : vector<8x8xf32> to vector<8xf32>
    %91 = vector.shape_cast %90 : vector<8xf32> to vector<8x1xf32>
    %92 = tpu.reciprocal %91 {approx = true} : vector<8x1xf32> -> vector<8x1xf32>
    %93 = vector.broadcast %92 : vector<8x1xf32> to vector<8x8xf32>
    %94 = arith.mulf %89, %93 : vector<8x8xf32>
    %cst_39 = arith.constant dense<0.000000e+00> : vector<8x8xf32>
    %95 = tpu.matmul %94, %79, %cst_39 {dimension_numbers = #tpu.dot_dimension_numbers<[1], [0], [0], [1], [0, 0, 1, 1], [], []>} : vector<8x8xf32>, vector<8x8xf32>, vector<8x8xf32> -> vector<8x8xf32>
    %c0_40 = arith.constant 0 : index
    %c8 = arith.constant 8 : index
    %96 = vector.load %arg11[%c0_40, %c8] : memref<16x32xf32, #tpu.memory_space<vmem>>, vector<8x8xf32>
    tpu.vector_store %arg11[%c0_40, %c8], %95 {strides = array<i32>} : memref<16x32xf32, #tpu.memory_space<vmem>>, vector<8x8xf32>,
    %97 = vector.extract_strided_slice %53 {offsets = [0, 16], sizes = [8, 8], strides = [1, 1]} : vector<8x32xf32> to vector<8x8xf32>
    %98 = vector.extract_strided_slice %54 {offsets = [0, 16], sizes = [8, 8], strides = [1, 1]} : vector<8x32xf32> to vector<8x8xf32>
    %99 = vector.extract_strided_slice %55 {offsets = [0, 16], sizes = [8, 8], strides = [1, 1]} : vector<8x32xf32> to vector<8x8xf32>
    %100 = tpu.transpose %98, [1, 0] : vector<8x8xf32> -> vector<8x8xf32>
    %cst_41 = arith.constant dense<0.000000e+00> : vector<8x8xf32>
    %101 = tpu.matmul %97, %100, %cst_41 {dimension_numbers = #tpu.dot_dimension_numbers<[1], [0], [0], [1], [0, 0, 1, 1], [], []>} : vector<8x8xf32>, vector<8x8xf32>, vector<8x8xf32> -> vector<8x8xf32>
    %cst_42 = arith.constant 0.353553385 : f32
    %102 = vector.broadcast %cst_42 : f32 to vector<8x8xf32>
    %103 = arith.mulf %101, %102 : vector<8x8xf32>
    %104 = arith.addf %103, %56 : vector<8x8xf32>
    %cst_43 = arith.constant dense<0xFF800000> : vector<8xf32>
    %105 = vector.multi_reduction <maximumf>, %104, %cst_43 [1] : vector<8x8xf32> to vector<8xf32>
    %106 = vector.shape_cast %105 : vector<8xf32> to vector<8x1xf32>
    %107 = vector.broadcast %106 : vector<8x1xf32> to vector<8x8xf32>
    %108 = arith.subf %104, %107 : vector<8x8xf32>
    %109 = math.exp %108 : vector<8x8xf32>
    %cst_44 = arith.constant dense<0.000000e+00> : vector<8xf32>
    %110 = vector.multi_reduction <add>, %109, %cst_44 [1] : vector<8x8xf32> to vector<8xf32>
    %111 = vector.shape_cast %110 : vector<8xf32> to vector<8x1xf32>
    %112 = tpu.reciprocal %111 {approx = true} : vector<8x1xf32> -> vector<8x1xf32>
    %113 = vector.broadcast %112 : vector<8x1xf32> to vector<8x8xf32>
    %114 = arith.mulf %109, %113 : vector<8x8xf32>
    %cst_45 = arith.constant dense<0.000000e+00> : vector<8x8xf32>
    %115 = tpu.matmul %114, %99, %cst_45 {dimension_numbers = #tpu.dot_dimension_numbers<[1], [0], [0], [1], [0, 0, 1, 1], [], []>} : vector<8x8xf32>, vector<8x8xf32>, vector<8x8xf32> -> vector<8x8xf32>
    %c0_46 = arith.constant 0 : index
    %c16 = arith.constant 16 : index
    %116 = vector.load %arg11[%c0_46, %c16] : memref<16x32xf32, #tpu.memory_space<vmem>>, vector<8x8xf32>
    tpu.vector_store %arg11[%c0_46, %c16], %115 {strides = array<i32>} : memref<16x32xf32, #tpu.memory_space<vmem>>, vector<8x8xf32>,
    %117 = vector.extract_strided_slice %53 {offsets = [0, 24], sizes = [8, 8], strides = [1, 1]} : vector<8x32xf32> to vector<8x8xf32>
    %118 = vector.extract_strided_slice %54 {offsets = [0, 24], sizes = [8, 8], strides = [1, 1]} : vector<8x32xf32> to vector<8x8xf32>
    %119 = vector.extract_strided_slice %55 {offsets = [0, 24], sizes = [8, 8], strides = [1, 1]} : vector<8x32xf32> to vector<8x8xf32>
    %120 = tpu.transpose %118, [1, 0] : vector<8x8xf32> -> vector<8x8xf32>
    %cst_47 = arith.constant dense<0.000000e+00> : vector<8x8xf32>
    %121 = tpu.matmul %117, %120, %cst_47 {dimension_numbers = #tpu.dot_dimension_numbers<[1], [0], [0], [1], [0, 0, 1, 1], [], []>} : vector<8x8xf32>, vector<8x8xf32>, vector<8x8xf32> -> vector<8x8xf32>
    %cst_48 = arith.constant 0.353553385 : f32
    %122 = vector.broadcast %cst_48 : f32 to vector<8x8xf32>
    %123 = arith.mulf %121, %122 : vector<8x8xf32>
    %124 = arith.addf %123, %56 : vector<8x8xf32>
    %cst_49 = arith.constant dense<0xFF800000> : vector<8xf32>
    %125 = vector.multi_reduction <maximumf>, %124, %cst_49 [1] : vector<8x8xf32> to vector<8xf32>
    %126 = vector.shape_cast %125 : vector<8xf32> to vector<8x1xf32>
    %127 = vector.broadcast %126 : vector<8x1xf32> to vector<8x8xf32>
    %128 = arith.subf %124, %127 : vector<8x8xf32>
    %129 = math.exp %128 : vector<8x8xf32>
    %cst_50 = arith.constant dense<0.000000e+00> : vector<8xf32>
    %130 = vector.multi_reduction <add>, %129, %cst_50 [1] : vector<8x8xf32> to vector<8xf32>
    %131 = vector.shape_cast %130 : vector<8xf32> to vector<8x1xf32>
    %132 = tpu.reciprocal %131 {approx = true} : vector<8x1xf32> -> vector<8x1xf32>
    %133 = vector.broadcast %132 : vector<8x1xf32> to vector<8x8xf32>
    %134 = arith.mulf %129, %133 : vector<8x8xf32>
    %cst_51 = arith.constant dense<0.000000e+00> : vector<8x8xf32>
    %135 = tpu.matmul %134, %119, %cst_51 {dimension_numbers = #tpu.dot_dimension_numbers<[1], [0], [0], [1], [0, 0, 1, 1], [], []>} : vector<8x8xf32>, vector<8x8xf32>, vector<8x8xf32> -> vector<8x8xf32>
    %c0_52 = arith.constant 0 : index
    %c24 = arith.constant 24 : index
    %136 = vector.load %arg11[%c0_52, %c24] : memref<16x32xf32, #tpu.memory_space<vmem>>, vector<8x8xf32>
    tpu.vector_store %arg11[%c0_52, %c24], %135 {strides = array<i32>} : memref<16x32xf32, #tpu.memory_space<vmem>>, vector<8x8xf32>,
    %137 = vector.extract_strided_slice %50 {offsets = [8, 0], sizes = [8, 32], strides = [1, 1]} : vector<16x32xf32> to vector<8x32xf32>
    %138 = vector.extract_strided_slice %51 {offsets = [8, 0], sizes = [8, 32], strides = [1, 1]} : vector<16x32xf32> to vector<8x32xf32>
    %139 = vector.extract_strided_slice %52 {offsets = [8, 0], sizes = [8, 32], strides = [1, 1]} : vector<16x32xf32> to vector<8x32xf32>
    %140 = vector.extract_strided_slice %10 {offsets = [8, 0], sizes = [8, 8], strides = [1, 1]} : vector<16x8xf32> to vector<8x8xf32>
    %141 = vector.extract_strided_slice %137 {offsets = [0, 0], sizes = [8, 8], strides = [1, 1]} : vector<8x32xf32> to vector<8x8xf32>
    %142 = vector.extract_strided_slice %138 {offsets = [0, 0], sizes = [8, 8], strides = [1, 1]} : vector<8x32xf32> to vector<8x8xf32>
    %143 = vector.extract_strided_slice %139 {offsets = [0, 0], sizes = [8, 8], strides = [1, 1]} : vector<8x32xf32> to vector<8x8xf32>
    %144 = tpu.transpose %142, [1, 0] : vector<8x8xf32> -> vector<8x8xf32>
    %cst_53 = arith.constant dense<0.000000e+00> : vector<8x8xf32>
    %145 = tpu.matmul %141, %144, %cst_53 {dimension_numbers = #tpu.dot_dimension_numbers<[1], [0], [0], [1], [0, 0, 1, 1], [], []>} : vector<8x8xf32>, vector<8x8xf32>, vector<8x8xf32> -> vector<8x8xf32>
    %cst_54 = arith.constant 0.353553385 : f32
    %146 = vector.broadcast %cst_54 : f32 to vector<8x8xf32>
    %147 = arith.mulf %145, %146 : vector<8x8xf32>
    %148 = arith.addf %147, %140 : vector<8x8xf32>
    %cst_55 = arith.constant dense<0xFF800000> : vector<8xf32>
    %149 = vector.multi_reduction <maximumf>, %148, %cst_55 [1] : vector<8x8xf32> to vector<8xf32>
    %150 = vector.shape_cast %149 : vector<8xf32> to vector<8x1xf32>
    %151 = vector.broadcast %150 : vector<8x1xf32> to vector<8x8xf32>
    %152 = arith.subf %148, %151 : vector<8x8xf32>
    %153 = math.exp %152 : vector<8x8xf32>
    %cst_56 = arith.constant dense<0.000000e+00> : vector<8xf32>
    %154 = vector.multi_reduction <add>, %153, %cst_56 [1] : vector<8x8xf32> to vector<8xf32>
    %155 = vector.shape_cast %154 : vector<8xf32> to vector<8x1xf32>
    %156 = tpu.reciprocal %155 {approx = true} : vector<8x1xf32> -> vector<8x1xf32>
    %157 = vector.broadcast %156 : vector<8x1xf32> to vector<8x8xf32>
    %158 = arith.mulf %153, %157 : vector<8x8xf32>
    %cst_57 = arith.constant dense<0.000000e+00> : vector<8x8xf32>
    %159 = tpu.matmul %158, %143, %cst_57 {dimension_numbers = #tpu.dot_dimension_numbers<[1], [0], [0], [1], [0, 0, 1, 1], [], []>} : vector<8x8xf32>, vector<8x8xf32>, vector<8x8xf32> -> vector<8x8xf32>
    %c8_58 = arith.constant 8 : index
    %c0_59 = arith.constant 0 : index
    %160 = vector.load %arg11[%c8_58, %c0_59] : memref<16x32xf32, #tpu.memory_space<vmem>>, vector<8x8xf32>
    tpu.vector_store %arg11[%c8_58, %c0_59], %159 {strides = array<i32>} : memref<16x32xf32, #tpu.memory_space<vmem>>, vector<8x8xf32>,
    %161 = vector.extract_strided_slice %137 {offsets = [0, 8], sizes = [8, 8], strides = [1, 1]} : vector<8x32xf32> to vector<8x8xf32>
    %162 = vector.extract_strided_slice %138 {offsets = [0, 8], sizes = [8, 8], strides = [1, 1]} : vector<8x32xf32> to vector<8x8xf32>
    %163 = vector.extract_strided_slice %139 {offsets = [0, 8], sizes = [8, 8], strides = [1, 1]} : vector<8x32xf32> to vector<8x8xf32>
    %164 = tpu.transpose %162, [1, 0] : vector<8x8xf32> -> vector<8x8xf32>
    %cst_60 = arith.constant dense<0.000000e+00> : vector<8x8xf32>
    %165 = tpu.matmul %161, %164, %cst_60 {dimension_numbers = #tpu.dot_dimension_numbers<[1], [0], [0], [1], [0, 0, 1, 1], [], []>} : vector<8x8xf32>, vector<8x8xf32>, vector<8x8xf32> -> vector<8x8xf32>
    %cst_61 = arith.constant 0.353553385 : f32
    %166 = vector.broadcast %cst_61 : f32 to vector<8x8xf32>
    %167 = arith.mulf %165, %166 : vector<8x8xf32>
    %168 = arith.addf %167, %140 : vector<8x8xf32>
    %cst_62 = arith.constant dense<0xFF800000> : vector<8xf32>
    %169 = vector.multi_reduction <maximumf>, %168, %cst_62 [1] : vector<8x8xf32> to vector<8xf32>
    %170 = vector.shape_cast %169 : vector<8xf32> to vector<8x1xf32>
    %171 = vector.broadcast %170 : vector<8x1xf32> to vector<8x8xf32>
    %172 = arith.subf %168, %171 : vector<8x8xf32>
    %173 = math.exp %172 : vector<8x8xf32>
    %cst_63 = arith.constant dense<0.000000e+00> : vector<8xf32>
    %174 = vector.multi_reduction <add>, %173, %cst_63 [1] : vector<8x8xf32> to vector<8xf32>
    %175 = vector.shape_cast %174 : vector<8xf32> to vector<8x1xf32>
    %176 = tpu.reciprocal %175 {approx = true} : vector<8x1xf32> -> vector<8x1xf32>
    %177 = vector.broadcast %176 : vector<8x1xf32> to vector<8x8xf32>
    %178 = arith.mulf %173, %177 : vector<8x8xf32>
    %cst_64 = arith.constant dense<0.000000e+00> : vector<8x8xf32>
    %179 = tpu.matmul %178, %163, %cst_64 {dimension_numbers = #tpu.dot_dimension_numbers<[1], [0], [0], [1], [0, 0, 1, 1], [], []>} : vector<8x8xf32>, vector<8x8xf32>, vector<8x8xf32> -> vector<8x8xf32>
    %c8_65 = arith.constant 8 : index
    %c8_66 = arith.constant 8 : index
    %180 = vector.load %arg11[%c8_65, %c8_66] : memref<16x32xf32, #tpu.memory_space<vmem>>, vector<8x8xf32>
    tpu.vector_store %arg11[%c8_65, %c8_66], %179 {strides = array<i32>} : memref<16x32xf32, #tpu.memory_space<vmem>>, vector<8x8xf32>,
    %181 = vector.extract_strided_slice %137 {offsets = [0, 16], sizes = [8, 8], strides = [1, 1]} : vector<8x32xf32> to vector<8x8xf32>
    %182 = vector.extract_strided_slice %138 {offsets = [0, 16], sizes = [8, 8], strides = [1, 1]} : vector<8x32xf32> to vector<8x8xf32>
    %183 = vector.extract_strided_slice %139 {offsets = [0, 16], sizes = [8, 8], strides = [1, 1]} : vector<8x32xf32> to vector<8x8xf32>
    %184 = tpu.transpose %182, [1, 0] : vector<8x8xf32> -> vector<8x8xf32>
    %cst_67 = arith.constant dense<0.000000e+00> : vector<8x8xf32>
    %185 = tpu.matmul %181, %184, %cst_67 {dimension_numbers = #tpu.dot_dimension_numbers<[1], [0], [0], [1], [0, 0, 1, 1], [], []>} : vector<8x8xf32>, vector<8x8xf32>, vector<8x8xf32> -> vector<8x8xf32>
    %cst_68 = arith.constant 0.353553385 : f32
    %186 = vector.broadcast %cst_68 : f32 to vector<8x8xf32>
    %187 = arith.mulf %185, %186 : vector<8x8xf32>
    %188 = arith.addf %187, %140 : vector<8x8xf32>
    %cst_69 = arith.constant dense<0xFF800000> : vector<8xf32>
    %189 = vector.multi_reduction <maximumf>, %188, %cst_69 [1] : vector<8x8xf32> to vector<8xf32>
    %190 = vector.shape_cast %189 : vector<8xf32> to vector<8x1xf32>
    %191 = vector.broadcast %190 : vector<8x1xf32> to vector<8x8xf32>
    %192 = arith.subf %188, %191 : vector<8x8xf32>
    %193 = math.exp %192 : vector<8x8xf32>
    %cst_70 = arith.constant dense<0.000000e+00> : vector<8xf32>
    %194 = vector.multi_reduction <add>, %193, %cst_70 [1] : vector<8x8xf32> to vector<8xf32>
    %195 = vector.shape_cast %194 : vector<8xf32> to vector<8x1xf32>
    %196 = tpu.reciprocal %195 {approx = true} : vector<8x1xf32> -> vector<8x1xf32>
    %197 = vector.broadcast %196 : vector<8x1xf32> to vector<8x8xf32>
    %198 = arith.mulf %193, %197 : vector<8x8xf32>
    %cst_71 = arith.constant dense<0.000000e+00> : vector<8x8xf32>
    %199 = tpu.matmul %198, %183, %cst_71 {dimension_numbers = #tpu.dot_dimension_numbers<[1], [0], [0], [1], [0, 0, 1, 1], [], []>} : vector<8x8xf32>, vector<8x8xf32>, vector<8x8xf32> -> vector<8x8xf32>
    %c8_72 = arith.constant 8 : index
    %c16_73 = arith.constant 16 : index
    %200 = vector.load %arg11[%c8_72, %c16_73] : memref<16x32xf32, #tpu.memory_space<vmem>>, vector<8x8xf32>
    tpu.vector_store %arg11[%c8_72, %c16_73], %199 {strides = array<i32>} : memref<16x32xf32, #tpu.memory_space<vmem>>, vector<8x8xf32>,
    %201 = vector.extract_strided_slice %137 {offsets = [0, 24], sizes = [8, 8], strides = [1, 1]} : vector<8x32xf32> to vector<8x8xf32>
    %202 = vector.extract_strided_slice %138 {offsets = [0, 24], sizes = [8, 8], strides = [1, 1]} : vector<8x32xf32> to vector<8x8xf32>
    %203 = vector.extract_strided_slice %139 {offsets = [0, 24], sizes = [8, 8], strides = [1, 1]} : vector<8x32xf32> to vector<8x8xf32>
    %204 = tpu.transpose %202, [1, 0] : vector<8x8xf32> -> vector<8x8xf32>
    %cst_74 = arith.constant dense<0.000000e+00> : vector<8x8xf32>
    %205 = tpu.matmul %201, %204, %cst_74 {dimension_numbers = #tpu.dot_dimension_numbers<[1], [0], [0], [1], [0, 0, 1, 1], [], []>} : vector<8x8xf32>, vector<8x8xf32>, vector<8x8xf32> -> vector<8x8xf32>
    %cst_75 = arith.constant 0.353553385 : f32
    %206 = vector.broadcast %cst_75 : f32 to vector<8x8xf32>
    %207 = arith.mulf %205, %206 : vector<8x8xf32>
    %208 = arith.addf %207, %140 : vector<8x8xf32>
    %cst_76 = arith.constant dense<0xFF800000> : vector<8xf32>
    %209 = vector.multi_reduction <maximumf>, %208, %cst_76 [1] : vector<8x8xf32> to vector<8xf32>
    %210 = vector.shape_cast %209 : vector<8xf32> to vector<8x1xf32>
    %211 = vector.broadcast %210 : vector<8x1xf32> to vector<8x8xf32>
    %212 = arith.subf %208, %211 : vector<8x8xf32>
    %213 = math.exp %212 : vector<8x8xf32>
    %cst_77 = arith.constant dense<0.000000e+00> : vector<8xf32>
    %214 = vector.multi_reduction <add>, %213, %cst_77 [1] : vector<8x8xf32> to vector<8xf32>
    %215 = vector.shape_cast %214 : vector<8xf32> to vector<8x1xf32>
    %216 = tpu.reciprocal %215 {approx = true} : vector<8x1xf32> -> vector<8x1xf32>
    %217 = vector.broadcast %216 : vector<8x1xf32> to vector<8x8xf32>
    %218 = arith.mulf %213, %217 : vector<8x8xf32>
    %cst_78 = arith.constant dense<0.000000e+00> : vector<8x8xf32>
    %219 = tpu.matmul %218, %203, %cst_78 {dimension_numbers = #tpu.dot_dimension_numbers<[1], [0], [0], [1], [0, 0, 1, 1], [], []>} : vector<8x8xf32>, vector<8x8xf32>, vector<8x8xf32> -> vector<8x8xf32>
    %c8_79 = arith.constant 8 : index
    %c24_80 = arith.constant 24 : index
    %220 = vector.load %arg11[%c8_79, %c24_80] : memref<16x32xf32, #tpu.memory_space<vmem>>, vector<8x8xf32>
    tpu.vector_store %arg11[%c8_79, %c24_80], %219 {strides = array<i32>} : memref<16x32xf32, #tpu.memory_space<vmem>>, vector<8x8xf32>,
    %c0_81 = arith.constant 0 : index
    %c0_82 = arith.constant 0 : index
    %221 = vector.load %arg11[%c0_81, %c0_82] : memref<16x32xf32, #tpu.memory_space<vmem>>, vector<16x32xf32>
    %222 = arith.addf %46, %221 : vector<16x32xf32>
    %cst_83 = arith.constant dense<0.000000e+00> : vector<16xf32>
    %223 = vector.multi_reduction <add>, %222, %cst_83 [1] : vector<16x32xf32> to vector<16xf32>
    %224 = vector.shape_cast %223 : vector<16xf32> to vector<16x1xf32>
    %cst_84 = arith.constant 3.200000e+01 : f32
    %225 = vector.broadcast %cst_84 : f32 to vector<16x1xf32>
    %226 = arith.divf %224, %225 : vector<16x1xf32>
    %227 = vector.broadcast %226 : vector<16x1xf32> to vector<16x32xf32>
    %228 = arith.subf %222, %227 : vector<16x32xf32>
    %229 = arith.mulf %228, %228 : vector<16x32xf32>
    %cst_85 = arith.constant dense<0.000000e+00> : vector<16xf32>
    %230 = vector.multi_reduction <add>, %229, %cst_85 [1] : vector<16x32xf32> to vector<16xf32>
    %231 = vector.shape_cast %230 : vector<16xf32> to vector<16x1xf32>
    %cst_86 = arith.constant 3.200000e+01 : f32
    %232 = vector.broadcast %cst_86 : f32 to vector<16x1xf32>
    %233 = arith.divf %231, %232 : vector<16x1xf32>
    %234 = vector.broadcast %226 : vector<16x1xf32> to vector<16x32xf32>
    %235 = arith.subf %222, %234 : vector<16x32xf32>
    %cst_87 = arith.constant 9.99999974E-6 : f32
    %236 = vector.broadcast %cst_87 : f32 to vector<16x1xf32>
    %237 = arith.addf %233, %236 : vector<16x1xf32>
    %238 = math.rsqrt %237 : vector<16x1xf32>
    %239 = vector.broadcast %238 : vector<16x1xf32> to vector<16x32xf32>
    %240 = arith.mulf %235, %239 : vector<16x32xf32>
    %241 = arith.mulf %240, %21 : vector<16x32xf32>
    %242 = arith.addf %241, %24 : vector<16x32xf32>
    %cst_88 = arith.constant dense<0.000000e+00> : vector<16x32xf32>
    %243 = tpu.matmul %242, %14, %cst_88 {dimension_numbers = #tpu.dot_dimension_numbers<[1], [0], [0], [1], [0, 0, 1, 1], [], []>} : vector<16x32xf32>, vector<32x32xf32>, vector<16x32xf32> -> vector<16x32xf32>
    %244 = vector.broadcast %25 : vector<1x32xf32> to vector<16x32xf32>
    %245 = arith.addf %243, %244 : vector<16x32xf32>
    %cst_89 = arith.constant 0.000000e+00 : f32
    %246 = vector.broadcast %cst_89 : f32 to vector<16x32xf32>
    %247 = arith.maximumf %245, %246 : vector<16x32xf32>
    %cst_90 = arith.constant dense<0.000000e+00> : vector<16x32xf32>
    %248 = tpu.matmul %247, %16, %cst_90 {dimension_numbers = #tpu.dot_dimension_numbers<[1], [0], [0], [1], [0, 0, 1, 1], [], []>} : vector<16x32xf32>, vector<32x32xf32>, vector<16x32xf32> -> vector<16x32xf32>
    %249 = vector.broadcast %26 : vector<1x32xf32> to vector<16x32xf32>
    %250 = arith.addf %248, %249 : vector<16x32xf32>
    %251 = arith.addf %222, %250 : vector<16x32xf32>
    %c1 = arith.constant 1 : index
    %c0_91 = arith.constant 0 : index
    %c0_92 = arith.constant 0 : index
    %252 = vector.load %arg5[%c1, %c0_91, %c0_92] : memref<2x32x96xf32, #tpu.memory_space<vmem>>, vector<1x32x96xf32>
    %253 = vector.shape_cast %252 : vector<1x32x96xf32> to vector<32x96xf32>
    %c1_93 = arith.constant 1 : index
    %c0_94 = arith.constant 0 : index
    %c0_95 = arith.constant 0 : index
    %254 = vector.load %arg6[%c1_93, %c0_94, %c0_95] : memref<2x32x32xf32, #tpu.memory_space<vmem>>, vector<1x32x32xf32>
    %255 = vector.shape_cast %254 : vector<1x32x32xf32> to vector<32x32xf32>
    %c1_96 = arith.constant 1 : index
    %c0_97 = arith.constant 0 : index
    %c0_98 = arith.constant 0 : index
    %256 = vector.load %arg7[%c1_96, %c0_97, %c0_98] : memref<2x32x32xf32, #tpu.memory_space<vmem>>, vector<1x32x32xf32>
    %257 = vector.shape_cast %256 : vector<1x32x32xf32> to vector<32x32xf32>
    %c1_99 = arith.constant 1 : index
    %c0_100 = arith.constant 0 : index
    %c0_101 = arith.constant 0 : index
    %258 = vector.load %arg8[%c1_99, %c0_100, %c0_101] : memref<2x4x32xf32, #tpu.memory_space<vmem>>, vector<1x4x32xf32>
    %259 = vector.shape_cast %258 : vector<1x4x32xf32> to vector<4x32xf32>
    %260 = vector.extract_strided_slice %259 {offsets = [0, 0], sizes = [1, 32], strides = [1, 1]} : vector<4x32xf32> to vector<1x32xf32>
    %261 = vector.shape_cast %260 : vector<1x32xf32> to vector<1x32xf32>
    %262 = vector.broadcast %261 : vector<1x32xf32> to vector<16x32xf32>
    %263 = vector.extract_strided_slice %259 {offsets = [1, 0], sizes = [1, 32], strides = [1, 1]} : vector<4x32xf32> to vector<1x32xf32>
    %264 = vector.shape_cast %263 : vector<1x32xf32> to vector<1x32xf32>
    %265 = vector.broadcast %264 : vector<1x32xf32> to vector<16x32xf32>
    %266 = vector.extract_strided_slice %259 {offsets = [2, 0], sizes = [1, 32], strides = [1, 1]} : vector<4x32xf32> to vector<1x32xf32>
    %267 = vector.extract_strided_slice %259 {offsets = [3, 0], sizes = [1, 32], strides = [1, 1]} : vector<4x32xf32> to vector<1x32xf32>
    %cst_102 = arith.constant dense<0.000000e+00> : vector<16xf32>
    %268 = vector.multi_reduction <add>, %251, %cst_102 [1] : vector<16x32xf32> to vector<16xf32>
    %269 = vector.shape_cast %268 : vector<16xf32> to vector<16x1xf32>
    %cst_103 = arith.constant 3.200000e+01 : f32
    %270 = vector.broadcast %cst_103 : f32 to vector<16x1xf32>
    %271 = arith.divf %269, %270 : vector<16x1xf32>
    %272 = vector.broadcast %271 : vector<16x1xf32> to vector<16x32xf32>
    %273 = arith.subf %251, %272 : vector<16x32xf32>
    %274 = arith.mulf %273, %273 : vector<16x32xf32>
    %cst_104 = arith.constant dense<0.000000e+00> : vector<16xf32>
    %275 = vector.multi_reduction <add>, %274, %cst_104 [1] : vector<16x32xf32> to vector<16xf32>
    %276 = vector.shape_cast %275 : vector<16xf32> to vector<16x1xf32>
    %cst_105 = arith.constant 3.200000e+01 : f32
    %277 = vector.broadcast %cst_105 : f32 to vector<16x1xf32>
    %278 = arith.divf %276, %277 : vector<16x1xf32>
    %279 = vector.broadcast %271 : vector<16x1xf32> to vector<16x32xf32>
    %280 = arith.subf %251, %279 : vector<16x32xf32>
    %cst_106 = arith.constant 9.99999974E-6 : f32
    %281 = vector.broadcast %cst_106 : f32 to vector<16x1xf32>
    %282 = arith.addf %278, %281 : vector<16x1xf32>
    %283 = math.rsqrt %282 : vector<16x1xf32>
    %284 = vector.broadcast %283 : vector<16x1xf32> to vector<16x32xf32>
    %285 = arith.mulf %280, %284 : vector<16x32xf32>
    %286 = arith.mulf %285, %262 : vector<16x32xf32>
    %287 = arith.addf %286, %265 : vector<16x32xf32>
    %cst_107 = arith.constant dense<0.000000e+00> : vector<16x96xf32>
    %288 = tpu.matmul %287, %253, %cst_107 {dimension_numbers = #tpu.dot_dimension_numbers<[1], [0], [0], [1], [0, 0, 1, 1], [], []>} : vector<16x32xf32>, vector<32x96xf32>, vector<16x96xf32> -> vector<16x96xf32>
    %289 = vector.extract_strided_slice %288 {offsets = [0, 0], sizes = [16, 32], strides = [1, 1]} : vector<16x96xf32> to vector<16x32xf32>
    %cst_108 = arith.constant 0.000000e+00 : f32
    %290 = vector.broadcast %cst_108 : f32 to vector<16x32xf32>
    %291 = arith.maximumf %289, %290 : vector<16x32xf32>
    %292 = vector.extract_strided_slice %288 {offsets = [0, 32], sizes = [16, 32], strides = [1, 1]} : vector<16x96xf32> to vector<16x32xf32>
    %293 = vector.extract_strided_slice %288 {offsets = [0, 64], sizes = [16, 32], strides = [1, 1]} : vector<16x96xf32> to vector<16x32xf32>
    %294 = vector.extract_strided_slice %291 {offsets = [0, 0], sizes = [8, 32], strides = [1, 1]} : vector<16x32xf32> to vector<8x32xf32>
    %295 = vector.extract_strided_slice %292 {offsets = [0, 0], sizes = [8, 32], strides = [1, 1]} : vector<16x32xf32> to vector<8x32xf32>
    %296 = vector.extract_strided_slice %293 {offsets = [0, 0], sizes = [8, 32], strides = [1, 1]} : vector<16x32xf32> to vector<8x32xf32>
    %297 = vector.extract_strided_slice %10 {offsets = [0, 0], sizes = [8, 8], strides = [1, 1]} : vector<16x8xf32> to vector<8x8xf32>
    %298 = vector.extract_strided_slice %294 {offsets = [0, 0], sizes = [8, 8], strides = [1, 1]} : vector<8x32xf32> to vector<8x8xf32>
    %299 = vector.extract_strided_slice %295 {offsets = [0, 0], sizes = [8, 8], strides = [1, 1]} : vector<8x32xf32> to vector<8x8xf32>
    %300 = vector.extract_strided_slice %296 {offsets = [0, 0], sizes = [8, 8], strides = [1, 1]} : vector<8x32xf32> to vector<8x8xf32>
    %301 = tpu.transpose %299, [1, 0] : vector<8x8xf32> -> vector<8x8xf32>
    %cst_109 = arith.constant dense<0.000000e+00> : vector<8x8xf32>
    %302 = tpu.matmul %298, %301, %cst_109 {dimension_numbers = #tpu.dot_dimension_numbers<[1], [0], [0], [1], [0, 0, 1, 1], [], []>} : vector<8x8xf32>, vector<8x8xf32>, vector<8x8xf32> -> vector<8x8xf32>
    %cst_110 = arith.constant 0.353553385 : f32
    %303 = vector.broadcast %cst_110 : f32 to vector<8x8xf32>
    %304 = arith.mulf %302, %303 : vector<8x8xf32>
    %305 = arith.addf %304, %297 : vector<8x8xf32>
    %cst_111 = arith.constant dense<0xFF800000> : vector<8xf32>
    %306 = vector.multi_reduction <maximumf>, %305, %cst_111 [1] : vector<8x8xf32> to vector<8xf32>
    %307 = vector.shape_cast %306 : vector<8xf32> to vector<8x1xf32>
    %308 = vector.broadcast %307 : vector<8x1xf32> to vector<8x8xf32>
    %309 = arith.subf %305, %308 : vector<8x8xf32>
    %310 = math.exp %309 : vector<8x8xf32>
    %cst_112 = arith.constant dense<0.000000e+00> : vector<8xf32>
    %311 = vector.multi_reduction <add>, %310, %cst_112 [1] : vector<8x8xf32> to vector<8xf32>
    %312 = vector.shape_cast %311 : vector<8xf32> to vector<8x1xf32>
    %313 = tpu.reciprocal %312 {approx = true} : vector<8x1xf32> -> vector<8x1xf32>
    %314 = vector.broadcast %313 : vector<8x1xf32> to vector<8x8xf32>
    %315 = arith.mulf %310, %314 : vector<8x8xf32>
    %cst_113 = arith.constant dense<0.000000e+00> : vector<8x8xf32>
    %316 = tpu.matmul %315, %300, %cst_113 {dimension_numbers = #tpu.dot_dimension_numbers<[1], [0], [0], [1], [0, 0, 1, 1], [], []>} : vector<8x8xf32>, vector<8x8xf32>, vector<8x8xf32> -> vector<8x8xf32>
    %c0_114 = arith.constant 0 : index
    %c0_115 = arith.constant 0 : index
    %317 = vector.load %arg11[%c0_114, %c0_115] : memref<16x32xf32, #tpu.memory_space<vmem>>, vector<8x8xf32>
    tpu.vector_store %arg11[%c0_114, %c0_115], %316 {strides = array<i32>} : memref<16x32xf32, #tpu.memory_space<vmem>>, vector<8x8xf32>,
    %318 = vector.extract_strided_slice %294 {offsets = [0, 8], sizes = [8, 8], strides = [1, 1]} : vector<8x32xf32> to vector<8x8xf32>
    %319 = vector.extract_strided_slice %295 {offsets = [0, 8], sizes = [8, 8], strides = [1, 1]} : vector<8x32xf32> to vector<8x8xf32>
    %320 = vector.extract_strided_slice %296 {offsets = [0, 8], sizes = [8, 8], strides = [1, 1]} : vector<8x32xf32> to vector<8x8xf32>
    %321 = tpu.transpose %319, [1, 0] : vector<8x8xf32> -> vector<8x8xf32>
    %cst_116 = arith.constant dense<0.000000e+00> : vector<8x8xf32>
    %322 = tpu.matmul %318, %321, %cst_116 {dimension_numbers = #tpu.dot_dimension_numbers<[1], [0], [0], [1], [0, 0, 1, 1], [], []>} : vector<8x8xf32>, vector<8x8xf32>, vector<8x8xf32> -> vector<8x8xf32>
    %cst_117 = arith.constant 0.353553385 : f32
    %323 = vector.broadcast %cst_117 : f32 to vector<8x8xf32>
    %324 = arith.mulf %322, %323 : vector<8x8xf32>
    %325 = arith.addf %324, %297 : vector<8x8xf32>
    %cst_118 = arith.constant dense<0xFF800000> : vector<8xf32>
    %326 = vector.multi_reduction <maximumf>, %325, %cst_118 [1] : vector<8x8xf32> to vector<8xf32>
    %327 = vector.shape_cast %326 : vector<8xf32> to vector<8x1xf32>
    %328 = vector.broadcast %327 : vector<8x1xf32> to vector<8x8xf32>
    %329 = arith.subf %325, %328 : vector<8x8xf32>
    %330 = math.exp %329 : vector<8x8xf32>
    %cst_119 = arith.constant dense<0.000000e+00> : vector<8xf32>
    %331 = vector.multi_reduction <add>, %330, %cst_119 [1] : vector<8x8xf32> to vector<8xf32>
    %332 = vector.shape_cast %331 : vector<8xf32> to vector<8x1xf32>
    %333 = tpu.reciprocal %332 {approx = true} : vector<8x1xf32> -> vector<8x1xf32>
    %334 = vector.broadcast %333 : vector<8x1xf32> to vector<8x8xf32>
    %335 = arith.mulf %330, %334 : vector<8x8xf32>
    %cst_120 = arith.constant dense<0.000000e+00> : vector<8x8xf32>
    %336 = tpu.matmul %335, %320, %cst_120 {dimension_numbers = #tpu.dot_dimension_numbers<[1], [0], [0], [1], [0, 0, 1, 1], [], []>} : vector<8x8xf32>, vector<8x8xf32>, vector<8x8xf32> -> vector<8x8xf32>
    %c0_121 = arith.constant 0 : index
    %c8_122 = arith.constant 8 : index
    %337 = vector.load %arg11[%c0_121, %c8_122] : memref<16x32xf32, #tpu.memory_space<vmem>>, vector<8x8xf32>
    tpu.vector_store %arg11[%c0_121, %c8_122], %336 {strides = array<i32>} : memref<16x32xf32, #tpu.memory_space<vmem>>, vector<8x8xf32>,
    %338 = vector.extract_strided_slice %294 {offsets = [0, 16], sizes = [8, 8], strides = [1, 1]} : vector<8x32xf32> to vector<8x8xf32>
    %339 = vector.extract_strided_slice %295 {offsets = [0, 16], sizes = [8, 8], strides = [1, 1]} : vector<8x32xf32> to vector<8x8xf32>
    %340 = vector.extract_strided_slice %296 {offsets = [0, 16], sizes = [8, 8], strides = [1, 1]} : vector<8x32xf32> to vector<8x8xf32>
    %341 = tpu.transpose %339, [1, 0] : vector<8x8xf32> -> vector<8x8xf32>
    %cst_123 = arith.constant dense<0.000000e+00> : vector<8x8xf32>
    %342 = tpu.matmul %338, %341, %cst_123 {dimension_numbers = #tpu.dot_dimension_numbers<[1], [0], [0], [1], [0, 0, 1, 1], [], []>} : vector<8x8xf32>, vector<8x8xf32>, vector<8x8xf32> -> vector<8x8xf32>
    %cst_124 = arith.constant 0.353553385 : f32
    %343 = vector.broadcast %cst_124 : f32 to vector<8x8xf32>
    %344 = arith.mulf %342, %343 : vector<8x8xf32>
    %345 = arith.addf %344, %297 : vector<8x8xf32>
    %cst_125 = arith.constant dense<0xFF800000> : vector<8xf32>
    %346 = vector.multi_reduction <maximumf>, %345, %cst_125 [1] : vector<8x8xf32> to vector<8xf32>
    %347 = vector.shape_cast %346 : vector<8xf32> to vector<8x1xf32>
    %348 = vector.broadcast %347 : vector<8x1xf32> to vector<8x8xf32>
    %349 = arith.subf %345, %348 : vector<8x8xf32>
    %350 = math.exp %349 : vector<8x8xf32>
    %cst_126 = arith.constant dense<0.000000e+00> : vector<8xf32>
    %351 = vector.multi_reduction <add>, %350, %cst_126 [1] : vector<8x8xf32> to vector<8xf32>
    %352 = vector.shape_cast %351 : vector<8xf32> to vector<8x1xf32>
    %353 = tpu.reciprocal %352 {approx = true} : vector<8x1xf32> -> vector<8x1xf32>
    %354 = vector.broadcast %353 : vector<8x1xf32> to vector<8x8xf32>
    %355 = arith.mulf %350, %354 : vector<8x8xf32>
    %cst_127 = arith.constant dense<0.000000e+00> : vector<8x8xf32>
    %356 = tpu.matmul %355, %340, %cst_127 {dimension_numbers = #tpu.dot_dimension_numbers<[1], [0], [0], [1], [0, 0, 1, 1], [], []>} : vector<8x8xf32>, vector<8x8xf32>, vector<8x8xf32> -> vector<8x8xf32>
    %c0_128 = arith.constant 0 : index
    %c16_129 = arith.constant 16 : index
    %357 = vector.load %arg11[%c0_128, %c16_129] : memref<16x32xf32, #tpu.memory_space<vmem>>, vector<8x8xf32>
    tpu.vector_store %arg11[%c0_128, %c16_129], %356 {strides = array<i32>} : memref<16x32xf32, #tpu.memory_space<vmem>>, vector<8x8xf32>,
    %358 = vector.extract_strided_slice %294 {offsets = [0, 24], sizes = [8, 8], strides = [1, 1]} : vector<8x32xf32> to vector<8x8xf32>
    %359 = vector.extract_strided_slice %295 {offsets = [0, 24], sizes = [8, 8], strides = [1, 1]} : vector<8x32xf32> to vector<8x8xf32>
    %360 = vector.extract_strided_slice %296 {offsets = [0, 24], sizes = [8, 8], strides = [1, 1]} : vector<8x32xf32> to vector<8x8xf32>
    %361 = tpu.transpose %359, [1, 0] : vector<8x8xf32> -> vector<8x8xf32>
    %cst_130 = arith.constant dense<0.000000e+00> : vector<8x8xf32>
    %362 = tpu.matmul %358, %361, %cst_130 {dimension_numbers = #tpu.dot_dimension_numbers<[1], [0], [0], [1], [0, 0, 1, 1], [], []>} : vector<8x8xf32>, vector<8x8xf32>, vector<8x8xf32> -> vector<8x8xf32>
    %cst_131 = arith.constant 0.353553385 : f32
    %363 = vector.broadcast %cst_131 : f32 to vector<8x8xf32>
    %364 = arith.mulf %362, %363 : vector<8x8xf32>
    %365 = arith.addf %364, %297 : vector<8x8xf32>
    %cst_132 = arith.constant dense<0xFF800000> : vector<8xf32>
    %366 = vector.multi_reduction <maximumf>, %365, %cst_132 [1] : vector<8x8xf32> to vector<8xf32>
    %367 = vector.shape_cast %366 : vector<8xf32> to vector<8x1xf32>
    %368 = vector.broadcast %367 : vector<8x1xf32> to vector<8x8xf32>
    %369 = arith.subf %365, %368 : vector<8x8xf32>
    %370 = math.exp %369 : vector<8x8xf32>
    %cst_133 = arith.constant dense<0.000000e+00> : vector<8xf32>
    %371 = vector.multi_reduction <add>, %370, %cst_133 [1] : vector<8x8xf32> to vector<8xf32>
    %372 = vector.shape_cast %371 : vector<8xf32> to vector<8x1xf32>
    %373 = tpu.reciprocal %372 {approx = true} : vector<8x1xf32> -> vector<8x1xf32>
    %374 = vector.broadcast %373 : vector<8x1xf32> to vector<8x8xf32>
    %375 = arith.mulf %370, %374 : vector<8x8xf32>
    %cst_134 = arith.constant dense<0.000000e+00> : vector<8x8xf32>
    %376 = tpu.matmul %375, %360, %cst_134 {dimension_numbers = #tpu.dot_dimension_numbers<[1], [0], [0], [1], [0, 0, 1, 1], [], []>} : vector<8x8xf32>, vector<8x8xf32>, vector<8x8xf32> -> vector<8x8xf32>
    %c0_135 = arith.constant 0 : index
    %c24_136 = arith.constant 24 : index
    %377 = vector.load %arg11[%c0_135, %c24_136] : memref<16x32xf32, #tpu.memory_space<vmem>>, vector<8x8xf32>
    tpu.vector_store %arg11[%c0_135, %c24_136], %376 {strides = array<i32>} : memref<16x32xf32, #tpu.memory_space<vmem>>, vector<8x8xf32>,
    %378 = vector.extract_strided_slice %291 {offsets = [8, 0], sizes = [8, 32], strides = [1, 1]} : vector<16x32xf32> to vector<8x32xf32>
    %379 = vector.extract_strided_slice %292 {offsets = [8, 0], sizes = [8, 32], strides = [1, 1]} : vector<16x32xf32> to vector<8x32xf32>
    %380 = vector.extract_strided_slice %293 {offsets = [8, 0], sizes = [8, 32], strides = [1, 1]} : vector<16x32xf32> to vector<8x32xf32>
    %381 = vector.extract_strided_slice %10 {offsets = [8, 0], sizes = [8, 8], strides = [1, 1]} : vector<16x8xf32> to vector<8x8xf32>
    %382 = vector.extract_strided_slice %378 {offsets = [0, 0], sizes = [8, 8], strides = [1, 1]} : vector<8x32xf32> to vector<8x8xf32>
    %383 = vector.extract_strided_slice %379 {offsets = [0, 0], sizes = [8, 8], strides = [1, 1]} : vector<8x32xf32> to vector<8x8xf32>
    %384 = vector.extract_strided_slice %380 {offsets = [0, 0], sizes = [8, 8], strides = [1, 1]} : vector<8x32xf32> to vector<8x8xf32>
    %385 = tpu.transpose %383, [1, 0] : vector<8x8xf32> -> vector<8x8xf32>
    %cst_137 = arith.constant dense<0.000000e+00> : vector<8x8xf32>
    %386 = tpu.matmul %382, %385, %cst_137 {dimension_numbers = #tpu.dot_dimension_numbers<[1], [0], [0], [1], [0, 0, 1, 1], [], []>} : vector<8x8xf32>, vector<8x8xf32>, vector<8x8xf32> -> vector<8x8xf32>
    %cst_138 = arith.constant 0.353553385 : f32
    %387 = vector.broadcast %cst_138 : f32 to vector<8x8xf32>
    %388 = arith.mulf %386, %387 : vector<8x8xf32>
    %389 = arith.addf %388, %381 : vector<8x8xf32>
    %cst_139 = arith.constant dense<0xFF800000> : vector<8xf32>
    %390 = vector.multi_reduction <maximumf>, %389, %cst_139 [1] : vector<8x8xf32> to vector<8xf32>
    %391 = vector.shape_cast %390 : vector<8xf32> to vector<8x1xf32>
    %392 = vector.broadcast %391 : vector<8x1xf32> to vector<8x8xf32>
    %393 = arith.subf %389, %392 : vector<8x8xf32>
    %394 = math.exp %393 : vector<8x8xf32>
    %cst_140 = arith.constant dense<0.000000e+00> : vector<8xf32>
    %395 = vector.multi_reduction <add>, %394, %cst_140 [1] : vector<8x8xf32> to vector<8xf32>
    %396 = vector.shape_cast %395 : vector<8xf32> to vector<8x1xf32>
    %397 = tpu.reciprocal %396 {approx = true} : vector<8x1xf32> -> vector<8x1xf32>
    %398 = vector.broadcast %397 : vector<8x1xf32> to vector<8x8xf32>
    %399 = arith.mulf %394, %398 : vector<8x8xf32>
    %cst_141 = arith.constant dense<0.000000e+00> : vector<8x8xf32>
    %400 = tpu.matmul %399, %384, %cst_141 {dimension_numbers = #tpu.dot_dimension_numbers<[1], [0], [0], [1], [0, 0, 1, 1], [], []>} : vector<8x8xf32>, vector<8x8xf32>, vector<8x8xf32> -> vector<8x8xf32>
    %c8_142 = arith.constant 8 : index
    %c0_143 = arith.constant 0 : index
    %401 = vector.load %arg11[%c8_142, %c0_143] : memref<16x32xf32, #tpu.memory_space<vmem>>, vector<8x8xf32>
    tpu.vector_store %arg11[%c8_142, %c0_143], %400 {strides = array<i32>} : memref<16x32xf32, #tpu.memory_space<vmem>>, vector<8x8xf32>,
    %402 = vector.extract_strided_slice %378 {offsets = [0, 8], sizes = [8, 8], strides = [1, 1]} : vector<8x32xf32> to vector<8x8xf32>
    %403 = vector.extract_strided_slice %379 {offsets = [0, 8], sizes = [8, 8], strides = [1, 1]} : vector<8x32xf32> to vector<8x8xf32>
    %404 = vector.extract_strided_slice %380 {offsets = [0, 8], sizes = [8, 8], strides = [1, 1]} : vector<8x32xf32> to vector<8x8xf32>
    %405 = tpu.transpose %403, [1, 0] : vector<8x8xf32> -> vector<8x8xf32>
    %cst_144 = arith.constant dense<0.000000e+00> : vector<8x8xf32>
    %406 = tpu.matmul %402, %405, %cst_144 {dimension_numbers = #tpu.dot_dimension_numbers<[1], [0], [0], [1], [0, 0, 1, 1], [], []>} : vector<8x8xf32>, vector<8x8xf32>, vector<8x8xf32> -> vector<8x8xf32>
    %cst_145 = arith.constant 0.353553385 : f32
    %407 = vector.broadcast %cst_145 : f32 to vector<8x8xf32>
    %408 = arith.mulf %406, %407 : vector<8x8xf32>
    %409 = arith.addf %408, %381 : vector<8x8xf32>
    %cst_146 = arith.constant dense<0xFF800000> : vector<8xf32>
    %410 = vector.multi_reduction <maximumf>, %409, %cst_146 [1] : vector<8x8xf32> to vector<8xf32>
    %411 = vector.shape_cast %410 : vector<8xf32> to vector<8x1xf32>
    %412 = vector.broadcast %411 : vector<8x1xf32> to vector<8x8xf32>
    %413 = arith.subf %409, %412 : vector<8x8xf32>
    %414 = math.exp %413 : vector<8x8xf32>
    %cst_147 = arith.constant dense<0.000000e+00> : vector<8xf32>
    %415 = vector.multi_reduction <add>, %414, %cst_147 [1] : vector<8x8xf32> to vector<8xf32>
    %416 = vector.shape_cast %415 : vector<8xf32> to vector<8x1xf32>
    %417 = tpu.reciprocal %416 {approx = true} : vector<8x1xf32> -> vector<8x1xf32>
    %418 = vector.broadcast %417 : vector<8x1xf32> to vector<8x8xf32>
    %419 = arith.mulf %414, %418 : vector<8x8xf32>
    %cst_148 = arith.constant dense<0.000000e+00> : vector<8x8xf32>
    %420 = tpu.matmul %419, %404, %cst_148 {dimension_numbers = #tpu.dot_dimension_numbers<[1], [0], [0], [1], [0, 0, 1, 1], [], []>} : vector<8x8xf32>, vector<8x8xf32>, vector<8x8xf32> -> vector<8x8xf32>
    %c8_149 = arith.constant 8 : index
    %c8_150 = arith.constant 8 : index
    %421 = vector.load %arg11[%c8_149, %c8_150] : memref<16x32xf32, #tpu.memory_space<vmem>>, vector<8x8xf32>
    tpu.vector_store %arg11[%c8_149, %c8_150], %420 {strides = array<i32>} : memref<16x32xf32, #tpu.memory_space<vmem>>, vector<8x8xf32>,
    %422 = vector.extract_strided_slice %378 {offsets = [0, 16], sizes = [8, 8], strides = [1, 1]} : vector<8x32xf32> to vector<8x8xf32>
    %423 = vector.extract_strided_slice %379 {offsets = [0, 16], sizes = [8, 8], strides = [1, 1]} : vector<8x32xf32> to vector<8x8xf32>
    %424 = vector.extract_strided_slice %380 {offsets = [0, 16], sizes = [8, 8], strides = [1, 1]} : vector<8x32xf32> to vector<8x8xf32>
    %425 = tpu.transpose %423, [1, 0] : vector<8x8xf32> -> vector<8x8xf32>
    %cst_151 = arith.constant dense<0.000000e+00> : vector<8x8xf32>
    %426 = tpu.matmul %422, %425, %cst_151 {dimension_numbers = #tpu.dot_dimension_numbers<[1], [0], [0], [1], [0, 0, 1, 1], [], []>} : vector<8x8xf32>, vector<8x8xf32>, vector<8x8xf32> -> vector<8x8xf32>
    %cst_152 = arith.constant 0.353553385 : f32
    %427 = vector.broadcast %cst_152 : f32 to vector<8x8xf32>
    %428 = arith.mulf %426, %427 : vector<8x8xf32>
    %429 = arith.addf %428, %381 : vector<8x8xf32>
    %cst_153 = arith.constant dense<0xFF800000> : vector<8xf32>
    %430 = vector.multi_reduction <maximumf>, %429, %cst_153 [1] : vector<8x8xf32> to vector<8xf32>
    %431 = vector.shape_cast %430 : vector<8xf32> to vector<8x1xf32>
    %432 = vector.broadcast %431 : vector<8x1xf32> to vector<8x8xf32>
    %433 = arith.subf %429, %432 : vector<8x8xf32>
    %434 = math.exp %433 : vector<8x8xf32>
    %cst_154 = arith.constant dense<0.000000e+00> : vector<8xf32>
    %435 = vector.multi_reduction <add>, %434, %cst_154 [1] : vector<8x8xf32> to vector<8xf32>
    %436 = vector.shape_cast %435 : vector<8xf32> to vector<8x1xf32>
    %437 = tpu.reciprocal %436 {approx = true} : vector<8x1xf32> -> vector<8x1xf32>
    %438 = vector.broadcast %437 : vector<8x1xf32> to vector<8x8xf32>
    %439 = arith.mulf %434, %438 : vector<8x8xf32>
    %cst_155 = arith.constant dense<0.000000e+00> : vector<8x8xf32>
    %440 = tpu.matmul %439, %424, %cst_155 {dimension_numbers = #tpu.dot_dimension_numbers<[1], [0], [0], [1], [0, 0, 1, 1], [], []>} : vector<8x8xf32>, vector<8x8xf32>, vector<8x8xf32> -> vector<8x8xf32>
    %c8_156 = arith.constant 8 : index
    %c16_157 = arith.constant 16 : index
    %441 = vector.load %arg11[%c8_156, %c16_157] : memref<16x32xf32, #tpu.memory_space<vmem>>, vector<8x8xf32>
    tpu.vector_store %arg11[%c8_156, %c16_157], %440 {strides = array<i32>} : memref<16x32xf32, #tpu.memory_space<vmem>>, vector<8x8xf32>,
    %442 = vector.extract_strided_slice %378 {offsets = [0, 24], sizes = [8, 8], strides = [1, 1]} : vector<8x32xf32> to vector<8x8xf32>
    %443 = vector.extract_strided_slice %379 {offsets = [0, 24], sizes = [8, 8], strides = [1, 1]} : vector<8x32xf32> to vector<8x8xf32>
    %444 = vector.extract_strided_slice %380 {offsets = [0, 24], sizes = [8, 8], strides = [1, 1]} : vector<8x32xf32> to vector<8x8xf32>
    %445 = tpu.transpose %443, [1, 0] : vector<8x8xf32> -> vector<8x8xf32>
    %cst_158 = arith.constant dense<0.000000e+00> : vector<8x8xf32>
    %446 = tpu.matmul %442, %445, %cst_158 {dimension_numbers = #tpu.dot_dimension_numbers<[1], [0], [0], [1], [0, 0, 1, 1], [], []>} : vector<8x8xf32>, vector<8x8xf32>, vector<8x8xf32> -> vector<8x8xf32>
    %cst_159 = arith.constant 0.353553385 : f32
    %447 = vector.broadcast %cst_159 : f32 to vector<8x8xf32>
    %448 = arith.mulf %446, %447 : vector<8x8xf32>
    %449 = arith.addf %448, %381 : vector<8x8xf32>
    %cst_160 = arith.constant dense<0xFF800000> : vector<8xf32>
    %450 = vector.multi_reduction <maximumf>, %449, %cst_160 [1] : vector<8x8xf32> to vector<8xf32>
    %451 = vector.shape_cast %450 : vector<8xf32> to vector<8x1xf32>
    %452 = vector.broadcast %451 : vector<8x1xf32> to vector<8x8xf32>
    %453 = arith.subf %449, %452 : vector<8x8xf32>
    %454 = math.exp %453 : vector<8x8xf32>
    %cst_161 = arith.constant dense<0.000000e+00> : vector<8xf32>
    %455 = vector.multi_reduction <add>, %454, %cst_161 [1] : vector<8x8xf32> to vector<8xf32>
    %456 = vector.shape_cast %455 : vector<8xf32> to vector<8x1xf32>
    %457 = tpu.reciprocal %456 {approx = true} : vector<8x1xf32> -> vector<8x1xf32>
    %458 = vector.broadcast %457 : vector<8x1xf32> to vector<8x8xf32>
    %459 = arith.mulf %454, %458 : vector<8x8xf32>
    %cst_162 = arith.constant dense<0.000000e+00> : vector<8x8xf32>
    %460 = tpu.matmul %459, %444, %cst_162 {dimension_numbers = #tpu.dot_dimension_numbers<[1], [0], [0], [1], [0, 0, 1, 1], [], []>} : vector<8x8xf32>, vector<8x8xf32>, vector<8x8xf32> -> vector<8x8xf32>
    %c8_163 = arith.constant 8 : index
    %c24_164 = arith.constant 24 : index
    %461 = vector.load %arg11[%c8_163, %c24_164] : memref<16x32xf32, #tpu.memory_space<vmem>>, vector<8x8xf32>
    tpu.vector_store %arg11[%c8_163, %c24_164], %460 {strides = array<i32>} : memref<16x32xf32, #tpu.memory_space<vmem>>, vector<8x8xf32>,
    %c0_165 = arith.constant 0 : index
    %c0_166 = arith.constant 0 : index
    %462 = vector.load %arg11[%c0_165, %c0_166] : memref<16x32xf32, #tpu.memory_space<vmem>>, vector<16x32xf32>
    %463 = arith.addf %287, %462 : vector<16x32xf32>
    %cst_167 = arith.constant dense<0.000000e+00> : vector<16xf32>
    %464 = vector.multi_reduction <add>, %463, %cst_167 [1] : vector<16x32xf32> to vector<16xf32>
    %465 = vector.shape_cast %464 : vector<16xf32> to vector<16x1xf32>
    %cst_168 = arith.constant 3.200000e+01 : f32
    %466 = vector.broadcast %cst_168 : f32 to vector<16x1xf32>
    %467 = arith.divf %465, %466 : vector<16x1xf32>
    %468 = vector.broadcast %467 : vector<16x1xf32> to vector<16x32xf32>
    %469 = arith.subf %463, %468 : vector<16x32xf32>
    %470 = arith.mulf %469, %469 : vector<16x32xf32>
    %cst_169 = arith.constant dense<0.000000e+00> : vector<16xf32>
    %471 = vector.multi_reduction <add>, %470, %cst_169 [1] : vector<16x32xf32> to vector<16xf32>
    %472 = vector.shape_cast %471 : vector<16xf32> to vector<16x1xf32>
    %cst_170 = arith.constant 3.200000e+01 : f32
    %473 = vector.broadcast %cst_170 : f32 to vector<16x1xf32>
    %474 = arith.divf %472, %473 : vector<16x1xf32>
    %475 = vector.broadcast %467 : vector<16x1xf32> to vector<16x32xf32>
    %476 = arith.subf %463, %475 : vector<16x32xf32>
    %cst_171 = arith.constant 9.99999974E-6 : f32
    %477 = vector.broadcast %cst_171 : f32 to vector<16x1xf32>
    %478 = arith.addf %474, %477 : vector<16x1xf32>
    %479 = math.rsqrt %478 : vector<16x1xf32>
    %480 = vector.broadcast %479 : vector<16x1xf32> to vector<16x32xf32>
    %481 = arith.mulf %476, %480 : vector<16x32xf32>
    %482 = arith.mulf %481, %262 : vector<16x32xf32>
    %483 = arith.addf %482, %265 : vector<16x32xf32>
    %cst_172 = arith.constant dense<0.000000e+00> : vector<16x32xf32>
    %484 = tpu.matmul %483, %255, %cst_172 {dimension_numbers = #tpu.dot_dimension_numbers<[1], [0], [0], [1], [0, 0, 1, 1], [], []>} : vector<16x32xf32>, vector<32x32xf32>, vector<16x32xf32> -> vector<16x32xf32>
    %485 = vector.broadcast %266 : vector<1x32xf32> to vector<16x32xf32>
    %486 = arith.addf %484, %485 : vector<16x32xf32>
    %cst_173 = arith.constant 0.000000e+00 : f32
    %487 = vector.broadcast %cst_173 : f32 to vector<16x32xf32>
    %488 = arith.maximumf %486, %487 : vector<16x32xf32>
    %cst_174 = arith.constant dense<0.000000e+00> : vector<16x32xf32>
    %489 = tpu.matmul %488, %257, %cst_174 {dimension_numbers = #tpu.dot_dimension_numbers<[1], [0], [0], [1], [0, 0, 1, 1], [], []>} : vector<16x32xf32>, vector<32x32xf32>, vector<16x32xf32> -> vector<16x32xf32>
    %490 = vector.broadcast %267 : vector<1x32xf32> to vector<16x32xf32>
    %491 = arith.addf %489, %490 : vector<16x32xf32>
    %492 = arith.addf %463, %491 : vector<16x32xf32>
    %493 = vector.shape_cast %492 : vector<16x32xf32> to vector<2x8x32xf32>
    %494 = vector.extract_strided_slice %493 {offsets = [0, 7, 0], sizes = [2, 1, 32], strides = [1, 1, 1]} : vector<2x8x32xf32> to vector<2x1x32xf32>
    %495 = vector.shape_cast %494 : vector<2x1x32xf32> to vector<2x32xf32>
    %c0_175 = arith.constant 0 : index
    %c0_176 = arith.constant 0 : index
    %496 = vector.load %arg9[%c0_175, %c0_176] : memref<32x128xf32, #tpu.memory_space<vmem>>, vector<32x128xf32>
    %cst_177 = arith.constant dense<0.000000e+00> : vector<2x128xf32>
    %497 = tpu.matmul %495, %496, %cst_177 {dimension_numbers = #tpu.dot_dimension_numbers<[1], [0], [0], [1], [0, 0, 1, 1], [], []>} : vector<2x32xf32>, vector<32x128xf32>, vector<2x128xf32> -> vector<2x128xf32>
    %c0_178 = arith.constant 0 : index
    %c0_179 = arith.constant 0 : index
    %498 = vector.load %arg10[%c0_178, %c0_179] : memref<2x128xf32, #tpu.memory_space<vmem>>, vector<2x128xf32>
    tpu.vector_store %arg10[%c0_178, %c0_179], %497 {strides = array<i32>} : memref<2x128xf32, #tpu.memory_space<vmem>>, vector<2x128xf32>,
    return
  }
  func.func @transform_0(%arg0: i32) -> (i32, i32) {
    %c0_i32 = arith.constant 0 : i32
    %c0_i32_0 = arith.constant 0 : i32
    %c0_i32_1 = arith.constant 0 : i32
    return %c0_i32, %c0_i32_0 : i32, i32
  }
  func.func @transform_1(%arg0: i32) -> (i32, i32, i32) {
    %c0_i32 = arith.constant 0 : i32
    %c0_i32_0 = arith.constant 0 : i32
    %c0_i32_1 = arith.constant 0 : i32
    %c0_i32_2 = arith.constant 0 : i32
    return %c0_i32, %c0_i32_0, %c0_i32_1 : i32, i32, i32
  }
  func.func @transform_2(%arg0: i32) -> (i32, i32) {
    %c0_i32 = arith.constant 0 : i32
    %c0_i32_0 = arith.constant 0 : i32
    %c0_i32_1 = arith.constant 0 : i32
    return %c0_i32, %c0_i32_0 : i32, i32
  }
  func.func @transform_3(%arg0: i32) -> (i32, i32) {
    %c0_i32 = arith.constant 0 : i32
    %c0_i32_0 = arith.constant 0 : i32
    %c0_i32_1 = arith.constant 0 : i32
    return %c0_i32, %c0_i32_0 : i32, i32
  }
  func.func @transform_4(%arg0: i32) -> (i32, i32, i32) {
    %c0_i32 = arith.constant 0 : i32
    %c0_i32_0 = arith.constant 0 : i32
    %c0_i32_1 = arith.constant 0 : i32
    %c0_i32_2 = arith.constant 0 : i32
    return %c0_i32, %c0_i32_0, %c0_i32_1 : i32, i32, i32
  }
  func.func @transform_5(%arg0: i32) -> (i32, i32, i32) {
    %c0_i32 = arith.constant 0 : i32
    %c0_i32_0 = arith.constant 0 : i32
    %c0_i32_1 = arith.constant 0 : i32
    %c0_i32_2 = arith.constant 0 : i32
    return %c0_i32, %c0_i32_0, %c0_i32_1 : i32, i32, i32
  }
  func.func @transform_6(%arg0: i32) -> (i32, i32, i32) {
    %c0_i32 = arith.constant 0 : i32
    %c0_i32_0 = arith.constant 0 : i32
    %c0_i32_1 = arith.constant 0 : i32
    %c0_i32_2 = arith.constant 0 : i32
    return %c0_i32, %c0_i32_0, %c0_i32_1 : i32, i32, i32
  }
  func.func @transform_7(%arg0: i32) -> (i32, i32, i32) {
    %c0_i32 = arith.constant 0 : i32
    %c0_i32_0 = arith.constant 0 : i32
    %c0_i32_1 = arith.constant 0 : i32
    %c0_i32_2 = arith.constant 0 : i32
    return %c0_i32, %c0_i32_0, %c0_i32_1 : i32, i32, i32
  }
  func.func @transform_8(%arg0: i32) -> (i32, i32) {
    %c0_i32 = arith.constant 0 : i32
    %c0_i32_0 = arith.constant 0 : i32
    %c0_i32_1 = arith.constant 0 : i32
    return %c0_i32, %c0_i32_0 : i32, i32
  }
  func.func @transform_9(%arg0: i32) -> (i32, i32) {
    %c0_i32 = arith.constant 0 : i32
    %c0_i32_0 = arith.constant 0 : i32
    %c0_i32_1 = arith.constant 0 : i32
    return %c0_i32, %c0_i32_0 : i32, i32
  }
}

</mosaic_0001>

<llo_original>
// kernel: cosan_forward.1
$region0: #{cosan_forward.1}
  #allocation0 [shape = 'u32[]', space=smem, size = 0x4, offset = 0x4, fixed_abs, tag = 'smem constant byte address 0x4 - core index']
  #allocation1 [shape = 'u32[144,128]{1,0:T(1,128)}', space=vmem, size = 0x12000, scoped, tag = 'internal scratch']
  #allocation2 [shape = 'f32[16,32]{1,0:T(8,128)}', space=vmem, size = 0x2000, scoped, tag = 'scratch operand']
  %s0 = inlined_call_operand.vmem [shape: f32[16,32], index: 0, kind: input, shape index: {}]
  %s1 = inlined_call_operand.vmem [shape: f32[16,4,32], index: 1, kind: input, shape index: {}]
  %s2 = inlined_call_operand.vmem [shape: f32[16,4], index: 2, kind: input, shape index: {}]
  %s3 = inlined_call_operand.vmem [shape: f32[16,8], index: 3, kind: input, shape index: {}]
  %s4 = inlined_call_operand.vmem [shape: f32[2,32,96], index: 4, kind: input, shape index: {}]
  %s5 = inlined_call_operand.vmem [shape: f32[2,32,32], index: 5, kind: input, shape index: {}]
  %s6 = inlined_call_operand.vmem [shape: f32[2,32,32], index: 6, kind: input, shape index: {}]
  %s7 = inlined_call_operand.vmem [shape: f32[2,4,32], index: 7, kind: input, shape index: {}]
  %s8 = inlined_call_operand.vmem [shape: f32[32,128], index: 8, kind: input, shape index: {}]
  %s9 = inlined_call_operand.hbm [shape: f32[2,128], index: 9, kind: output, shape index: {}]
  %s10 = sld [smem:[#allocation0]]
  $region46: #{cosan_forward.1} parent=0
    _
  %s12 = ssub.s32 1, %s10
  %s13 = scalar_select 0, %s12, %s10
  $region1: #{cosan_forward.1} parent=0
    #allocation3 [shape = 'u8[1024]{0}', space=vmem, size = 0x400, scoped, tag = 'output window, operand 0, single buffered']
    #allocation4 [shape = 's32[1]{0}', space=sflag, size = 0x4, scoped, tag = 'scoped memory for cosan_forward.1']
    %14 = vsyncpa [#allocation4], 0
    // Predicated region
    $region2: #{cosan_forward.1} parent=1 // pred_check
      _
    $region3: #{cosan_forward.1} parent=1 // pred_check_branch
      %16 = sbr.rel (0) target = $region5
    $region4: #{cosan_forward.1} parent=1 // pred_region
      _
    $region5: #{cosan_forward.1} parent=1 // pred_fallthru
      _
    // Predicated region
    $region6: #{cosan_forward.1} parent=1 // pred_check
      _
    $region7: #{cosan_forward.1} parent=1 // pred_check_branch
      %18 = sbr.rel (0) target = $region9
    $region8: #{cosan_forward.1} parent=1 // pred_region
      _
    $region9: #{cosan_forward.1} parent=1 // pred_fallthru
      _
    // Predicated region
    $region10: #{cosan_forward.1} parent=1 // pred_check
      _
    $region11: #{cosan_forward.1} parent=1 // pred_check_branch
      %20 = sbr.rel (0) target = $region13
    $region12: #{cosan_forward.1} parent=1 // pred_region
      _
    $region13: #{cosan_forward.1} parent=1 // pred_fallthru
      _
    // Predicated region
    $region14: #{cosan_forward.1} parent=1 // pred_check
      _
    $region15: #{cosan_forward.1} parent=1 // pred_check_branch
      %22 = sbr.rel (0) target = $region17
    $region16: #{cosan_forward.1} parent=1 // pred_region
      _
    $region17: #{cosan_forward.1} parent=1 // pred_fallthru
      _
    // Predicated region
    $region18: #{cosan_forward.1} parent=1 // pred_check
      _
    $region19: #{cosan_forward.1} parent=1 // pred_check_branch
      %24 = sbr.rel (0) target = $region21
    $region20: #{cosan_forward.1} parent=1 // pred_region
      _
    $region21: #{cosan_forward.1} parent=1 // pred_fallthru
      _
    // Predicated region
    $region22: #{cosan_forward.1} parent=1 // pred_check
      _
    $region23: #{cosan_forward.1} parent=1 // pred_check_branch
      %26 = sbr.rel (0) target = $region25
    $region24: #{cosan_forward.1} parent=1 // pred_region
      _
    $region25: #{cosan_forward.1} parent=1 // pred_fallthru
      _
    // Predicated region
    $region26: #{cosan_forward.1} parent=1 // pred_check
      _
    $region27: #{cosan_forward.1} parent=1 // pred_check_branch
      %28 = sbr.rel (0) target = $region29
    $region28: #{cosan_forward.1} parent=1 // pred_region
      _
    $region29: #{cosan_forward.1} parent=1 // pred_fallthru
      _
    // Predicated region
    $region30: #{cosan_forward.1} parent=1 // pred_check
      _
    $region31: #{cosan_forward.1} parent=1 // pred_check_branch
      %30 = sbr.rel (0) target = $region33
    $region32: #{cosan_forward.1} parent=1 // pred_region
      _
    $region33: #{cosan_forward.1} parent=1 // pred_fallthru
      _
    // Predicated region
    $region34: #{cosan_forward.1} parent=1 // pred_check
      _
    $region35: #{cosan_forward.1} parent=1 // pred_check_branch
      %32 = sbr.rel (0) target = $region37
    $region36: #{cosan_forward.1} parent=1 // pred_region
      _
    $region37: #{cosan_forward.1} parent=1 // pred_fallthru
      _
    %v33 = vld [vmem:[%s1] sm:$0xf]
    %v34 = vld [vmem:[%s1 + $0x4] sm:$0xf]
    %v35 = vld [vmem:[%s1 + $0x8] sm:$0xf]
    %v36 = vld [vmem:[%s1 + $0xc] sm:$0xf]
    %v37 = vld [vmem:[%s1 + $0x10] sm:$0xf]
    %v38 = vld [vmem:[%s1 + $0x14] sm:$0xf]
    %v39 = vld [vmem:[%s1 + $0x18] sm:$0xf]
    %v40 = vld [vmem:[%s1 + $0x1c] sm:$0xf]
    %v41 = vld [vmem:[%s1 + $0x20] sm:$0xf]
    %v42 = vld [vmem:[%s1 + $0x24] sm:$0xf]
    %v43 = vld [vmem:[%s1 + $0x28] sm:$0xf]
    %v44 = vld [vmem:[%s1 + $0x2c] sm:$0xf]
    %v45 = vld [vmem:[%s1 + $0x30] sm:$0xf]
    %v46 = vld [vmem:[%s1 + $0x34] sm:$0xf]
    %v47 = vld [vmem:[%s1 + $0x38] sm:$0xf]
    %v48 = vld [vmem:[%s1 + $0x3c] sm:$0xf]
    %v49 = vld [vmem:[%s2] sm:$0xff]
    %v50 = vld [vmem:[%s2 + $0x8] sm:$0xff]
    %v51 = vlaneseq
    %v52 = vshrl.u32 %v51, 7
    %v53 = vsub.s32 0, %v52
    %v54 = vrot.slane %v49, %v53
    %56 = vbcast.lane.b32.xlu0 %v54, 256
    %v57 = vpop.permute.xlu0 %56
    %v58 = vlaneseq
    %v59 = vshrl.u32 %v58, 7
    %v60 = vsub.s32 1, %v59
    %v61 = vrot.slane %v49, %v60
    %63 = vbcast.lane.b32.xlu0 %v61, 256
    %v64 = vpop.permute.xlu0 %63
    %v65 = vlaneseq
    %v66 = vshrl.u32 %v65, 7
    %v67 = vsub.s32 2, %v66
    %v68 = vrot.slane %v49, %v67
    %70 = vbcast.lane.b32.xlu0 %v68, 256
    %v71 = vpop.permute.xlu0 %70
    %v72 = vlaneseq
    %v73 = vshrl.u32 %v72, 7
    %v74 = vsub.s32 3, %v73
    %v75 = vrot.slane %v49, %v74
    %77 = vbcast.lane.b32.xlu0 %v75, 256
    %v78 = vpop.permute.xlu0 %77
    %v79 = vlaneseq
    %v80 = vshrl.u32 %v79, 7
    %v81 = vsub.s32 4, %v80
    %v82 = vrot.slane %v49, %v81
    %84 = vbcast.lane.b32.xlu0 %v82, 256
    %v85 = vpop.permute.xlu0 %84
    %v86 = vlaneseq
    %v87 = vshrl.u32 %v86, 7
    %v88 = vsub.s32 5, %v87
    %v89 = vrot.slane %v49, %v88
    %91 = vbcast.lane.b32.xlu0 %v89, 256
    %v92 = vpop.permute.xlu0 %91
    %v93 = vlaneseq
    %v94 = vshrl.u32 %v93, 7
    %v95 = vsub.s32 6, %v94
    %v96 = vrot.slane %v49, %v95
    %98 = vbcast.lane.b32.xlu0 %v96, 256
    %v99 = vpop.permute.xlu0 %98
    %v100 = vlaneseq
    %v101 = vshrl.u32 %v100, 7
    %v102 = vsub.s32 7, %v101
    %v103 = vrot.slane %v49, %v102
    %105 = vbcast.lane.b32.xlu0 %v103, 256
    %v106 = vpop.permute.xlu0 %105
    %v107 = vlaneseq
    %v108 = vshrl.u32 %v107, 7
    %v109 = vsub.s32 0, %v108
    %v110 = vrot.slane %v50, %v109
    %112 = vbcast.lane.b32.xlu0 %v110, 256
    %v113 = vpop.permute.xlu0 %112
    %v114 = vlaneseq
    %v115 = vshrl.u32 %v114, 7
    %v116 = vsub.s32 1, %v115
    %v117 = vrot.slane %v50, %v116
    %119 = vbcast.lane.b32.xlu0 %v117, 256
    %v120 = vpop.permute.xlu0 %119
    %v121 = vlaneseq
    %v122 = vshrl.u32 %v121, 7
    %v123 = vsub.s32 2, %v122
    %v124 = vrot.slane %v50, %v123
    %126 = vbcast.lane.b32.xlu0 %v124, 256
    %v127 = vpop.permute.xlu0 %126
    %v128 = vlaneseq
    %v129 = vshrl.u32 %v128, 7
    %v130 = vsub.s32 3, %v129
    %v131 = vrot.slane %v50, %v130
    %133 = vbcast.lane.b32.xlu0 %v131, 256
    %v134 = vpop.permute.xlu0 %133
    %v135 = vlaneseq
    %v136 = vshrl.u32 %v135, 7
    %v137 = vsub.s32 4, %v136
    %v138 = vrot.slane %v50, %v137
    %140 = vbcast.lane.b32.xlu0 %v138, 256
    %v141 = vpop.permute.xlu0 %140
    %v142 = vlaneseq
    %v143 = vshrl.u32 %v142, 7
    %v144 = vsub.s32 5, %v143
    %v145 = vrot.slane %v50, %v144
    %147 = vbcast.lane.b32.xlu0 %v145, 256
    %v148 = vpop.permute.xlu0 %147
    %v149 = vlaneseq
    %v150 = vshrl.u32 %v149, 7
    %v151 = vsub.s32 6, %v150
    %v152 = vrot.slane %v50, %v151
    %154 = vbcast.lane.b32.xlu0 %v152, 256
    %v155 = vpop.permute.xlu0 %154
    %v156 = vlaneseq
    %v157 = vshrl.u32 %v156, 7
    %v158 = vsub.s32 7, %v157
    %v159 = vrot.slane %v50, %v158
    %161 = vbcast.lane.b32.xlu0 %v159, 256
    %v162 = vpop.permute.xlu0 %161
    %v163 = vmul.f32 %v57, %v33
    %v164 = vmul.f32 %v64, %v34
    %v165 = vmul.f32 %v71, %v35
    %v166 = vmul.f32 %v78, %v36
    %v167 = vmul.f32 %v85, %v37
    %v168 = vmul.f32 %v92, %v38
    %v169 = vmul.f32 %v99, %v39
    %v170 = vmul.f32 %v106, %v40
    %v171 = vmul.f32 %v113, %v41
    %v172 = vmul.f32 %v120, %v42
    %v173 = vmul.f32 %v127, %v43
    %v174 = vmul.f32 %v134, %v44
    %v175 = vmul.f32 %v141, %v45
    %v176 = vmul.f32 %v148, %v46
    %v177 = vmul.f32 %v155, %v47
    %v178 = vmul.f32 %v162, %v48
    %vm179 = vcmask 257024
    %v180 = vsel %vm179, %v163, 0.0
    %v181 = vrot.slane %v180, 4
    %v182 = vadd.f32 %v180, %v181
    %v183 = vrot.slane %v182, 2
    %v184 = vadd.f32 %v182, %v183
    %v185 = vrot.slane %v184, 1
    %v186 = vadd.f32 %v184, %v185
    %v187 = vsel %vm179, %v164, 0.0
    %v188 = vrot.slane %v187, 4
    %v189 = vadd.f32 %v187, %v188
    %v190 = vrot.slane %v189, 2
    %v191 = vadd.f32 %v189, %v190
    %v192 = vrot.slane %v191, 1
    %v193 = vadd.f32 %v191, %v192
    %v194 = vsel %vm179, %v165, 0.0
    %v195 = vrot.slane %v194, 4
    %v196 = vadd.f32 %v194, %v195
    %v197 = vrot.slane %v196, 2
    %v198 = vadd.f32 %v196, %v197
    %v199 = vrot.slane %v198, 1
    %v200 = vadd.f32 %v198, %v199
    %v201 = vsel %vm179, %v166, 0.0
    %v202 = vrot.slane %v201, 4
    %v203 = vadd.f32 %v201, %v202
    %v204 = vrot.slane %v203, 2
    %v205 = vadd.f32 %v203, %v204
    %v206 = vrot.slane %v205, 1
    %v207 = vadd.f32 %v205, %v206
    %v208 = vsel %vm179, %v167, 0.0
    %v209 = vrot.slane %v208, 4
    %v210 = vadd.f32 %v208, %v209
    %v211 = vrot.slane %v210, 2
    %v212 = vadd.f32 %v210, %v211
    %v213 = vrot.slane %v212, 1
    %v214 = vadd.f32 %v212, %v213
    %v215 = vsel %vm179, %v168, 0.0
    %v216 = vrot.slane %v215, 4
    %v217 = vadd.f32 %v215, %v216
    %v218 = vrot.slane %v217, 2
    %v219 = vadd.f32 %v217, %v218
    %v220 = vrot.slane %v219, 1
    %v221 = vadd.f32 %v219, %v220
    %v222 = vsel %vm179, %v169, 0.0
    %v223 = vrot.slane %v222, 4
    %v224 = vadd.f32 %v222, %v223
    %v225 = vrot.slane %v224, 2
    %v226 = vadd.f32 %v224, %v225
    %v227 = vrot.slane %v226, 1
    %v228 = vadd.f32 %v226, %v227
    %v229 = vsel %vm179, %v170, 0.0
    %v230 = vrot.slane %v229, 4
    %v231 = vadd.f32 %v229, %v230
    %v232 = vrot.slane %v231, 2
    %v233 = vadd.f32 %v231, %v232
    %v234 = vrot.slane %v233, 1
    %v235 = vadd.f32 %v233, %v234
    %v236 = vsel %vm179, %v171, 0.0
    %v237 = vrot.slane %v236, 4
    %v238 = vadd.f32 %v236, %v237
    %v239 = vrot.slane %v238, 2
    %v240 = vadd.f32 %v238, %v239
    %v241 = vrot.slane %v240, 1
    %v242 = vadd.f32 %v240, %v241
    %v243 = vsel %vm179, %v172, 0.0
    %v244 = vrot.slane %v243, 4
    %v245 = vadd.f32 %v243, %v244
    %v246 = vrot.slane %v245, 2
    %v247 = vadd.f32 %v245, %v246
    %v248 = vrot.slane %v247, 1
    %v249 = vadd.f32 %v247, %v248
    %v250 = vsel %vm179, %v173, 0.0
    %v251 = vrot.slane %v250, 4
    %v252 = vadd.f32 %v250, %v251
    %v253 = vrot.slane %v252, 2
    %v254 = vadd.f32 %v252, %v253
    %v255 = vrot.slane %v254, 1
    %v256 = vadd.f32 %v254, %v255
    %v257 = vsel %vm179, %v174, 0.0
    %v258 = vrot.slane %v257, 4
    %v259 = vadd.f32 %v257, %v258
    %v260 = vrot.slane %v259, 2
    %v261 = vadd.f32 %v259, %v260
    %v262 = vrot.slane %v261, 1
    %v263 = vadd.f32 %v261, %v262
    %v264 = vsel %vm179, %v175, 0.0
    %v265 = vrot.slane %v264, 4
    %v266 = vadd.f32 %v264, %v265
    %v267 = vrot.slane %v266, 2
    %v268 = vadd.f32 %v266, %v267
    %v269 = vrot.slane %v268, 1
    %v270 = vadd.f32 %v268, %v269
    %v271 = vsel %vm179, %v176, 0.0
    %v272 = vrot.slane %v271, 4
    %v273 = vadd.f32 %v271, %v272
    %v274 = vrot.slane %v273, 2
    %v275 = vadd.f32 %v273, %v274
    %v276 = vrot.slane %v275, 1
    %v277 = vadd.f32 %v275, %v276
    %v278 = vsel %vm179, %v177, 0.0
    %v279 = vrot.slane %v278, 4
    %v280 = vadd.f32 %v278, %v279
    %v281 = vrot.slane %v280, 2
    %v282 = vadd.f32 %v280, %v281
    %v283 = vrot.slane %v282, 1
    %v284 = vadd.f32 %v282, %v283
    %v285 = vsel %vm179, %v178, 0.0
    %v286 = vrot.slane %v285, 4
    %v287 = vadd.f32 %v285, %v286
    %v288 = vrot.slane %v287, 2
    %v289 = vadd.f32 %v287, %v288
    %v290 = vrot.slane %v289, 1
    %v291 = vadd.f32 %v289, %v290
    %v292 = vld [vmem:[%s0] sm:$0xff]
    %v293 = vld [vmem:[%s0 + $0x8] sm:$0xff]
    %v294 = vmul.f32 %v186, 0.5
    %v295 = vmul.f32 %v193, 0.5
    %v296 = vmul.f32 %v200, 0.5
    %v297 = vmul.f32 %v207, 0.5
    %v298 = vmul.f32 %v214, 0.5
    %v299 = vmul.f32 %v221, 0.5
    %v300 = vmul.f32 %v228, 0.5
    %v301 = vmul.f32 %v235, 0.5
    %v302 = vmul.f32 %v242, 0.5
    %v303 = vmul.f32 %v249, 0.5
    %v304 = vmul.f32 %v256, 0.5
    %v305 = vmul.f32 %v263, 0.5
    %v306 = vmul.f32 %v270, 0.5
    %v307 = vmul.f32 %v277, 0.5
    %v308 = vmul.f32 %v284, 0.5
    %v309 = vmul.f32 %v291, 0.5
    %vm326 = vcmask 1041409
    %v327 = vsel %vm326, %v295, %v294
    %vm328 = vcmask 1042434
    %v329 = vsel %vm328, %v296, %v327
    %vm330 = vcmask 1043459
    %v331 = vsel %vm330, %v297, %v329
    %vm332 = vcmask 1044484
    %v333 = vsel %vm332, %v298, %v331
    %vm334 = vcmask 1045509
    %v335 = vsel %vm334, %v299, %v333
    %vm336 = vcmask 1046534
    %v337 = vsel %vm336, %v300, %v335
    %vm338 = vcmask 1047559
    %v339 = vsel %vm338, %v301, %v337
    %v340 = vsel %vm326, %v303, %v302
    %v341 = vsel %vm328, %v304, %v340
    %v342 = vsel %vm330, %v305, %v341
    %v343 = vsel %vm332, %v306, %v342
    %v344 = vsel %vm334, %v307, %v343
    %v345 = vsel %vm336, %v308, %v344
    %v346 = vsel %vm338, %v309, %v345
    %v349 = vadd.f32 %v292, %v339
    %v350 = vadd.f32 %v293, %v346
    %v351 = vld [vmem:[%s3] sm:$0xff]
    %v352 = vld [vmem:[%s3 + $0x8] sm:$0xff]
    %v353 = vld [vmem:[%s4] sm:$0xff]
    %v354 = vld [vmem:[%s4 + $0x8] sm:$0xff]
    %v355 = vld [vmem:[%s4 + $0x10] sm:$0xff]
    %v356 = vld [vmem:[%s4 + $0x18] sm:$0xff]
    %v357 = vld [vmem:[%s5] sm:$0xff]
    %v358 = vld [vmem:[%s5 + $0x8] sm:$0xff]
    %v359 = vld [vmem:[%s5 + $0x10] sm:$0xff]
    %v360 = vld [vmem:[%s5 + $0x18] sm:$0xff]
    %v361 = vld [vmem:[%s6] sm:$0xff]
    %v362 = vld [vmem:[%s6 + $0x8] sm:$0xff]
    %v363 = vld [vmem:[%s6 + $0x10] sm:$0xff]
    %v364 = vld [vmem:[%s6 + $0x18] sm:$0xff]
    %v365 = vld [vmem:[%s7] sm:$0xf]
    %v366 = vlaneseq
    %v367 = vshrl.u32 %v366, 7
    %v368 = vsub.s32 0, %v367
    %v369 = vrot.slane %v365, %v368
    %v370 = vlaneseq
    %v371 = vshrl.u32 %v370, 7
    %v372 = vsub.s32 1, %v371
    %v373 = vrot.slane %v365, %v372
    %vm374 = vcmask 261120
    %v375 = vsel %vm374, %v349, 0.0
    %376 = vadd.xlane.f32.xlu0 %v375
    %v377 = vpop.xlane.xlu0 %376
    %v378 = vsel %vm374, %v350, 0.0
    %379 = vadd.xlane.f32.xlu0 %v378
    %v380 = vpop.xlane.xlu0 %379
    %v381 = vrcp.pop 32.0
    %v382 = vmul.f32 %v377, %v381
    %v383 = vmul.f32 %v380, %v381
    %v384 = vsub.f32 %v349, %v382
    %v385 = vsub.f32 %v350, %v383
    %v386 = vmul.f32 %v384, %v384
    %v387 = vmul.f32 %v385, %v385
    %v388 = vsel %vm374, %v386, 0.0
    %389 = vadd.xlane.f32.xlu0 %v388
    %v390 = vpop.xlane.xlu0 %389
    %v391 = vsel %vm374, %v387, 0.0
    %392 = vadd.xlane.f32.xlu0 %v391
    %v393 = vpop.xlane.xlu0 %392
    %v394 = vmul.f32 %v390, %v381
    %v395 = vmul.f32 %v393, %v381
    %v396 = vadd.f32 %v394, 1e-05
    %v397 = vadd.f32 %v395, 1e-05
    %v398 = vrsqrt.pop %v396
    %v399 = vrsqrt.pop %v397
    %v400 = vmul.f32 %v384, %v398
    %v401 = vmul.f32 %v385, %v399
    %v402 = vmul.f32 %v400, %v369
    %v403 = vmul.f32 %v401, %v369
    %v404 = vadd.f32 %v402, %v373
    %v405 = vadd.f32 %v403, %v373
    %v407 = vsel %vm374, %v404, 0
    %v410 = vsel %vm374, %v405, 0
    %412 = vmatprep.subr.mxu0 0.0
    %413 = vmatpush1.msra.mxu0 %v353
    %414 = vmatprep.subr.mxu0 0.0
    %415 = vmatpush1.msra.mxu0 %v354
    %416 = vmatprep.subr.mxu0 0.0
    %417 = vmatpush1.msra.mxu0 %v355
    %418 = vmatprep.subr.mxu0 0.0
    %419 = vmatpush1.msra.mxu0 %v356
    %420 = vmatprep.subr.mxu0 0.0
    %421 = vmatpush1.msra.mxu0 0.0
    %422 = vmatprep.subr.mxu0 0.0
    %423 = vmatpush1.msra.mxu0 0.0
    %424 = vmatprep.subr.mxu0 0.0
    %425 = vmatpush1.msra.mxu0 0.0
    %426 = vmatprep.subr.mxu0 0.0
    %427 = vmatpush1.msra.mxu0 0.0
    %428 = vmatprep.subr.mxu0 0.0
    %429 = vmatpush1.msra.mxu0 0.0
    %430 = vmatprep.subr.mxu0 0.0
    %431 = vmatpush1.msra.mxu0 0.0
    %432 = vmatprep.subr.mxu0 0.0
    %433 = vmatpush1.msra.mxu0 0.0
    %434 = vmatprep.subr.mxu0 0.0
    %435 = vmatpush1.msra.mxu0 0.0
    %436 = vmatprep.subr.mxu0 0.0
    %437 = vmatpush1.msra.mxu0 0.0
    %438 = vmatprep.subr.mxu0 0.0
    %439 = vmatpush1.msra.mxu0 0.0
    %440 = vmatprep.subr.mxu0 0.0
    %441 = vmatpush1.msra.mxu0 0.0
    %442 = vmatprep.subr.mxu0 0.0
    %443 = vmatpush1.msra.mxu0 0.0
    %444 = vmatprep.subr.mxu0 0.0
    %445 = vmatpush1.msra.mxu0 0.0
    %446 = vmatprep.subr.mxu0 0.0
    %447 = vmatpush1.msra.mxu0 0.0
    %448 = vmatprep.subr.mxu0 0.0
    %449 = vmatpush1.msra.mxu0 0.0
    %450 = vmatprep.subr.mxu0 0.0
    %451 = vmatpush1.msra.mxu0 0.0
    %452 = vmatprep.subr.mxu0 0.0
    %453 = vmatpush1.msra.mxu0 0.0
    %454 = vmatprep.subr.mxu0 0.0
    %455 = vmatpush1.msra.mxu0 0.0
    %456 = vmatprep.subr.mxu0 0.0
    %457 = vmatpush1.msra.mxu0 0.0
    %458 = vmatprep.subr.mxu0 0.0
    %459 = vmatpush1.msra.mxu0 0.0
    %460 = vmatprep.subr.mxu0 0.0
    %461 = vmatpush1.msra.mxu0 0.0
    %462 = vmatprep.subr.mxu0 0.0
    %463 = vmatpush1.msra.mxu0 0.0
    %464 = vmatprep.subr.mxu0 0.0
    %465 = vmatpush1.msra.mxu0 0.0
    %466 = vmatprep.subr.mxu0 0.0
    %467 = vmatpush1.msra.mxu0 0.0
    %468 = vmatprep.subr.mxu0 0.0
    %469 = vmatpush1.msra.mxu0 0.0
    %470 = vmatprep.subr.mxu0 0.0
    %471 = vmatpush1.msra.mxu0 0.0
    %472 = vmatprep.subr.mxu0 0.0
    %473 = vmatpush1.msra.mxu0 0.0
    %474 = vmatprep.subr.mxu0 0.0
    %475 = vmatpush1.msra.mxu0 0.0
    %476 = vmatprep.mubr.f32.mxu0 0.0
    %477 = vmatmul.mubr.f32.gmra.mrb[0].mxu0 %v407
    %v478 = vpop.f32.mrb[0].mxu0
    %v479 = vadd.f32 0.0, %v478
    %v480 = vpop.f32.mrb[0].mxu0
    %481 = vmatprep.mubr.f32.mxu0 0.0
    %482 = vmatmul.mubr.f32.gmra.mrb[0].mxu0 %v410
    %v483 = vpop.f32.mrb[0].mxu0
    %v484 = vadd.f32 0.0, %v483
    %v485 = vpop.f32.mrb[0].mxu0
    %486 = vdwg.mxu0
    %v487 = vmax.f32 %v479, 0.0
    %v488 = vmax.f32 %v484, 0.0
    %490 = vrot.lane.b32.xlu0 %v479, 96
    %v491 = vpop.permute.xlu0 %490
    %vm492 = vcmask 64512
    %v494 = vsel %vm492, %v487, 0
    %v496 = vsel %vm492, %v491, 0
    %498 = vmatprep.subr.mxu0 0.0
    %499 = vmatpush1.xpose.msra.mxu0 %v496
    %500 = vmatprep.subr.mxu0 0.0
    %501 = vmatpush1.xpose.msra.mxu0 0.0
    %502 = vmatprep.subr.mxu0 0.0
    %503 = vmatpush1.xpose.msra.mxu0 0.0
    %504 = vmatprep.subr.mxu0 0.0
    %505 = vmatpush1.xpose.msra.mxu0 0.0
    %506 = vmatprep.subr.mxu0 0.0
    %507 = vmatpush1.xpose.msra.mxu0 0.0
    %508 = vmatprep.subr.mxu0 0.0
    %509 = vmatpush1.xpose.msra.mxu0 0.0
    %510 = vmatprep.subr.mxu0 0.0
    %511 = vmatpush1.xpose.msra.mxu0 0.0
    %512 = vmatprep.subr.mxu0 0.0
    %513 = vmatpush1.xpose.msra.mxu0 0.0
    %514 = vmatprep.subr.mxu0 0.0
    %515 = vmatpush1.xpose.msra.mxu0 0.0
    %516 = vmatprep.subr.mxu0 0.0
    %517 = vmatpush1.xpose.msra.mxu0 0.0
    %518 = vmatprep.subr.mxu0 0.0
    %519 = vmatpush1.xpose.msra.mxu0 0.0
    %520 = vmatprep.subr.mxu0 0.0
    %521 = vmatpush1.xpose.msra.mxu0 0.0
    %522 = vmatprep.subr.mxu0 0.0
    %523 = vmatpush1.xpose.msra.mxu0 0.0
    %524 = vmatprep.subr.mxu0 0.0
    %525 = vmatpush1.xpose.msra.mxu0 0.0
    %526 = vmatprep.subr.mxu0 0.0
    %527 = vmatpush1.xpose.msra.mxu0 0.0
    %528 = vmatprep.subr.mxu0 0.0
    %529 = vmatpush1.xpose.msra.mxu0 0.0
    %530 = vmatprep.subr.mxu0 0.0
    %531 = vmatpush1.xpose.msra.mxu0 0.0
    %532 = vmatprep.subr.mxu0 0.0
    %533 = vmatpush1.xpose.msra.mxu0 0.0
    %534 = vmatprep.subr.mxu0 0.0
    %535 = vmatpush1.xpose.msra.mxu0 0.0
    %536 = vmatprep.subr.mxu0 0.0
    %537 = vmatpush1.xpose.msra.mxu0 0.0
    %538 = vmatprep.subr.mxu0 0.0
    %539 = vmatpush1.xpose.msra.mxu0 0.0
    %540 = vmatprep.subr.mxu0 0.0
    %541 = vmatpush1.xpose.msra.mxu0 0.0
    %542 = vmatprep.subr.mxu0 0.0
    %543 = vmatpush1.xpose.msra.mxu0 0.0
    %544 = vmatprep.subr.mxu0 0.0
    %545 = vmatpush1.xpose.msra.mxu0 0.0
    %546 = vmatprep.subr.mxu0 0.0
    %547 = vmatpush1.xpose.msra.mxu0 0.0
    %548 = vmatprep.subr.mxu0 0.0
    %549 = vmatpush1.xpose.msra.mxu0 0.0
    %550 = vmatprep.subr.mxu0 0.0
    %551 = vmatpush1.xpose.msra.mxu0 0.0
    %552 = vmatprep.subr.mxu0 0.0
    %553 = vmatpush1.xpose.msra.mxu0 0.0
    %554 = vmatprep.subr.mxu0 0.0
    %555 = vmatpush1.xpose.msra.mxu0 0.0
    %556 = vmatprep.subr.mxu0 0.0
    %557 = vmatpush1.xpose.msra.mxu0 0.0
    %558 = vmatprep.subr.mxu0 0.0
    %559 = vmatpush1.xpose.msra.mxu0 0.0
    %560 = vmatprep.subr.mxu0 0.0
    %561 = vmatpush1.xpose.msra.mxu0 0.0
    %562 = vmatprep.mubr.f32.mxu0 0.0
    %563 = vmatmul.mubr.f32.gmra.mrb[0].mxu0 %v494
    %v564 = vpop.f32.mrb[0].mxu0
    %v565 = vadd.f32 0.0, %v564
    %v566 = vpop.f32.mrb[0].mxu0
    %567 = vdwg.mxu0
    %v568 = vmul.f32 %v565, 0.35355338
    %v569 = vadd.f32 %v568, %v351
    %v570 = vsel %vm492, %v569, -inf
    %571 = vmax.xlane.f32.xlu0 %v570
    %v572 = vpop.xlane.xlu0 %571
    %v573 = vsub.f32 %v569, %v572
    %v574 = vmul.f32 %v573, 1.442695
    %v575 = vpow.pop %v574
    %v576 = vsel %vm492, %v575, 0.0
    %577 = vadd.xlane.f32.xlu0 %v576
    %v578 = vpop.xlane.xlu0 %577
    %v579 = vrcp.pop %v578
    %v580 = vmul.f32 %v575, %v579
    %581 = vrot.lane.b32.xlu0 %v479, 64
    %v582 = vpop.permute.xlu0 %581
    %v585 = vsel %vm492, %v580, 0
    %587 = vmatprep.subr.mxu0 0.0
    %588 = vmatpush1.msra.mxu0 %v582
    %589 = vmatprep.subr.mxu0 0.0
    %590 = vmatpush1.msra.mxu0 0.0
    %591 = vmatprep.subr.mxu0 0.0
    %592 = vmatpush1.msra.mxu0 0.0
    %593 = vmatprep.subr.mxu0 0.0
    %594 = vmatpush1.msra.mxu0 0.0
    %595 = vmatprep.subr.mxu0 0.0
    %596 = vmatpush1.msra.mxu0 0.0
    %597 = vmatprep.subr.mxu0 0.0
    %598 = vmatpush1.msra.mxu0 0.0
    %599 = vmatprep.subr.mxu0 0.0
    %600 = vmatpush1.msra.mxu0 0.0
    %601 = vmatprep.subr.mxu0 0.0
    %602 = vmatpush1.msra.mxu0 0.0
    %603 = vmatprep.subr.mxu0 0.0
    %604 = vmatpush1.msra.mxu0 0.0
    %605 = vmatprep.subr.mxu0 0.0
    %606 = vmatpush1.msra.mxu0 0.0
    %607 = vmatprep.subr.mxu0 0.0
    %608 = vmatpush1.msra.mxu0 0.0
    %609 = vmatprep.subr.mxu0 0.0
    %610 = vmatpush1.msra.mxu0 0.0
    %611 = vmatprep.subr.mxu0 0.0
    %612 = vmatpush1.msra.mxu0 0.0
    %613 = vmatprep.subr.mxu0 0.0
    %614 = vmatpush1.msra.mxu0 0.0
    %615 = vmatprep.subr.mxu0 0.0
    %616 = vmatpush1.msra.mxu0 0.0
    %617 = vmatprep.subr.mxu0 0.0
    %618 = vmatpush1.msra.mxu0 0.0
    %619 = vmatprep.subr.mxu0 0.0
    %620 = vmatpush1.msra.mxu0 0.0
    %621 = vmatprep.subr.mxu0 0.0
    %622 = vmatpush1.msra.mxu0 0.0
    %623 = vmatprep.subr.mxu0 0.0
    %624 = vmatpush1.msra.mxu0 0.0
    %625 = vmatprep.subr.mxu0 0.0
    %626 = vmatpush1.msra.mxu0 0.0
    %627 = vmatprep.subr.mxu0 0.0
    %628 = vmatpush1.msra.mxu0 0.0
    %629 = vmatprep.subr.mxu0 0.0
    %630 = vmatpush1.msra.mxu0 0.0
    %631 = vmatprep.subr.mxu0 0.0
    %632 = vmatpush1.msra.mxu0 0.0
    %633 = vmatprep.subr.mxu0 0.0
    %634 = vmatpush1.msra.mxu0 0.0
    %635 = vmatprep.subr.mxu0 0.0
    %636 = vmatpush1.msra.mxu0 0.0
    %637 = vmatprep.subr.mxu0 0.0
    %638 = vmatpush1.msra.mxu0 0.0
    %639 = vmatprep.subr.mxu0 0.0
    %640 = vmatpush1.msra.mxu0 0.0
    %641 = vmatprep.subr.mxu0 0.0
    %642 = vmatpush1.msra.mxu0 0.0
    %643 = vmatprep.subr.mxu0 0.0
    %644 = vmatpush1.msra.mxu0 0.0
    %645 = vmatprep.subr.mxu0 0.0
    %646 = vmatpush1.msra.mxu0 0.0
    %647 = vmatprep.subr.mxu0 0.0
    %648 = vmatpush1.msra.mxu0 0.0
    %649 = vmatprep.subr.mxu0 0.0
    %650 = vmatpush1.msra.mxu0 0.0
    %651 = vmatprep.mubr.f32.mxu0 0.0
    %652 = vmatmul.mubr.f32.gmra.mrb[0].mxu0 %v585
    %v653 = vpop.f32.mrb[0].mxu0
    %v654 = vadd.f32 0.0, %v653
    %v655 = vpop.f32.mrb[0].mxu0
    %656 = vdwg.mxu0
    %657 = vst.msk [vmem:[#allocation2] sm:$0xff] %vm492, %v654
    %658 = vrot.lane.b32.xlu0 %v487, 120
    %v659 = vpop.permute.xlu0 %658
    %660 = vrot.lane.b32.xlu0 %v479, 88
    %v661 = vpop.permute.xlu0 %660
    %v662 = vsel %vm492, %v659, 0
    %v664 = vsel %vm492, %v661, 0
    %666 = vmatprep.subr.mxu0 0.0
    %667 = vmatpush1.xpose.msra.mxu0 %v664
    %668 = vmatprep.subr.mxu0 0.0
    %669 = vmatpush1.xpose.msra.mxu0 0.0
    %670 = vmatprep.subr.mxu0 0.0
    %671 = vmatpush1.xpose.msra.mxu0 0.0
    %672 = vmatprep.subr.mxu0 0.0
    %673 = vmatpush1.xpose.msra.mxu0 0.0
    %674 = vmatprep.subr.mxu0 0.0
    %675 = vmatpush1.xpose.msra.mxu0 0.0
    %676 = vmatprep.subr.mxu0 0.0
    %677 = vmatpush1.xpose.msra.mxu0 0.0
    %678 = vmatprep.subr.mxu0 0.0
    %679 = vmatpush1.xpose.msra.mxu0 0.0
    %680 = vmatprep.subr.mxu0 0.0
    %681 = vmatpush1.xpose.msra.mxu0 0.0
    %682 = vmatprep.subr.mxu0 0.0
    %683 = vmatpush1.xpose.msra.mxu0 0.0
    %684 = vmatprep.subr.mxu0 0.0
    %685 = vmatpush1.xpose.msra.mxu0 0.0
    %686 = vmatprep.subr.mxu0 0.0
    %687 = vmatpush1.xpose.msra.mxu0 0.0
    %688 = vmatprep.subr.mxu0 0.0
    %689 = vmatpush1.xpose.msra.mxu0 0.0
    %690 = vmatprep.subr.mxu0 0.0
    %691 = vmatpush1.xpose.msra.mxu0 0.0
    %692 = vmatprep.subr.mxu0 0.0
    %693 = vmatpush1.xpose.msra.mxu0 0.0
    %694 = vmatprep.subr.mxu0 0.0
    %695 = vmatpush1.xpose.msra.mxu0 0.0
    %696 = vmatprep.subr.mxu0 0.0
    %697 = vmatpush1.xpose.msra.mxu0 0.0
    %698 = vmatprep.subr.mxu0 0.0
    %699 = vmatpush1.xpose.msra.mxu0 0.0
    %700 = vmatprep.subr.mxu0 0.0
    %701 = vmatpush1.xpose.msra.mxu0 0.0
    %702 = vmatprep.subr.mxu0 0.0
    %703 = vmatpush1.xpose.msra.mxu0 0.0
    %704 = vmatprep.subr.mxu0 0.0
    %705 = vmatpush1.xpose.msra.mxu0 0.0
    %706 = vmatprep.subr.mxu0 0.0
    %707 = vmatpush1.xpose.msra.mxu0 0.0
    %708 = vmatprep.subr.mxu0 0.0
    %709 = vmatpush1.xpose.msra.mxu0 0.0
    %710 = vmatprep.subr.mxu0 0.0
    %711 = vmatpush1.xpose.msra.mxu0 0.0
    %712 = vmatprep.subr.mxu0 0.0
    %713 = vmatpush1.xpose.msra.mxu0 0.0
    %714 = vmatprep.subr.mxu0 0.0
    %715 = vmatpush1.xpose.msra.mxu0 0.0
    %716 = vmatprep.subr.mxu0 0.0
    %717 = vmatpush1.xpose.msra.mxu0 0.0
    %718 = vmatprep.subr.mxu0 0.0
    %719 = vmatpush1.xpose.msra.mxu0 0.0
    %720 = vmatprep.subr.mxu0 0.0
    %721 = vmatpush1.xpose.msra.mxu0 0.0
    %722 = vmatprep.subr.mxu0 0.0
    %723 = vmatpush1.xpose.msra.mxu0 0.0
    %724 = vmatprep.subr.mxu0 0.0
    %725 = vmatpush1.xpose.msra.mxu0 0.0
    %726 = vmatprep.subr.mxu0 0.0
    %727 = vmatpush1.xpose.msra.mxu0 0.0
    %728 = vmatprep.subr.mxu0 0.0
    %729 = vmatpush1.xpose.msra.mxu0 0.0
    %730 = vmatprep.mubr.f32.mxu0 0.0
    %731 = vmatmul.mubr.f32.gmra.mrb[0].mxu0 %v662
    %v732 = vpop.f32.mrb[0].mxu0
    %v733 = vadd.f32 0.0, %v732
    %v734 = vpop.f32.mrb[0].mxu0
    %735 = vdwg.mxu0
    %v736 = vmul.f32 %v733, 0.35355338
    %v737 = vadd.f32 %v736, %v351
    %v738 = vsel %vm492, %v737, -inf
    %739 = vmax.xlane.f32.xlu0 %v738
    %v740 = vpop.xlane.xlu0 %739
    %v741 = vsub.f32 %v737, %v740
    %v742 = vmul.f32 %v741, 1.442695
    %v743 = vpow.pop %v742
    %v744 = vsel %vm492, %v743, 0.0
    %745 = vadd.xlane.f32.xlu0 %v744
    %v746 = vpop.xlane.xlu0 %745
    %v747 = vrcp.pop %v746
    %v748 = vmul.f32 %v743, %v747
    %749 = vrot.lane.b32.xlu0 %v479, 56
    %v750 = vpop.permute.xlu0 %749
    %v753 = vsel %vm492, %v748, 0
    %755 = vmatprep.subr.mxu0 0.0
    %756 = vmatpush1.msra.mxu0 %v750
    %757 = vmatprep.subr.mxu0 0.0
    %758 = vmatpush1.msra.mxu0 0.0
    %759 = vmatprep.subr.mxu0 0.0
    %760 = vmatpush1.msra.mxu0 0.0
    %761 = vmatprep.subr.mxu0 0.0
    %762 = vmatpush1.msra.mxu0 0.0
    %763 = vmatprep.subr.mxu0 0.0
    %764 = vmatpush1.msra.mxu0 0.0
    %765 = vmatprep.subr.mxu0 0.0
    %766 = vmatpush1.msra.mxu0 0.0
    %767 = vmatprep.subr.mxu0 0.0
    %768 = vmatpush1.msra.mxu0 0.0
    %769 = vmatprep.subr.mxu0 0.0
    %770 = vmatpush1.msra.mxu0 0.0
    %771 = vmatprep.subr.mxu0 0.0
    %772 = vmatpush1.msra.mxu0 0.0
    %773 = vmatprep.subr.mxu0 0.0
    %774 = vmatpush1.msra.mxu0 0.0
    %775 = vmatprep.subr.mxu0 0.0
    %776 = vmatpush1.msra.mxu0 0.0
    %777 = vmatprep.subr.mxu0 0.0
    %778 = vmatpush1.msra.mxu0 0.0
    %779 = vmatprep.subr.mxu0 0.0
    %780 = vmatpush1.msra.mxu0 0.0
    %781 = vmatprep.subr.mxu0 0.0
    %782 = vmatpush1.msra.mxu0 0.0
    %783 = vmatprep.subr.mxu0 0.0
    %784 = vmatpush1.msra.mxu0 0.0
    %785 = vmatprep.subr.mxu0 0.0
    %786 = vmatpush1.msra.mxu0 0.0
    %787 = vmatprep.subr.mxu0 0.0
    %788 = vmatpush1.msra.mxu0 0.0
    %789 = vmatprep.subr.mxu0 0.0
    %790 = vmatpush1.msra.mxu0 0.0
    %791 = vmatprep.subr.mxu0 0.0
    %792 = vmatpush1.msra.mxu0 0.0
    %793 = vmatprep.subr.mxu0 0.0
    %794 = vmatpush1.msra.mxu0 0.0
    %795 = vmatprep.subr.mxu0 0.0
    %796 = vmatpush1.msra.mxu0 0.0
    %797 = vmatprep.subr.mxu0 0.0
    %798 = vmatpush1.msra.mxu0 0.0
    %799 = vmatprep.subr.mxu0 0.0
    %800 = vmatpush1.msra.mxu0 0.0
    %801 = vmatprep.subr.mxu0 0.0
    %802 = vmatpush1.msra.mxu0 0.0
    %803 = vmatprep.subr.mxu0 0.0
    %804 = vmatpush1.msra.mxu0 0.0
    %805 = vmatprep.subr.mxu0 0.0
    %806 = vmatpush1.msra.mxu0 0.0
    %807 = vmatprep.subr.mxu0 0.0
    %808 = vmatpush1.msra.mxu0 0.0
    %809 = vmatprep.subr.mxu0 0.0
    %810 = vmatpush1.msra.mxu0 0.0
    %811 = vmatprep.subr.mxu0 0.0
    %812 = vmatpush1.msra.mxu0 0.0
    %813 = vmatprep.subr.mxu0 0.0
    %814 = vmatpush1.msra.mxu0 0.0
    %815 = vmatprep.subr.mxu0 0.0
    %816 = vmatpush1.msra.mxu0 0.0
    %817 = vmatprep.subr.mxu0 0.0
    %818 = vmatpush1.msra.mxu0 0.0
    %819 = vmatprep.mubr.f32.mxu0 0.0
    %820 = vmatmul.mubr.f32.gmra.mrb[0].mxu0 %v753
    %v821 = vpop.f32.mrb[0].mxu0
    %v822 = vadd.f32 0.0, %v821
    %v823 = vpop.f32.mrb[0].mxu0
    %824 = vdwg.mxu0
    %826 = vrot.lane.b32.xlu0 %v822, 8
    %v827 = vpop.permute.xlu0 %826
    %vm829 = vcmask 130112
    %830 = vst.msk [vmem:[#allocation2] sm:$0xff] %vm829, %v827
    %831 = vrot.lane.b32.xlu0 %v487, 112
    %v832 = vpop.permute.xlu0 %831
    %833 = vrot.lane.b32.xlu0 %v479, 80
    %v834 = vpop.permute.xlu0 %833
    %v835 = vsel %vm492, %v832, 0
    %v837 = vsel %vm492, %v834, 0
    %839 = vmatprep.subr.mxu0 0.0
    %840 = vmatpush1.xpose.msra.mxu0 %v837
    %841 = vmatprep.subr.mxu0 0.0
    %842 = vmatpush1.xpose.msra.mxu0 0.0
    %843 = vmatprep.subr.mxu0 0.0
    %844 = vmatpush1.xpose.msra.mxu0 0.0
    %845 = vmatprep.subr.mxu0 0.0
    %846 = vmatpush1.xpose.msra.mxu0 0.0
    %847 = vmatprep.subr.mxu0 0.0
    %848 = vmatpush1.xpose.msra.mxu0 0.0
    %849 = vmatprep.subr.mxu0 0.0
    %850 = vmatpush1.xpose.msra.mxu0 0.0
    %851 = vmatprep.subr.mxu0 0.0
    %852 = vmatpush1.xpose.msra.mxu0 0.0
    %853 = vmatprep.subr.mxu0 0.0
    %854 = vmatpush1.xpose.msra.mxu0 0.0
    %855 = vmatprep.subr.mxu0 0.0
    %856 = vmatpush1.xpose.msra.mxu0 0.0
    %857 = vmatprep.subr.mxu0 0.0
    %858 = vmatpush1.xpose.msra.mxu0 0.0
    %859 = vmatprep.subr.mxu0 0.0
    %860 = vmatpush1.xpose.msra.mxu0 0.0
    %861 = vmatprep.subr.mxu0 0.0
    %862 = vmatpush1.xpose.msra.mxu0 0.0
    %863 = vmatprep.subr.mxu0 0.0
    %864 = vmatpush1.xpose.msra.mxu0 0.0
    %865 = vmatprep.subr.mxu0 0.0
    %866 = vmatpush1.xpose.msra.mxu0 0.0
    %867 = vmatprep.subr.mxu0 0.0
    %868 = vmatpush1.xpose.msra.mxu0 0.0
    %869 = vmatprep.subr.mxu0 0.0
    %870 = vmatpush1.xpose.msra.mxu0 0.0
    %871 = vmatprep.subr.mxu0 0.0
    %872 = vmatpush1.xpose.msra.mxu0 0.0
    %873 = vmatprep.subr.mxu0 0.0
    %874 = vmatpush1.xpose.msra.mxu0 0.0
    %875 = vmatprep.subr.mxu0 0.0
    %876 = vmatpush1.xpose.msra.mxu0 0.0
    %877 = vmatprep.subr.mxu0 0.0
    %878 = vmatpush1.xpose.msra.mxu0 0.0
    %879 = vmatprep.subr.mxu0 0.0
    %880 = vmatpush1.xpose.msra.mxu0 0.0
    %881 = vmatprep.subr.mxu0 0.0
    %882 = vmatpush1.xpose.msra.mxu0 0.0
    %883 = vmatprep.subr.mxu0 0.0
    %884 = vmatpush1.xpose.msra.mxu0 0.0
    %885 = vmatprep.subr.mxu0 0.0
    %886 = vmatpush1.xpose.msra.mxu0 0.0
    %887 = vmatprep.subr.mxu0 0.0
    %888 = vmatpush1.xpose.msra.mxu0 0.0
    %889 = vmatprep.subr.mxu0 0.0
    %890 = vmatpush1.xpose.msra.mxu0 0.0
    %891 = vmatprep.subr.mxu0 0.0
    %892 = vmatpush1.xpose.msra.mxu0 0.0
    %893 = vmatprep.subr.mxu0 0.0
    %894 = vmatpush1.xpose.msra.mxu0 0.0
    %895 = vmatprep.subr.mxu0 0.0
    %896 = vmatpush1.xpose.msra.mxu0 0.0
    %897 = vmatprep.subr.mxu0 0.0
    %898 = vmatpush1.xpose.msra.mxu0 0.0
    %899 = vmatprep.subr.mxu0 0.0
    %900 = vmatpush1.xpose.msra.mxu0 0.0
    %901 = vmatprep.subr.mxu0 0.0
    %902 = vmatpush1.xpose.msra.mxu0 0.0
    %903 = vmatprep.mubr.f32.mxu0 0.0
    %904 = vmatmul.mubr.f32.gmra.mrb[0].mxu0 %v835
    %v905 = vpop.f32.mrb[0].mxu0
    %v906 = vadd.f32 0.0, %v905
    %v907 = vpop.f32.mrb[0].mxu0
    %908 = vdwg.mxu0
    %v909 = vmul.f32 %v906, 0.35355338
    %v910 = vadd.f32 %v909, %v351
    %v911 = vsel %vm492, %v910, -inf
    %912 = vmax.xlane.f32.xlu0 %v911
    %v913 = vpop.xlane.xlu0 %912
    %v914 = vsub.f32 %v910, %v913
    %v915 = vmul.f32 %v914, 1.442695
    %v916 = vpow.pop %v915
    %v917 = vsel %vm492, %v916, 0.0
    %918 = vadd.xlane.f32.xlu0 %v917
    %v919 = vpop.xlane.xlu0 %918
    %v920 = vrcp.pop %v919
    %v921 = vmul.f32 %v916, %v920
    %922 = vrot.lane.b32.xlu0 %v479, 48
    %v923 = vpop.permute.xlu0 %922
    %v926 = vsel %vm492, %v921, 0
    %928 = vmatprep.subr.mxu0 0.0
    %929 = vmatpush1.msra.mxu0 %v923
    %930 = vmatprep.subr.mxu0 0.0
    %931 = vmatpush1.msra.mxu0 0.0
    %932 = vmatprep.subr.mxu0 0.0
    %933 = vmatpush1.msra.mxu0 0.0
    %934 = vmatprep.subr.mxu0 0.0
    %935 = vmatpush1.msra.mxu0 0.0
    %936 = vmatprep.subr.mxu0 0.0
    %937 = vmatpush1.msra.mxu0 0.0
    %938 = vmatprep.subr.mxu0 0.0
    %939 = vmatpush1.msra.mxu0 0.0
    %940 = vmatprep.subr.mxu0 0.0
    %941 = vmatpush1.msra.mxu0 0.0
    %942 = vmatprep.subr.mxu0 0.0
    %943 = vmatpush1.msra.mxu0 0.0
    %944 = vmatprep.subr.mxu0 0.0
    %945 = vmatpush1.msra.mxu0 0.0
    %946 = vmatprep.subr.mxu0 0.0
    %947 = vmatpush1.msra.mxu0 0.0
    %948 = vmatprep.subr.mxu0 0.0
    %949 = vmatpush1.msra.mxu0 0.0
    %950 = vmatprep.subr.mxu0 0.0
    %951 = vmatpush1.msra.mxu0 0.0
    %952 = vmatprep.subr.mxu0 0.0
    %953 = vmatpush1.msra.mxu0 0.0
    %954 = vmatprep.subr.mxu0 0.0
    %955 = vmatpush1.msra.mxu0 0.0
    %956 = vmatprep.subr.mxu0 0.0
    %957 = vmatpush1.msra.mxu0 0.0
    %958 = vmatprep.subr.mxu0 0.0
    %959 = vmatpush1.msra.mxu0 0.0
    %960 = vmatprep.subr.mxu0 0.0
    %961 = vmatpush1.msra.mxu0 0.0
    %962 = vmatprep.subr.mxu0 0.0
    %963 = vmatpush1.msra.mxu0 0.0
    %964 = vmatprep.subr.mxu0 0.0
    %965 = vmatpush1.msra.mxu0 0.0
    %966 = vmatprep.subr.mxu0 0.0
    %967 = vmatpush1.msra.mxu0 0.0
    %968 = vmatprep.subr.mxu0 0.0
    %969 = vmatpush1.msra.mxu0 0.0
    %970 = vmatprep.subr.mxu0 0.0
    %971 = vmatpush1.msra.mxu0 0.0
    %972 = vmatprep.subr.mxu0 0.0
    %973 = vmatpush1.msra.mxu0 0.0
    %974 = vmatprep.subr.mxu0 0.0
    %975 = vmatpush1.msra.mxu0 0.0
    %976 = vmatprep.subr.mxu0 0.0
    %977 = vmatpush1.msra.mxu0 0.0
    %978 = vmatprep.subr.mxu0 0.0
    %979 = vmatpush1.msra.mxu0 0.0
    %980 = vmatprep.subr.mxu0 0.0
    %981 = vmatpush1.msra.mxu0 0.0
    %982 = vmatprep.subr.mxu0 0.0
    %983 = vmatpush1.msra.mxu0 0.0
    %984 = vmatprep.subr.mxu0 0.0
    %985 = vmatpush1.msra.mxu0 0.0
    %986 = vmatprep.subr.mxu0 0.0
    %987 = vmatpush1.msra.mxu0 0.0
    %988 = vmatprep.subr.mxu0 0.0
    %989 = vmatpush1.msra.mxu0 0.0
    %990 = vmatprep.subr.mxu0 0.0
    %991 = vmatpush1.msra.mxu0 0.0
    %992 = vmatprep.mubr.f32.mxu0 0.0
    %993 = vmatmul.mubr.f32.gmra.mrb[0].mxu0 %v926
    %v994 = vpop.f32.mrb[0].mxu0
    %v995 = vadd.f32 0.0, %v994
    %v996 = vpop.f32.mrb[0].mxu0
    %997 = vdwg.mxu0
    %999 = vrot.lane.b32.xlu0 %v995, 16
    %v1000 = vpop.permute.xlu0 %999
    %vm1002 = vcmask 195712
    %1003 = vst.msk [vmem:[#allocation2] sm:$0xff] %vm1002, %v1000
    %1004 = vrot.lane.b32.xlu0 %v487, 104
    %v1005 = vpop.permute.xlu0 %1004
    %1006 = vrot.lane.b32.xlu0 %v479, 72
    %v1007 = vpop.permute.xlu0 %1006
    %v1008 = vsel %vm492, %v1005, 0
    %v1010 = vsel %vm492, %v1007, 0
    %1012 = vmatprep.subr.mxu0 0.0
    %1013 = vmatpush1.xpose.msra.mxu0 %v1010
    %1014 = vmatprep.subr.mxu0 0.0
    %1015 = vmatpush1.xpose.msra.mxu0 0.0
    %1016 = vmatprep.subr.mxu0 0.0
    %1017 = vmatpush1.xpose.msra.mxu0 0.0
    %1018 = vmatprep.subr.mxu0 0.0
    %1019 = vmatpush1.xpose.msra.mxu0 0.0
    %1020 = vmatprep.subr.mxu0 0.0
    %1021 = vmatpush1.xpose.msra.mxu0 0.0
    %1022 = vmatprep.subr.mxu0 0.0
    %1023 = vmatpush1.xpose.msra.mxu0 0.0
    %1024 = vmatprep.subr.mxu0 0.0
    %1025 = vmatpush1.xpose.msra.mxu0 0.0
    %1026 = vmatprep.subr.mxu0 0.0
    %1027 = vmatpush1.xpose.msra.mxu0 0.0
    %1028 = vmatprep.subr.mxu0 0.0
    %1029 = vmatpush1.xpose.msra.mxu0 0.0
    %1030 = vmatprep.subr.mxu0 0.0
    %1031 = vmatpush1.xpose.msra.mxu0 0.0
    %1032 = vmatprep.subr.mxu0 0.0
    %1033 = vmatpush1.xpose.msra.mxu0 0.0
    %1034 = vmatprep.subr.mxu0 0.0
    %1035 = vmatpush1.xpose.msra.mxu0 0.0
    %1036 = vmatprep.subr.mxu0 0.0
    %1037 = vmatpush1.xpose.msra.mxu0 0.0
    %1038 = vmatprep.subr.mxu0 0.0
    %1039 = vmatpush1.xpose.msra.mxu0 0.0
    %1040 = vmatprep.subr.mxu0 0.0
    %1041 = vmatpush1.xpose.msra.mxu0 0.0
    %1042 = vmatprep.subr.mxu0 0.0
    %1043 = vmatpush1.xpose.msra.mxu0 0.0
    %1044 = vmatprep.subr.mxu0 0.0
    %1045 = vmatpush1.xpose.msra.mxu0 0.0
    %1046 = vmatprep.subr.mxu0 0.0
    %1047 = vmatpush1.xpose.msra.mxu0 0.0
    %1048 = vmatprep.subr.mxu0 0.0
    %1049 = vmatpush1.xpose.msra.mxu0 0.0
    %1050 = vmatprep.subr.mxu0 0.0
    %1051 = vmatpush1.xpose.msra.mxu0 0.0
    %1052 = vmatprep.subr.mxu0 0.0
    %1053 = vmatpush1.xpose.msra.mxu0 0.0
    %1054 = vmatprep.subr.mxu0 0.0
    %1055 = vmatpush1.xpose.msra.mxu0 0.0
    %1056 = vmatprep.subr.mxu0 0.0
    %1057 = vmatpush1.xpose.msra.mxu0 0.0
    %1058 = vmatprep.subr.mxu0 0.0
    %1059 = vmatpush1.xpose.msra.mxu0 0.0
    %1060 = vmatprep.subr.mxu0 0.0
    %1061 = vmatpush1.xpose.msra.mxu0 0.0
    %1062 = vmatprep.subr.mxu0 0.0
    %1063 = vmatpush1.xpose.msra.mxu0 0.0
    %1064 = vmatprep.subr.mxu0 0.0
    %1065 = vmatpush1.xpose.msra.mxu0 0.0
    %1066 = vmatprep.subr.mxu0 0.0
    %1067 = vmatpush1.xpose.msra.mxu0 0.0
    %1068 = vmatprep.subr.mxu0 0.0
    %1069 = vmatpush1.xpose.msra.mxu0 0.0
    %1070 = vmatprep.subr.mxu0 0.0
    %1071 = vmatpush1.xpose.msra.mxu0 0.0
    %1072 = vmatprep.subr.mxu0 0.0
    %1073 = vmatpush1.xpose.msra.mxu0 0.0
    %1074 = vmatprep.subr.mxu0 0.0
    %1075 = vmatpush1.xpose.msra.mxu0 0.0
    %1076 = vmatprep.mubr.f32.mxu0 0.0
    %1077 = vmatmul.mubr.f32.gmra.mrb[0].mxu0 %v1008
    %v1078 = vpop.f32.mrb[0].mxu0
    %v1079 = vadd.f32 0.0, %v1078
    %v1080 = vpop.f32.mrb[0].mxu0
    %1081 = vdwg.mxu0
    %v1082 = vmul.f32 %v1079, 0.35355338
    %v1083 = vadd.f32 %v1082, %v351
    %v1084 = vsel %vm492, %v1083, -inf
    %1085 = vmax.xlane.f32.xlu0 %v1084
    %v1086 = vpop.xlane.xlu0 %1085
    %v1087 = vsub.f32 %v1083, %v1086
    %v1088 = vmul.f32 %v1087, 1.442695
    %v1089 = vpow.pop %v1088
    %v1090 = vsel %vm492, %v1089, 0.0
    %1091 = vadd.xlane.f32.xlu0 %v1090
    %v1092 = vpop.xlane.xlu0 %1091
    %v1093 = vrcp.pop %v1092
    %v1094 = vmul.f32 %v1089, %v1093
    %1095 = vrot.lane.b32.xlu0 %v479, 40
    %v1096 = vpop.permute.xlu0 %1095
    %v1099 = vsel %vm492, %v1094, 0
    %1101 = vmatprep.subr.mxu0 0.0
    %1102 = vmatpush1.msra.mxu0 %v1096
    %1103 = vmatprep.subr.mxu0 0.0
    %1104 = vmatpush1.msra.mxu0 0.0
    %1105 = vmatprep.subr.mxu0 0.0
    %1106 = vmatpush1.msra.mxu0 0.0
    %1107 = vmatprep.subr.mxu0 0.0
    %1108 = vmatpush1.msra.mxu0 0.0
    %1109 = vmatprep.subr.mxu0 0.0
    %1110 = vmatpush1.msra.mxu0 0.0
    %1111 = vmatprep.subr.mxu0 0.0
    %1112 = vmatpush1.msra.mxu0 0.0
    %1113 = vmatprep.subr.mxu0 0.0
    %1114 = vmatpush1.msra.mxu0 0.0
    %1115 = vmatprep.subr.mxu0 0.0
    %1116 = vmatpush1.msra.mxu0 0.0
    %1117 = vmatprep.subr.mxu0 0.0
    %1118 = vmatpush1.msra.mxu0 0.0
    %1119 = vmatprep.subr.mxu0 0.0
    %1120 = vmatpush1.msra.mxu0 0.0
    %1121 = vmatprep.subr.mxu0 0.0
    %1122 = vmatpush1.msra.mxu0 0.0
    %1123 = vmatprep.subr.mxu0 0.0
    %1124 = vmatpush1.msra.mxu0 0.0
    %1125 = vmatprep.subr.mxu0 0.0
    %1126 = vmatpush1.msra.mxu0 0.0
    %1127 = vmatprep.subr.mxu0 0.0
    %1128 = vmatpush1.msra.mxu0 0.0
    %1129 = vmatprep.subr.mxu0 0.0
    %1130 = vmatpush1.msra.mxu0 0.0
    %1131 = vmatprep.subr.mxu0 0.0
    %1132 = vmatpush1.msra.mxu0 0.0
    %1133 = vmatprep.subr.mxu0 0.0
    %1134 = vmatpush1.msra.mxu0 0.0
    %1135 = vmatprep.subr.mxu0 0.0
    %1136 = vmatpush1.msra.mxu0 0.0
    %1137 = vmatprep.subr.mxu0 0.0
    %1138 = vmatpush1.msra.mxu0 0.0
    %1139 = vmatprep.subr.mxu0 0.0
    %1140 = vmatpush1.msra.mxu0 0.0
    %1141 = vmatprep.subr.mxu0 0.0
    %1142 = vmatpush1.msra.mxu0 0.0
    %1143 = vmatprep.subr.mxu0 0.0
    %1144 = vmatpush1.msra.mxu0 0.0
    %1145 = vmatprep.subr.mxu0 0.0
    %1146 = vmatpush1.msra.mxu0 0.0
    %1147 = vmatprep.subr.mxu0 0.0
    %1148 = vmatpush1.msra.mxu0 0.0
    %1149 = vmatprep.subr.mxu0 0.0
    %1150 = vmatpush1.msra.mxu0 0.0
    %1151 = vmatprep.subr.mxu0 0.0
    %1152 = vmatpush1.msra.mxu0 0.0
    %1153 = vmatprep.subr.mxu0 0.0
    %1154 = vmatpush1.msra.mxu0 0.0
    %1155 = vmatprep.subr.mxu0 0.0
    %1156 = vmatpush1.msra.mxu0 0.0
    %1157 = vmatprep.subr.mxu0 0.0
    %1158 = vmatpush1.msra.mxu0 0.0
    %1159 = vmatprep.subr.mxu0 0.0
    %1160 = vmatpush1.msra.mxu0 0.0
    %1161 = vmatprep.subr.mxu0 0.0
    %1162 = vmatpush1.msra.mxu0 0.0
    %1163 = vmatprep.subr.mxu0 0.0
    %1164 = vmatpush1.msra.mxu0 0.0
    %1165 = vmatprep.mubr.f32.mxu0 0.0
    %1166 = vmatmul.mubr.f32.gmra.mrb[0].mxu0 %v1099
    %v1167 = vpop.f32.mrb[0].mxu0
    %v1168 = vadd.f32 0.0, %v1167
    %v1169 = vpop.f32.mrb[0].mxu0
    %1170 = vdwg.mxu0
    %1172 = vrot.lane.b32.xlu0 %v1168, 24
    %v1173 = vpop.permute.xlu0 %1172
    %vm1175 = vcmask 261312
    %1176 = vst.msk [vmem:[#allocation2] sm:$0xff] %vm1175, %v1173
    %1178 = vrot.lane.b32.xlu0 %v484, 96
    %v1179 = vpop.permute.xlu0 %1178
    %v1181 = vsel %vm492, %v488, 0
    %v1183 = vsel %vm492, %v1179, 0
    %1185 = vmatprep.subr.mxu0 0.0
    %1186 = vmatpush1.xpose.msra.mxu0 %v1183
    %1187 = vmatprep.subr.mxu0 0.0
    %1188 = vmatpush1.xpose.msra.mxu0 0.0
    %1189 = vmatprep.subr.mxu0 0.0
    %1190 = vmatpush1.xpose.msra.mxu0 0.0
    %1191 = vmatprep.subr.mxu0 0.0
    %1192 = vmatpush1.xpose.msra.mxu0 0.0
    %1193 = vmatprep.subr.mxu0 0.0
    %1194 = vmatpush1.xpose.msra.mxu0 0.0
    %1195 = vmatprep.subr.mxu0 0.0
    %1196 = vmatpush1.xpose.msra.mxu0 0.0
    %1197 = vmatprep.subr.mxu0 0.0
    %1198 = vmatpush1.xpose.msra.mxu0 0.0
    %1199 = vmatprep.subr.mxu0 0.0
    %1200 = vmatpush1.xpose.msra.mxu0 0.0
    %1201 = vmatprep.subr.mxu0 0.0
    %1202 = vmatpush1.xpose.msra.mxu0 0.0
    %1203 = vmatprep.subr.mxu0 0.0
    %1204 = vmatpush1.xpose.msra.mxu0 0.0
    %1205 = vmatprep.subr.mxu0 0.0
    %1206 = vmatpush1.xpose.msra.mxu0 0.0
    %1207 = vmatprep.subr.mxu0 0.0
    %1208 = vmatpush1.xpose.msra.mxu0 0.0
    %1209 = vmatprep.subr.mxu0 0.0
    %1210 = vmatpush1.xpose.msra.mxu0 0.0
    %1211 = vmatprep.subr.mxu0 0.0
    %1212 = vmatpush1.xpose.msra.mxu0 0.0
    %1213 = vmatprep.subr.mxu0 0.0
    %1214 = vmatpush1.xpose.msra.mxu0 0.0
    %1215 = vmatprep.subr.mxu0 0.0
    %1216 = vmatpush1.xpose.msra.mxu0 0.0
    %1217 = vmatprep.subr.mxu0 0.0
    %1218 = vmatpush1.xpose.msra.mxu0 0.0
    %1219 = vmatprep.subr.mxu0 0.0
    %1220 = vmatpush1.xpose.msra.mxu0 0.0
    %1221 = vmatprep.subr.mxu0 0.0
    %1222 = vmatpush1.xpose.msra.mxu0 0.0
    %1223 = vmatprep.subr.mxu0 0.0
    %1224 = vmatpush1.xpose.msra.mxu0 0.0
    %1225 = vmatprep.subr.mxu0 0.0
    %1226 = vmatpush1.xpose.msra.mxu0 0.0
    %1227 = vmatprep.subr.mxu0 0.0
    %1228 = vmatpush1.xpose.msra.mxu0 0.0
    %1229 = vmatprep.subr.mxu0 0.0
    %1230 = vmatpush1.xpose.msra.mxu0 0.0
    %1231 = vmatprep.subr.mxu0 0.0
    %1232 = vmatpush1.xpose.msra.mxu0 0.0
    %1233 = vmatprep.subr.mxu0 0.0
    %1234 = vmatpush1.xpose.msra.mxu0 0.0
    %1235 = vmatprep.subr.mxu0 0.0
    %1236 = vmatpush1.xpose.msra.mxu0 0.0
    %1237 = vmatprep.subr.mxu0 0.0
    %1238 = vmatpush1.xpose.msra.mxu0 0.0
    %1239 = vmatprep.subr.mxu0 0.0
    %1240 = vmatpush1.xpose.msra.mxu0 0.0
    %1241 = vmatprep.subr.mxu0 0.0
    %1242 = vmatpush1.xpose.msra.mxu0 0.0
    %1243 = vmatprep.subr.mxu0 0.0
    %1244 = vmatpush1.xpose.msra.mxu0 0.0
    %1245 = vmatprep.subr.mxu0 0.0
    %1246 = vmatpush1.xpose.msra.mxu0 0.0
    %1247 = vmatprep.subr.mxu0 0.0
    %1248 = vmatpush1.xpose.msra.mxu0 0.0
    %1249 = vmatprep.mubr.f32.mxu0 0.0
    %1250 = vmatmul.mubr.f32.gmra.mrb[0].mxu0 %v1181
    %v1251 = vpop.f32.mrb[0].mxu0
    %v1252 = vadd.f32 0.0, %v1251
    %v1253 = vpop.f32.mrb[0].mxu0
    %1254 = vdwg.mxu0
    %v1255 = vmul.f32 %v1252, 0.35355338
    %v1256 = vadd.f32 %v1255, %v352
    %v1257 = vsel %vm492, %v1256, -inf
    %1258 = vmax.xlane.f32.xlu0 %v1257
    %v1259 = vpop.xlane.xlu0 %1258
    %v1260 = vsub.f32 %v1256, %v1259
    %v1261 = vmul.f32 %v1260, 1.442695
    %v1262 = vpow.pop %v1261
    %v1263 = vsel %vm492, %v1262, 0.0
    %1264 = vadd.xlane.f32.xlu0 %v1263
    %v1265 = vpop.xlane.xlu0 %1264
    %v1266 = vrcp.pop %v1265
    %v1267 = vmul.f32 %v1262, %v1266
    %1268 = vrot.lane.b32.xlu0 %v484, 64
    %v1269 = vpop.permute.xlu0 %1268
    %v1272 = vsel %vm492, %v1267, 0
    %1274 = vmatprep.subr.mxu0 0.0
    %1275 = vmatpush1.msra.mxu0 %v1269
    %1276 = vmatprep.subr.mxu0 0.0
    %1277 = vmatpush1.msra.mxu0 0.0
    %1278 = vmatprep.subr.mxu0 0.0
    %1279 = vmatpush1.msra.mxu0 0.0
    %1280 = vmatprep.subr.mxu0 0.0
    %1281 = vmatpush1.msra.mxu0 0.0
    %1282 = vmatprep.subr.mxu0 0.0
    %1283 = vmatpush1.msra.mxu0 0.0
    %1284 = vmatprep.subr.mxu0 0.0
    %1285 = vmatpush1.msra.mxu0 0.0
    %1286 = vmatprep.subr.mxu0 0.0
    %1287 = vmatpush1.msra.mxu0 0.0
    %1288 = vmatprep.subr.mxu0 0.0
    %1289 = vmatpush1.msra.mxu0 0.0
    %1290 = vmatprep.subr.mxu0 0.0
    %1291 = vmatpush1.msra.mxu0 0.0
    %1292 = vmatprep.subr.mxu0 0.0
    %1293 = vmatpush1.msra.mxu0 0.0
    %1294 = vmatprep.subr.mxu0 0.0
    %1295 = vmatpush1.msra.mxu0 0.0
    %1296 = vmatprep.subr.mxu0 0.0
    %1297 = vmatpush1.msra.mxu0 0.0
    %1298 = vmatprep.subr.mxu0 0.0
    %1299 = vmatpush1.msra.mxu0 0.0
    %1300 = vmatprep.subr.mxu0 0.0
    %1301 = vmatpush1.msra.mxu0 0.0
    %1302 = vmatprep.subr.mxu0 0.0
    %1303 = vmatpush1.msra.mxu0 0.0
    %1304 = vmatprep.subr.mxu0 0.0
    %1305 = vmatpush1.msra.mxu0 0.0
    %1306 = vmatprep.subr.mxu0 0.0
    %1307 = vmatpush1.msra.mxu0 0.0
    %1308 = vmatprep.subr.mxu0 0.0
    %1309 = vmatpush1.msra.mxu0 0.0
    %1310 = vmatprep.subr.mxu0 0.0
    %1311 = vmatpush1.msra.mxu0 0.0
    %1312 = vmatprep.subr.mxu0 0.0
    %1313 = vmatpush1.msra.mxu0 0.0
    %1314 = vmatprep.subr.mxu0 0.0
    %1315 = vmatpush1.msra.mxu0 0.0
    %1316 = vmatprep.subr.mxu0 0.0
    %1317 = vmatpush1.msra.mxu0 0.0
    %1318 = vmatprep.subr.mxu0 0.0
    %1319 = vmatpush1.msra.mxu0 0.0
    %1320 = vmatprep.subr.mxu0 0.0
    %1321 = vmatpush1.msra.mxu0 0.0
    %1322 = vmatprep.subr.mxu0 0.0
    %1323 = vmatpush1.msra.mxu0 0.0
    %1324 = vmatprep.subr.mxu0 0.0
    %1325 = vmatpush1.msra.mxu0 0.0
    %1326 = vmatprep.subr.mxu0 0.0
    %1327 = vmatpush1.msra.mxu0 0.0
    %1328 = vmatprep.subr.mxu0 0.0
    %1329 = vmatpush1.msra.mxu0 0.0
    %1330 = vmatprep.subr.mxu0 0.0
    %1331 = vmatpush1.msra.mxu0 0.0
    %1332 = vmatprep.subr.mxu0 0.0
    %1333 = vmatpush1.msra.mxu0 0.0
    %1334 = vmatprep.subr.mxu0 0.0
    %1335 = vmatpush1.msra.mxu0 0.0
    %1336 = vmatprep.subr.mxu0 0.0
    %1337 = vmatpush1.msra.mxu0 0.0
    %1338 = vmatprep.mubr.f32.mxu0 0.0
    %1339 = vmatmul.mubr.f32.gmra.mrb[0].mxu0 %v1272
    %v1340 = vpop.f32.mrb[0].mxu0
    %v1341 = vadd.f32 0.0, %v1340
    %v1342 = vpop.f32.mrb[0].mxu0
    %1343 = vdwg.mxu0
    %1344 = vst.msk [vmem:[#allocation2 + $0x8] sm:$0xff] %vm492, %v1341
    %1345 = vrot.lane.b32.xlu0 %v488, 120
    %v1346 = vpop.permute.xlu0 %1345
    %1347 = vrot.lane.b32.xlu0 %v484, 88
    %v1348 = vpop.permute.xlu0 %1347
    %v1349 = vsel %vm492, %v1346, 0
    %v1351 = vsel %vm492, %v1348, 0
    %1353 = vmatprep.subr.mxu0 0.0
    %1354 = vmatpush1.xpose.msra.mxu0 %v1351
    %1355 = vmatprep.subr.mxu0 0.0
    %1356 = vmatpush1.xpose.msra.mxu0 0.0
    %1357 = vmatprep.subr.mxu0 0.0
    %1358 = vmatpush1.xpose.msra.mxu0 0.0
    %1359 = vmatprep.subr.mxu0 0.0
    %1360 = vmatpush1.xpose.msra.mxu0 0.0
    %1361 = vmatprep.subr.mxu0 0.0
    %1362 = vmatpush1.xpose.msra.mxu0 0.0
    %1363 = vmatprep.subr.mxu0 0.0
    %1364 = vmatpush1.xpose.msra.mxu0 0.0
    %1365 = vmatprep.subr.mxu0 0.0
    %1366 = vmatpush1.xpose.msra.mxu0 0.0
    %1367 = vmatprep.subr.mxu0 0.0
    %1368 = vmatpush1.xpose.msra.mxu0 0.0
    %1369 = vmatprep.subr.mxu0 0.0
    %1370 = vmatpush1.xpose.msra.mxu0 0.0
    %1371 = vmatprep.subr.mxu0 0.0
    %1372 = vmatpush1.xpose.msra.mxu0 0.0
    %1373 = vmatprep.subr.mxu0 0.0
    %1374 = vmatpush1.xpose.msra.mxu0 0.0
    %1375 = vmatprep.subr.mxu0 0.0
    %1376 = vmatpush1.xpose.msra.mxu0 0.0
    %1377 = vmatprep.subr.mxu0 0.0
    %1378 = vmatpush1.xpose.msra.mxu0 0.0
    %1379 = vmatprep.subr.mxu0 0.0
    %1380 = vmatpush1.xpose.msra.mxu0 0.0
    %1381 = vmatprep.subr.mxu0 0.0
    %1382 = vmatpush1.xpose.msra.mxu0 0.0
    %1383 = vmatprep.subr.mxu0 0.0
    %1384 = vmatpush1.xpose.msra.mxu0 0.0
    %1385 = vmatprep.subr.mxu0 0.0
    %1386 = vmatpush1.xpose.msra.mxu0 0.0
    %1387 = vmatprep.subr.mxu0 0.0
    %1388 = vmatpush1.xpose.msra.mxu0 0.0
    %1389 = vmatprep.subr.mxu0 0.0
    %1390 = vmatpush1.xpose.msra.mxu0 0.0
    %1391 = vmatprep.subr.mxu0 0.0
    %1392 = vmatpush1.xpose.msra.mxu0 0.0
    %1393 = vmatprep.subr.mxu0 0.0
    %1394 = vmatpush1.xpose.msra.mxu0 0.0
    %1395 = vmatprep.subr.mxu0 0.0
    %1396 = vmatpush1.xpose.msra.mxu0 0.0
    %1397 = vmatprep.subr.mxu0 0.0
    %1398 = vmatpush1.xpose.msra.mxu0 0.0
    %1399 = vmatprep.subr.mxu0 0.0
    %1400 = vmatpush1.xpose.msra.mxu0 0.0
    %1401 = vmatprep.subr.mxu0 0.0
    %1402 = vmatpush1.xpose.msra.mxu0 0.0
    %1403 = vmatprep.subr.mxu0 0.0
    %1404 = vmatpush1.xpose.msra.mxu0 0.0
    %1405 = vmatprep.subr.mxu0 0.0
    %1406 = vmatpush1.xpose.msra.mxu0 0.0
    %1407 = vmatprep.subr.mxu0 0.0
    %1408 = vmatpush1.xpose.msra.mxu0 0.0
    %1409 = vmatprep.subr.mxu0 0.0
    %1410 = vmatpush1.xpose.msra.mxu0 0.0
    %1411 = vmatprep.subr.mxu0 0.0
    %1412 = vmatpush1.xpose.msra.mxu0 0.0
    %1413 = vmatprep.subr.mxu0 0.0
    %1414 = vmatpush1.xpose.msra.mxu0 0.0
    %1415 = vmatprep.subr.mxu0 0.0
    %1416 = vmatpush1.xpose.msra.mxu0 0.0
    %1417 = vmatprep.mubr.f32.mxu0 0.0
    %1418 = vmatmul.mubr.f32.gmra.mrb[0].mxu0 %v1349
    %v1419 = vpop.f32.mrb[0].mxu0
    %v1420 = vadd.f32 0.0, %v1419
    %v1421 = vpop.f32.mrb[0].mxu0
    %1422 = vdwg.mxu0
    %v1423 = vmul.f32 %v1420, 0.35355338
    %v1424 = vadd.f32 %v1423, %v352
    %v1425 = vsel %vm492, %v1424, -inf
    %1426 = vmax.xlane.f32.xlu0 %v1425
    %v1427 = vpop.xlane.xlu0 %1426
    %v1428 = vsub.f32 %v1424, %v1427
    %v1429 = vmul.f32 %v1428, 1.442695
    %v1430 = vpow.pop %v1429
    %v1431 = vsel %vm492, %v1430, 0.0
    %1432 = vadd.xlane.f32.xlu0 %v1431
    %v1433 = vpop.xlane.xlu0 %1432
    %v1434 = vrcp.pop %v1433
    %v1435 = vmul.f32 %v1430, %v1434
    %1436 = vrot.lane.b32.xlu0 %v484, 56
    %v1437 = vpop.permute.xlu0 %1436
    %v1440 = vsel %vm492, %v1435, 0
    %1442 = vmatprep.subr.mxu0 0.0
    %1443 = vmatpush1.msra.mxu0 %v1437
    %1444 = vmatprep.subr.mxu0 0.0
    %1445 = vmatpush1.msra.mxu0 0.0
    %1446 = vmatprep.subr.mxu0 0.0
    %1447 = vmatpush1.msra.mxu0 0.0
    %1448 = vmatprep.subr.mxu0 0.0
    %1449 = vmatpush1.msra.mxu0 0.0
    %1450 = vmatprep.subr.mxu0 0.0
    %1451 = vmatpush1.msra.mxu0 0.0
    %1452 = vmatprep.subr.mxu0 0.0
    %1453 = vmatpush1.msra.mxu0 0.0
    %1454 = vmatprep.subr.mxu0 0.0
    %1455 = vmatpush1.msra.mxu0 0.0
    %1456 = vmatprep.subr.mxu0 0.0
    %1457 = vmatpush1.msra.mxu0 0.0
    %1458 = vmatprep.subr.mxu0 0.0
    %1459 = vmatpush1.msra.mxu0 0.0
    %1460 = vmatprep.subr.mxu0 0.0
    %1461 = vmatpush1.msra.mxu0 0.0
    %1462 = vmatprep.subr.mxu0 0.0
    %1463 = vmatpush1.msra.mxu0 0.0
    %1464 = vmatprep.subr.mxu0 0.0
    %1465 = vmatpush1.msra.mxu0 0.0
    %1466 = vmatprep.subr.mxu0 0.0
    %1467 = vmatpush1.msra.mxu0 0.0
    %1468 = vmatprep.subr.mxu0 0.0
    %1469 = vmatpush1.msra.mxu0 0.0
    %1470 = vmatprep.subr.mxu0 0.0
    %1471 = vmatpush1.msra.mxu0 0.0
    %1472 = vmatprep.subr.mxu0 0.0
    %1473 = vmatpush1.msra.mxu0 0.0
    %1474 = vmatprep.subr.mxu0 0.0
    %1475 = vmatpush1.msra.mxu0 0.0
    %1476 = vmatprep.subr.mxu0 0.0
    %1477 = vmatpush1.msra.mxu0 0.0
    %1478 = vmatprep.subr.mxu0 0.0
    %1479 = vmatpush1.msra.mxu0 0.0
    %1480 = vmatprep.subr.mxu0 0.0
    %1481 = vmatpush1.msra.mxu0 0.0
    %1482 = vmatprep.subr.mxu0 0.0
    %1483 = vmatpush1.msra.mxu0 0.0
    %1484 = vmatprep.subr.mxu0 0.0
    %1485 = vmatpush1.msra.mxu0 0.0
    %1486 = vmatprep.subr.mxu0 0.0
    %1487 = vmatpush1.msra.mxu0 0.0
    %1488 = vmatprep.subr.mxu0 0.0
    %1489 = vmatpush1.msra.mxu0 0.0
    %1490 = vmatprep.subr.mxu0 0.0
    %1491 = vmatpush1.msra.mxu0 0.0
    %1492 = vmatprep.subr.mxu0 0.0
    %1493 = vmatpush1.msra.mxu0 0.0
    %1494 = vmatprep.subr.mxu0 0.0
    %1495 = vmatpush1.msra.mxu0 0.0
    %1496 = vmatprep.subr.mxu0 0.0
    %1497 = vmatpush1.msra.mxu0 0.0
    %1498 = vmatprep.subr.mxu0 0.0
    %1499 = vmatpush1.msra.mxu0 0.0
    %1500 = vmatprep.subr.mxu0 0.0
    %1501 = vmatpush1.msra.mxu0 0.0
    %1502 = vmatprep.subr.mxu0 0.0
    %1503 = vmatpush1.msra.mxu0 0.0
    %1504 = vmatprep.subr.mxu0 0.0
    %1505 = vmatpush1.msra.mxu0 0.0
    %1506 = vmatprep.mubr.f32.mxu0 0.0
    %1507 = vmatmul.mubr.f32.gmra.mrb[0].mxu0 %v1440
    %v1508 = vpop.f32.mrb[0].mxu0
    %v1509 = vadd.f32 0.0, %v1508
    %v1510 = vpop.f32.mrb[0].mxu0
    %1511 = vdwg.mxu0
    %1513 = vrot.lane.b32.xlu0 %v1509, 8
    %v1514 = vpop.permute.xlu0 %1513
    %1516 = vst.msk [vmem:[#allocation2 + $0x8] sm:$0xff] %vm829, %v1514
    %1517 = vrot.lane.b32.xlu0 %v488, 112
    %v1518 = vpop.permute.xlu0 %1517
    %1519 = vrot.lane.b32.xlu0 %v484, 80
    %v1520 = vpop.permute.xlu0 %1519
    %v1521 = vsel %vm492, %v1518, 0
    %v1523 = vsel %vm492, %v1520, 0
    %1525 = vmatprep.subr.mxu0 0.0
    %1526 = vmatpush1.xpose.msra.mxu0 %v1523
    %1527 = vmatprep.subr.mxu0 0.0
    %1528 = vmatpush1.xpose.msra.mxu0 0.0
    %1529 = vmatprep.subr.mxu0 0.0
    %1530 = vmatpush1.xpose.msra.mxu0 0.0
    %1531 = vmatprep.subr.mxu0 0.0
    %1532 = vmatpush1.xpose.msra.mxu0 0.0
    %1533 = vmatprep.subr.mxu0 0.0
    %1534 = vmatpush1.xpose.msra.mxu0 0.0
    %1535 = vmatprep.subr.mxu0 0.0
    %1536 = vmatpush1.xpose.msra.mxu0 0.0
    %1537 = vmatprep.subr.mxu0 0.0
    %1538 = vmatpush1.xpose.msra.mxu0 0.0
    %1539 = vmatprep.subr.mxu0 0.0
    %1540 = vmatpush1.xpose.msra.mxu0 0.0
    %1541 = vmatprep.subr.mxu0 0.0
    %1542 = vmatpush1.xpose.msra.mxu0 0.0
    %1543 = vmatprep.subr.mxu0 0.0
    %1544 = vmatpush1.xpose.msra.mxu0 0.0
    %1545 = vmatprep.subr.mxu0 0.0
    %1546 = vmatpush1.xpose.msra.mxu0 0.0
    %1547 = vmatprep.subr.mxu0 0.0
    %1548 = vmatpush1.xpose.msra.mxu0 0.0
    %1549 = vmatprep.subr.mxu0 0.0
    %1550 = vmatpush1.xpose.msra.mxu0 0.0
    %1551 = vmatprep.subr.mxu0 0.0
    %1552 = vmatpush1.xpose.msra.mxu0 0.0
    %1553 = vmatprep.subr.mxu0 0.0
    %1554 = vmatpush1.xpose.msra.mxu0 0.0
    %1555 = vmatprep.subr.mxu0 0.0
    %1556 = vmatpush1.xpose.msra.mxu0 0.0
    %1557 = vmatprep.subr.mxu0 0.0
    %1558 = vmatpush1.xpose.msra.mxu0 0.0
    %1559 = vmatprep.subr.mxu0 0.0
    %1560 = vmatpush1.xpose.msra.mxu0 0.0
    %1561 = vmatprep.subr.mxu0 0.0
    %1562 = vmatpush1.xpose.msra.mxu0 0.0
    %1563 = vmatprep.subr.mxu0 0.0
    %1564 = vmatpush1.xpose.msra.mxu0 0.0
    %1565 = vmatprep.subr.mxu0 0.0
    %1566 = vmatpush1.xpose.msra.mxu0 0.0
    %1567 = vmatprep.subr.mxu0 0.0
    %1568 = vmatpush1.xpose.msra.mxu0 0.0
    %1569 = vmatprep.subr.mxu0 0.0
    %1570 = vmatpush1.xpose.msra.mxu0 0.0
    %1571 = vmatprep.subr.mxu0 0.0
    %1572 = vmatpush1.xpose.msra.mxu0 0.0
    %1573 = vmatprep.subr.mxu0 0.0
    %1574 = vmatpush1.xpose.msra.mxu0 0.0
    %1575 = vmatprep.subr.mxu0 0.0
    %1576 = vmatpush1.xpose.msra.mxu0 0.0
    %1577 = vmatprep.subr.mxu0 0.0
    %1578 = vmatpush1.xpose.msra.mxu0 0.0
    %1579 = vmatprep.subr.mxu0 0.0
    %1580 = vmatpush1.xpose.msra.mxu0 0.0
    %1581 = vmatprep.subr.mxu0 0.0
    %1582 = vmatpush1.xpose.msra.mxu0 0.0
    %1583 = vmatprep.subr.mxu0 0.0
    %1584 = vmatpush1.xpose.msra.mxu0 0.0
    %1585 = vmatprep.subr.mxu0 0.0
    %1586 = vmatpush1.xpose.msra.mxu0 0.0
    %1587 = vmatprep.subr.mxu0 0.0
    %1588 = vmatpush1.xpose.msra.mxu0 0.0
    %1589 = vmatprep.mubr.f32.mxu0 0.0
    %1590 = vmatmul.mubr.f32.gmra.mrb[0].mxu0 %v1521
    %v1591 = vpop.f32.mrb[0].mxu0
    %v1592 = vadd.f32 0.0, %v1591
    %v1593 = vpop.f32.mrb[0].mxu0
    %1594 = vdwg.mxu0
    %v1595 = vmul.f32 %v1592, 0.35355338
    %v1596 = vadd.f32 %v1595, %v352
    %v1597 = vsel %vm492, %v1596, -inf
    %1598 = vmax.xlane.f32.xlu0 %v1597
    %v1599 = vpop.xlane.xlu0 %1598
    %v1600 = vsub.f32 %v1596, %v1599
    %v1601 = vmul.f32 %v1600, 1.442695
    %v1602 = vpow.pop %v1601
    %v1603 = vsel %vm492, %v1602, 0.0
    %1604 = vadd.xlane.f32.xlu0 %v1603
    %v1605 = vpop.xlane.xlu0 %1604
    %v1606 = vrcp.pop %v1605
    %v1607 = vmul.f32 %v1602, %v1606
    %1608 = vrot.lane.b32.xlu0 %v484, 48
    %v1609 = vpop.permute.xlu0 %1608
    %v1612 = vsel %vm492, %v1607, 0
    %1614 = vmatprep.subr.mxu0 0.0
    %1615 = vmatpush1.msra.mxu0 %v1609
    %1616 = vmatprep.subr.mxu0 0.0
    %1617 = vmatpush1.msra.mxu0 0.0
    %1618 = vmatprep.subr.mxu0 0.0
    %1619 = vmatpush1.msra.mxu0 0.0
    %1620 = vmatprep.subr.mxu0 0.0
    %1621 = vmatpush1.msra.mxu0 0.0
    %1622 = vmatprep.subr.mxu0 0.0
    %1623 = vmatpush1.msra.mxu0 0.0
    %1624 = vmatprep.subr.mxu0 0.0
    %1625 = vmatpush1.msra.mxu0 0.0
    %1626 = vmatprep.subr.mxu0 0.0
    %1627 = vmatpush1.msra.mxu0 0.0
    %1628 = vmatprep.subr.mxu0 0.0
    %1629 = vmatpush1.msra.mxu0 0.0
    %1630 = vmatprep.subr.mxu0 0.0
    %1631 = vmatpush1.msra.mxu0 0.0
    %1632 = vmatprep.subr.mxu0 0.0
    %1633 = vmatpush1.msra.mxu0 0.0
    %1634 = vmatprep.subr.mxu0 0.0
    %1635 = vmatpush1.msra.mxu0 0.0
    %1636 = vmatprep.subr.mxu0 0.0
    %1637 = vmatpush1.msra.mxu0 0.0
    %1638 = vmatprep.subr.mxu0 0.0
    %1639 = vmatpush1.msra.mxu0 0.0
    %1640 = vmatprep.subr.mxu0 0.0
    %1641 = vmatpush1.msra.mxu0 0.0
    %1642 = vmatprep.subr.mxu0 0.0
    %1643 = vmatpush1.msra.mxu0 0.0
    %1644 = vmatprep.subr.mxu0 0.0
    %1645 = vmatpush1.msra.mxu0 0.0
    %1646 = vmatprep.subr.mxu0 0.0
    %1647 = vmatpush1.msra.mxu0 0.0
    %1648 = vmatprep.subr.mxu0 0.0
    %1649 = vmatpush1.msra.mxu0 0.0
    %1650 = vmatprep.subr.mxu0 0.0
    %1651 = vmatpush1.msra.mxu0 0.0
    %1652 = vmatprep.subr.mxu0 0.0
    %1653 = vmatpush1.msra.mxu0 0.0
    %1654 = vmatprep.subr.mxu0 0.0
    %1655 = vmatpush1.msra.mxu0 0.0
    %1656 = vmatprep.subr.mxu0 0.0
    %1657 = vmatpush1.msra.mxu0 0.0
    %1658 = vmatprep.subr.mxu0 0.0
    %1659 = vmatpush1.msra.mxu0 0.0
    %1660 = vmatprep.subr.mxu0 0.0
    %1661 = vmatpush1.msra.mxu0 0.0
    %1662 = vmatprep.subr.mxu0 0.0
    %1663 = vmatpush1.msra.mxu0 0.0
    %1664 = vmatprep.subr.mxu0 0.0
    %1665 = vmatpush1.msra.mxu0 0.0
    %1666 = vmatprep.subr.mxu0 0.0
    %1667 = vmatpush1.msra.mxu0 0.0
    %1668 = vmatprep.subr.mxu0 0.0
    %1669 = vmatpush1.msra.mxu0 0.0
    %1670 = vmatprep.subr.mxu0 0.0
    %1671 = vmatpush1.msra.mxu0 0.0
    %1672 = vmatprep.subr.mxu0 0.0
    %1673 = vmatpush1.msra.mxu0 0.0
    %1674 = vmatprep.subr.mxu0 0.0
    %1675 = vmatpush1.msra.mxu0 0.0
    %1676 = vmatprep.subr.mxu0 0.0
    %1677 = vmatpush1.msra.mxu0 0.0
    %1678 = vmatprep.mubr.f32.mxu0 0.0
    %1679 = vmatmul.mubr.f32.gmra.mrb[0].mxu0 %v1612
    %v1680 = vpop.f32.mrb[0].mxu0
    %v1681 = vadd.f32 0.0, %v1680
    %v1682 = vpop.f32.mrb[0].mxu0
    %1683 = vdwg.mxu0
    %1685 = vrot.lane.b32.xlu0 %v1681, 16
    %v1686 = vpop.permute.xlu0 %1685
    %1688 = vst.msk [vmem:[#allocation2 + $0x8] sm:$0xff] %vm1002, %v1686
    %1689 = vrot.lane.b32.xlu0 %v488, 104
    %v1690 = vpop.permute.xlu0 %1689
    %1691 = vrot.lane.b32.xlu0 %v484, 72
    %v1692 = vpop.permute.xlu0 %1691
    %v1693 = vsel %vm492, %v1690, 0
    %v1695 = vsel %vm492, %v1692, 0
    %1697 = vmatprep.subr.mxu0 0.0
    %1698 = vmatpush1.xpose.msra.mxu0 %v1695
    %1699 = vmatprep.subr.mxu0 0.0
    %1700 = vmatpush1.xpose.msra.mxu0 0.0
    %1701 = vmatprep.subr.mxu0 0.0
    %1702 = vmatpush1.xpose.msra.mxu0 0.0
    %1703 = vmatprep.subr.mxu0 0.0
    %1704 = vmatpush1.xpose.msra.mxu0 0.0
    %1705 = vmatprep.subr.mxu0 0.0
    %1706 = vmatpush1.xpose.msra.mxu0 0.0
    %1707 = vmatprep.subr.mxu0 0.0
    %1708 = vmatpush1.xpose.msra.mxu0 0.0
    %1709 = vmatprep.subr.mxu0 0.0
    %1710 = vmatpush1.xpose.msra.mxu0 0.0
    %1711 = vmatprep.subr.mxu0 0.0
    %1712 = vmatpush1.xpose.msra.mxu0 0.0
    %1713 = vmatprep.subr.mxu0 0.0
    %1714 = vmatpush1.xpose.msra.mxu0 0.0
    %1715 = vmatprep.subr.mxu0 0.0
    %1716 = vmatpush1.xpose.msra.mxu0 0.0
    %1717 = vmatprep.subr.mxu0 0.0
    %1718 = vmatpush1.xpose.msra.mxu0 0.0
    %1719 = vmatprep.subr.mxu0 0.0
    %1720 = vmatpush1.xpose.msra.mxu0 0.0
    %1721 = vmatprep.subr.mxu0 0.0
    %1722 = vmatpush1.xpose.msra.mxu0 0.0
    %1723 = vmatprep.subr.mxu0 0.0
    %1724 = vmatpush1.xpose.msra.mxu0 0.0
    %1725 = vmatprep.subr.mxu0 0.0
    %1726 = vmatpush1.xpose.msra.mxu0 0.0
    %1727 = vmatprep.subr.mxu0 0.0
    %1728 = vmatpush1.xpose.msra.mxu0 0.0
    %1729 = vmatprep.subr.mxu0 0.0
    %1730 = vmatpush1.xpose.msra.mxu0 0.0
    %1731 = vmatprep.subr.mxu0 0.0
    %1732 = vmatpush1.xpose.msra.mxu0 0.0
    %1733 = vmatprep.subr.mxu0 0.0
    %1734 = vmatpush1.xpose.msra.mxu0 0.0
    %1735 = vmatprep.subr.mxu0 0.0
    %1736 = vmatpush1.xpose.msra.mxu0 0.0
    %1737 = vmatprep.subr.mxu0 0.0
    %1738 = vmatpush1.xpose.msra.mxu0 0.0
    %1739 = vmatprep.subr.mxu0 0.0
    %1740 = vmatpush1.xpose.msra.mxu0 0.0
    %1741 = vmatprep.subr.mxu0 0.0
    %1742 = vmatpush1.xpose.msra.mxu0 0.0
    %1743 = vmatprep.subr.mxu0 0.0
    %1744 = vmatpush1.xpose.msra.mxu0 0.0
    %1745 = vmatprep.subr.mxu0 0.0
    %1746 = vmatpush1.xpose.msra.mxu0 0.0
    %1747 = vmatprep.subr.mxu0 0.0
    %1748 = vmatpush1.xpose.msra.mxu0 0.0
    %1749 = vmatprep.subr.mxu0 0.0
    %1750 = vmatpush1.xpose.msra.mxu0 0.0
    %1751 = vmatprep.subr.mxu0 0.0
    %1752 = vmatpush1.xpose.msra.mxu0 0.0
    %1753 = vmatprep.subr.mxu0 0.0
    %1754 = vmatpush1.xpose.msra.mxu0 0.0
    %1755 = vmatprep.subr.mxu0 0.0
    %1756 = vmatpush1.xpose.msra.mxu0 0.0
    %1757 = vmatprep.subr.mxu0 0.0
    %1758 = vmatpush1.xpose.msra.mxu0 0.0
    %1759 = vmatprep.subr.mxu0 0.0
    %1760 = vmatpush1.xpose.msra.mxu0 0.0
    %1761 = vmatprep.mubr.f32.mxu0 0.0
    %1762 = vmatmul.mubr.f32.gmra.mrb[0].mxu0 %v1693
    %v1763 = vpop.f32.mrb[0].mxu0
    %v1764 = vadd.f32 0.0, %v1763
    %v1765 = vpop.f32.mrb[0].mxu0
    %1766 = vdwg.mxu0
    %v1767 = vmul.f32 %v1764, 0.35355338
    %v1768 = vadd.f32 %v1767, %v352
    %v1769 = vsel %vm492, %v1768, -inf
    %1770 = vmax.xlane.f32.xlu0 %v1769
    %v1771 = vpop.xlane.xlu0 %1770
    %v1772 = vsub.f32 %v1768, %v1771
    %v1773 = vmul.f32 %v1772, 1.442695
    %v1774 = vpow.pop %v1773
    %v1775 = vsel %vm492, %v1774, 0.0
    %1776 = vadd.xlane.f32.xlu0 %v1775
    %v1777 = vpop.xlane.xlu0 %1776
    %v1778 = vrcp.pop %v1777
    %v1779 = vmul.f32 %v1774, %v1778
    %1780 = vrot.lane.b32.xlu0 %v484, 40
    %v1781 = vpop.permute.xlu0 %1780
    %v1784 = vsel %vm492, %v1779, 0
    %1786 = vmatprep.subr.mxu0 0.0
    %1787 = vmatpush1.msra.mxu0 %v1781
    %1788 = vmatprep.subr.mxu0 0.0
    %1789 = vmatpush1.msra.mxu0 0.0
    %1790 = vmatprep.subr.mxu0 0.0
    %1791 = vmatpush1.msra.mxu0 0.0
    %1792 = vmatprep.subr.mxu0 0.0
    %1793 = vmatpush1.msra.mxu0 0.0
    %1794 = vmatprep.subr.mxu0 0.0
    %1795 = vmatpush1.msra.mxu0 0.0
    %1796 = vmatprep.subr.mxu0 0.0
    %1797 = vmatpush1.msra.mxu0 0.0
    %1798 = vmatprep.subr.mxu0 0.0
    %1799 = vmatpush1.msra.mxu0 0.0
    %1800 = vmatprep.subr.mxu0 0.0
    %1801 = vmatpush1.msra.mxu0 0.0
    %1802 = vmatprep.subr.mxu0 0.0
    %1803 = vmatpush1.msra.mxu0 0.0
    %1804 = vmatprep.subr.mxu0 0.0
    %1805 = vmatpush1.msra.mxu0 0.0
    %1806 = vmatprep.subr.mxu0 0.0
    %1807 = vmatpush1.msra.mxu0 0.0
    %1808 = vmatprep.subr.mxu0 0.0
    %1809 = vmatpush1.msra.mxu0 0.0
    %1810 = vmatprep.subr.mxu0 0.0
    %1811 = vmatpush1.msra.mxu0 0.0
    %1812 = vmatprep.subr.mxu0 0.0
    %1813 = vmatpush1.msra.mxu0 0.0
    %1814 = vmatprep.subr.mxu0 0.0
    %1815 = vmatpush1.msra.mxu0 0.0
    %1816 = vmatprep.subr.mxu0 0.0
    %1817 = vmatpush1.msra.mxu0 0.0
    %1818 = vmatprep.subr.mxu0 0.0
    %1819 = vmatpush1.msra.mxu0 0.0
    %1820 = vmatprep.subr.mxu0 0.0
    %1821 = vmatpush1.msra.mxu0 0.0
    %1822 = vmatprep.subr.mxu0 0.0
    %1823 = vmatpush1.msra.mxu0 0.0
    %1824 = vmatprep.subr.mxu0 0.0
    %1825 = vmatpush1.msra.mxu0 0.0
    %1826 = vmatprep.subr.mxu0 0.0
    %1827 = vmatpush1.msra.mxu0 0.0
    %1828 = vmatprep.subr.mxu0 0.0
    %1829 = vmatpush1.msra.mxu0 0.0
    %1830 = vmatprep.subr.mxu0 0.0
    %1831 = vmatpush1.msra.mxu0 0.0
    %1832 = vmatprep.subr.mxu0 0.0
    %1833 = vmatpush1.msra.mxu0 0.0
    %1834 = vmatprep.subr.mxu0 0.0
    %1835 = vmatpush1.msra.mxu0 0.0
    %1836 = vmatprep.subr.mxu0 0.0
    %1837 = vmatpush1.msra.mxu0 0.0
    %1838 = vmatprep.subr.mxu0 0.0
    %1839 = vmatpush1.msra.mxu0 0.0
    %1840 = vmatprep.subr.mxu0 0.0
    %1841 = vmatpush1.msra.mxu0 0.0
    %1842 = vmatprep.subr.mxu0 0.0
    %1843 = vmatpush1.msra.mxu0 0.0
    %1844 = vmatprep.subr.mxu0 0.0
    %1845 = vmatpush1.msra.mxu0 0.0
    %1846 = vmatprep.subr.mxu0 0.0
    %1847 = vmatpush1.msra.mxu0 0.0
    %1848 = vmatprep.subr.mxu0 0.0
    %1849 = vmatpush1.msra.mxu0 0.0
    %1850 = vmatprep.mubr.f32.mxu0 0.0
    %1851 = vmatmul.mubr.f32.gmra.mrb[0].mxu0 %v1784
    %v1852 = vpop.f32.mrb[0].mxu0
    %v1853 = vadd.f32 0.0, %v1852
    %v1854 = vpop.f32.mrb[0].mxu0
    %1855 = vdwg.mxu0
    %1857 = vrot.lane.b32.xlu0 %v1853, 24
    %v1858 = vpop.permute.xlu0 %1857
    %1860 = vst.msk [vmem:[#allocation2 + $0x8] sm:$0xff] %vm1175, %v1858
    %v1861 = vld [vmem:[#allocation2] sm:$0xff]
    %v1862 = vld [vmem:[#allocation2 + $0x8] sm:$0xff]
    %v1863 = vadd.f32 %v404, %v1861
    %v1864 = vadd.f32 %v405, %v1862
    %v1865 = vsel %vm374, %v1863, 0.0
    %1866 = vadd.xlane.f32.xlu0 %v1865
    %v1867 = vpop.xlane.xlu0 %1866
    %v1868 = vsel %vm374, %v1864, 0.0
    %1869 = vadd.xlane.f32.xlu0 %v1868
    %v1870 = vpop.xlane.xlu0 %1869
    %v1871 = vmul.f32 %v1867, %v381
    %v1872 = vmul.f32 %v1870, %v381
    %v1873 = vsub.f32 %v1863, %v1871
    %v1874 = vsub.f32 %v1864, %v1872
    %v1875 = vmul.f32 %v1873, %v1873
    %v1876 = vmul.f32 %v1874, %v1874
    %v1877 = vsel %vm374, %v1875, 0.0
    %1878 = vadd.xlane.f32.xlu0 %v1877
    %v1879 = vpop.xlane.xlu0 %1878
    %v1880 = vsel %vm374, %v1876, 0.0
    %1881 = vadd.xlane.f32.xlu0 %v1880
    %v1882 = vpop.xlane.xlu0 %1881
    %v1883 = vmul.f32 %v1879, %v381
    %v1884 = vmul.f32 %v1882, %v381
    %v1885 = vadd.f32 %v1883, 1e-05
    %v1886 = vadd.f32 %v1884, 1e-05
    %v1887 = vrsqrt.pop %v1885
    %v1888 = vrsqrt.pop %v1886
    %v1889 = vmul.f32 %v1873, %v1887
    %v1890 = vmul.f32 %v1874, %v1888
    %v1891 = vmul.f32 %v1889, %v369
    %v1892 = vmul.f32 %v1890, %v369
    %v1893 = vadd.f32 %v1891, %v373
    %v1894 = vadd.f32 %v1892, %v373
    %v1895 = vlaneseq
    %v1896 = vshrl.u32 %v1895, 7
    %v1897 = vsub.s32 2, %v1896
    %v1898 = vrot.slane %v365, %v1897
    %v1900 = vsel %vm374, %v1893, 0
    %v1903 = vsel %vm374, %v1894, 0
    %1905 = vmatprep.subr.mxu0 0.0
    %1906 = vmatpush1.msra.mxu0 %v357
    %1907 = vmatprep.subr.mxu0 0.0
    %1908 = vmatpush1.msra.mxu0 %v358
    %1909 = vmatprep.subr.mxu0 0.0
    %1910 = vmatpush1.msra.mxu0 %v359
    %1911 = vmatprep.subr.mxu0 0.0
    %1912 = vmatpush1.msra.mxu0 %v360
    %1913 = vmatprep.subr.mxu0 0.0
    %1914 = vmatpush1.msra.mxu0 0.0
    %1915 = vmatprep.subr.mxu0 0.0
    %1916 = vmatpush1.msra.mxu0 0.0
    %1917 = vmatprep.subr.mxu0 0.0
    %1918 = vmatpush1.msra.mxu0 0.0
    %1919 = vmatprep.subr.mxu0 0.0
    %1920 = vmatpush1.msra.mxu0 0.0
    %1921 = vmatprep.subr.mxu0 0.0
    %1922 = vmatpush1.msra.mxu0 0.0
    %1923 = vmatprep.subr.mxu0 0.0
    %1924 = vmatpush1.msra.mxu0 0.0
    %1925 = vmatprep.subr.mxu0 0.0
    %1926 = vmatpush1.msra.mxu0 0.0
    %1927 = vmatprep.subr.mxu0 0.0
    %1928 = vmatpush1.msra.mxu0 0.0
    %1929 = vmatprep.subr.mxu0 0.0
    %1930 = vmatpush1.msra.mxu0 0.0
    %1931 = vmatprep.subr.mxu0 0.0
    %1932 = vmatpush1.msra.mxu0 0.0
    %1933 = vmatprep.subr.mxu0 0.0
    %1934 = vmatpush1.msra.mxu0 0.0
    %1935 = vmatprep.subr.mxu0 0.0
    %1936 = vmatpush1.msra.mxu0 0.0
    %1937 = vmatprep.subr.mxu0 0.0
    %1938 = vmatpush1.msra.mxu0 0.0
    %1939 = vmatprep.subr.mxu0 0.0
    %1940 = vmatpush1.msra.mxu0 0.0
    %1941 = vmatprep.subr.mxu0 0.0
    %1942 = vmatpush1.msra.mxu0 0.0
    %1943 = vmatprep.subr.mxu0 0.0
    %1944 = vmatpush1.msra.mxu0 0.0
    %1945 = vmatprep.subr.mxu0 0.0
    %1946 = vmatpush1.msra.mxu0 0.0
    %1947 = vmatprep.subr.mxu0 0.0
    %1948 = vmatpush1.msra.mxu0 0.0
    %1949 = vmatprep.subr.mxu0 0.0
    %1950 = vmatpush1.msra.mxu0 0.0
    %1951 = vmatprep.subr.mxu0 0.0
    %1952 = vmatpush1.msra.mxu0 0.0
    %1953 = vmatprep.subr.mxu0 0.0
    %1954 = vmatpush1.msra.mxu0 0.0
    %1955 = vmatprep.subr.mxu0 0.0
    %1956 = vmatpush1.msra.mxu0 0.0
    %1957 = vmatprep.subr.mxu0 0.0
    %1958 = vmatpush1.msra.mxu0 0.0
    %1959 = vmatprep.subr.mxu0 0.0
    %1960 = vmatpush1.msra.mxu0 0.0
    %1961 = vmatprep.subr.mxu0 0.0
    %1962 = vmatpush1.msra.mxu0 0.0
    %1963 = vmatprep.subr.mxu0 0.0
    %1964 = vmatpush1.msra.mxu0 0.0
    %1965 = vmatprep.subr.mxu0 0.0
    %1966 = vmatpush1.msra.mxu0 0.0
    %1967 = vmatprep.subr.mxu0 0.0
    %1968 = vmatpush1.msra.mxu0 0.0
    %1969 = vmatprep.mubr.f32.mxu0 0.0
    %1970 = vmatmul.mubr.f32.gmra.mrb[0].mxu0 %v1900
    %v1971 = vpop.f32.mrb[0].mxu0
    %v1972 = vadd.f32 %v1898, %v1971
    %v1973 = vpop.f32.mrb[0].mxu0
    %1974 = vmatprep.mubr.f32.mxu0 0.0
    %1975 = vmatmul.mubr.f32.gmra.mrb[0].mxu0 %v1903
    %v1976 = vpop.f32.mrb[0].mxu0
    %v1977 = vadd.f32 %v1898, %v1976
    %v1978 = vpop.f32.mrb[0].mxu0
    %1979 = vdwg.mxu0
    %v1980 = vmax.f32 %v1972, 0.0
    %v1981 = vmax.f32 %v1977, 0.0
    %v1982 = vlaneseq
    %v1983 = vshrl.u32 %v1982, 7
    %v1984 = vsub.s32 3, %v1983
    %v1985 = vrot.slane %v365, %v1984
    %v1987 = vsel %vm374, %v1980, 0
    %v1990 = vsel %vm374, %v1981, 0
    %1992 = vmatprep.subr.mxu0 0.0
    %1993 = vmatpush1.msra.mxu0 %v361
    %1994 = vmatprep.subr.mxu0 0.0
    %1995 = vmatpush1.msra.mxu0 %v362
    %1996 = vmatprep.subr.mxu0 0.0
    %1997 = vmatpush1.msra.mxu0 %v363
    %1998 = vmatprep.subr.mxu0 0.0
    %1999 = vmatpush1.msra.mxu0 %v364
    %2000 = vmatprep.subr.mxu0 0.0
    %2001 = vmatpush1.msra.mxu0 0.0
    %2002 = vmatprep.subr.mxu0 0.0
    %2003 = vmatpush1.msra.mxu0 0.0
    %2004 = vmatprep.subr.mxu0 0.0
    %2005 = vmatpush1.msra.mxu0 0.0
    %2006 = vmatprep.subr.mxu0 0.0
    %2007 = vmatpush1.msra.mxu0 0.0
    %2008 = vmatprep.subr.mxu0 0.0
    %2009 = vmatpush1.msra.mxu0 0.0
    %2010 = vmatprep.subr.mxu0 0.0
    %2011 = vmatpush1.msra.mxu0 0.0
    %2012 = vmatprep.subr.mxu0 0.0
    %2013 = vmatpush1.msra.mxu0 0.0
    %2014 = vmatprep.subr.mxu0 0.0
    %2015 = vmatpush1.msra.mxu0 0.0
    %2016 = vmatprep.subr.mxu0 0.0
    %2017 = vmatpush1.msra.mxu0 0.0
    %2018 = vmatprep.subr.mxu0 0.0
    %2019 = vmatpush1.msra.mxu0 0.0
    %2020 = vmatprep.subr.mxu0 0.0
    %2021 = vmatpush1.msra.mxu0 0.0
    %2022 = vmatprep.subr.mxu0 0.0
    %2023 = vmatpush1.msra.mxu0 0.0
    %2024 = vmatprep.subr.mxu0 0.0
    %2025 = vmatpush1.msra.mxu0 0.0
    %2026 = vmatprep.subr.mxu0 0.0
    %2027 = vmatpush1.msra.mxu0 0.0
    %2028 = vmatprep.subr.mxu0 0.0
    %2029 = vmatpush1.msra.mxu0 0.0
    %2030 = vmatprep.subr.mxu0 0.0
    %2031 = vmatpush1.msra.mxu0 0.0
    %2032 = vmatprep.subr.mxu0 0.0
    %2033 = vmatpush1.msra.mxu0 0.0
    %2034 = vmatprep.subr.mxu0 0.0
    %2035 = vmatpush1.msra.mxu0 0.0
    %2036 = vmatprep.subr.mxu0 0.0
    %2037 = vmatpush1.msra.mxu0 0.0
    %2038 = vmatprep.subr.mxu0 0.0
    %2039 = vmatpush1.msra.mxu0 0.0
    %2040 = vmatprep.subr.mxu0 0.0
    %2041 = vmatpush1.msra.mxu0 0.0
    %2042 = vmatprep.subr.mxu0 0.0
    %2043 = vmatpush1.msra.mxu0 0.0
    %2044 = vmatprep.subr.mxu0 0.0
    %2045 = vmatpush1.msra.mxu0 0.0
    %2046 = vmatprep.subr.mxu0 0.0
    %2047 = vmatpush1.msra.mxu0 0.0
    %2048 = vmatprep.subr.mxu0 0.0
    %2049 = vmatpush1.msra.mxu0 0.0
    %2050 = vmatprep.subr.mxu0 0.0
    %2051 = vmatpush1.msra.mxu0 0.0
    %2052 = vmatprep.subr.mxu0 0.0
    %2053 = vmatpush1.msra.mxu0 0.0
    %2054 = vmatprep.subr.mxu0 0.0
    %2055 = vmatpush1.msra.mxu0 0.0
    %2056 = vmatprep.mubr.f32.mxu0 0.0
    %2057 = vmatmul.mubr.f32.gmra.mrb[0].mxu0 %v1987
    %v2058 = vpop.f32.mrb[0].mxu0
    %v2059 = vadd.f32 %v1985, %v2058
    %v2060 = vpop.f32.mrb[0].mxu0
    %2061 = vmatprep.mubr.f32.mxu0 0.0
    %2062 = vmatmul.mubr.f32.gmra.mrb[0].mxu0 %v1990
    %v2063 = vpop.f32.mrb[0].mxu0
    %v2064 = vadd.f32 %v1985, %v2063
    %v2065 = vpop.f32.mrb[0].mxu0
    %2066 = vdwg.mxu0
    %v2067 = vadd.f32 %v1863, %v2059
    %v2068 = vadd.f32 %v1864, %v2064
    %s2069 = scalar_lea.vmem %s4, 32
    %v2070 = vld [vmem:[%s2069] sm:$0xff]
    %v2071 = vld [vmem:[%s2069 + $0x8] sm:$0xff]
    %v2072 = vld [vmem:[%s2069 + $0x10] sm:$0xff]
    %v2073 = vld [vmem:[%s2069 + $0x18] sm:$0xff]
    %s2074 = scalar_lea.vmem %s5, 32
    %v2075 = vld [vmem:[%s2074] sm:$0xff]
    %v2076 = vld [vmem:[%s2074 + $0x8] sm:$0xff]
    %v2077 = vld [vmem:[%s2074 + $0x10] sm:$0xff]
    %v2078 = vld [vmem:[%s2074 + $0x18] sm:$0xff]
    %s2079 = scalar_lea.vmem %s6, 32
    %v2080 = vld [vmem:[%s2079] sm:$0xff]
    %v2081 = vld [vmem:[%s2079 + $0x8] sm:$0xff]
    %v2082 = vld [vmem:[%s2079 + $0x10] sm:$0xff]
    %v2083 = vld [vmem:[%s2079 + $0x18] sm:$0xff]
    %s2084 = scalar_lea.vmem %s7, 4
    %v2085 = vld [vmem:[%s2084] sm:$0xf]
    %v2086 = vlaneseq
    %v2087 = vshrl.u32 %v2086, 7
    %v2088 = vsub.s32 0, %v2087
    %v2089 = vrot.slane %v2085, %v2088
    %v2090 = vlaneseq
    %v2091 = vshrl.u32 %v2090, 7
    %v2092 = vsub.s32 1, %v2091
    %v2093 = vrot.slane %v2085, %v2092
    %v2094 = vsel %vm374, %v2067, 0.0
    %2095 = vadd.xlane.f32.xlu0 %v2094
    %v2096 = vpop.xlane.xlu0 %2095
    %v2097 = vsel %vm374, %v2068, 0.0
    %2098 = vadd.xlane.f32.xlu0 %v2097
    %v2099 = vpop.xlane.xlu0 %2098
    %v2100 = vmul.f32 %v2096, %v381
    %v2101 = vmul.f32 %v2099, %v381
    %v2102 = vsub.f32 %v2067, %v2100
    %v2103 = vsub.f32 %v2068, %v2101
    %v2104 = vmul.f32 %v2102, %v2102
    %v2105 = vmul.f32 %v2103, %v2103
    %v2106 = vsel %vm374, %v2104, 0.0
    %2107 = vadd.xlane.f32.xlu0 %v2106
    %v2108 = vpop.xlane.xlu0 %2107
    %v2109 = vsel %vm374, %v2105, 0.0
    %2110 = vadd.xlane.f32.xlu0 %v2109
    %v2111 = vpop.xlane.xlu0 %2110
    %v2112 = vmul.f32 %v2108, %v381
    %v2113 = vmul.f32 %v2111, %v381
    %v2114 = vadd.f32 %v2112, 1e-05
    %v2115 = vadd.f32 %v2113, 1e-05
    %v2116 = vrsqrt.pop %v2114
    %v2117 = vrsqrt.pop %v2115
    %v2118 = vmul.f32 %v2102, %v2116
    %v2119 = vmul.f32 %v2103, %v2117
    %v2120 = vmul.f32 %v2118, %v2089
    %v2121 = vmul.f32 %v2119, %v2089
    %v2122 = vadd.f32 %v2120, %v2093
    %v2123 = vadd.f32 %v2121, %v2093
    %v2125 = vsel %vm374, %v2122, 0
    %v2128 = vsel %vm374, %v2123, 0
    %2130 = vmatprep.subr.mxu0 0.0
    %2131 = vmatpush1.msra.mxu0 %v2070
    %2132 = vmatprep.subr.mxu0 0.0
    %2133 = vmatpush1.msra.mxu0 %v2071
    %2134 = vmatprep.subr.mxu0 0.0
    %2135 = vmatpush1.msra.mxu0 %v2072
    %2136 = vmatprep.subr.mxu0 0.0
    %2137 = vmatpush1.msra.mxu0 %v2073
    %2138 = vmatprep.subr.mxu0 0.0
    %2139 = vmatpush1.msra.mxu0 0.0
    %2140 = vmatprep.subr.mxu0 0.0
    %2141 = vmatpush1.msra.mxu0 0.0
    %2142 = vmatprep.subr.mxu0 0.0
    %2143 = vmatpush1.msra.mxu0 0.0
    %2144 = vmatprep.subr.mxu0 0.0
    %2145 = vmatpush1.msra.mxu0 0.0
    %2146 = vmatprep.subr.mxu0 0.0
    %2147 = vmatpush1.msra.mxu0 0.0
    %2148 = vmatprep.subr.mxu0 0.0
    %2149 = vmatpush1.msra.mxu0 0.0
    %2150 = vmatprep.subr.mxu0 0.0
    %2151 = vmatpush1.msra.mxu0 0.0
    %2152 = vmatprep.subr.mxu0 0.0
    %2153 = vmatpush1.msra.mxu0 0.0
    %2154 = vmatprep.subr.mxu0 0.0
    %2155 = vmatpush1.msra.mxu0 0.0
    %2156 = vmatprep.subr.mxu0 0.0
    %2157 = vmatpush1.msra.mxu0 0.0
    %2158 = vmatprep.subr.mxu0 0.0
    %2159 = vmatpush1.msra.mxu0 0.0
    %2160 = vmatprep.subr.mxu0 0.0
    %2161 = vmatpush1.msra.mxu0 0.0
    %2162 = vmatprep.subr.mxu0 0.0
    %2163 = vmatpush1.msra.mxu0 0.0
    %2164 = vmatprep.subr.mxu0 0.0
    %2165 = vmatpush1.msra.mxu0 0.0
    %2166 = vmatprep.subr.mxu0 0.0
    %2167 = vmatpush1.msra.mxu0 0.0
    %2168 = vmatprep.subr.mxu0 0.0
    %2169 = vmatpush1.msra.mxu0 0.0
    %2170 = vmatprep.subr.mxu0 0.0
    %2171 = vmatpush1.msra.mxu0 0.0
    %2172 = vmatprep.subr.mxu0 0.0
    %2173 = vmatpush1.msra.mxu0 0.0
    %2174 = vmatprep.subr.mxu0 0.0
    %2175 = vmatpush1.msra.mxu0 0.0
    %2176 = vmatprep.subr.mxu0 0.0
    %2177 = vmatpush1.msra.mxu0 0.0
    %2178 = vmatprep.subr.mxu0 0.0
    %2179 = vmatpush1.msra.mxu0 0.0
    %2180 = vmatprep.subr.mxu0 0.0
    %2181 = vmatpush1.msra.mxu0 0.0
    %2182 = vmatprep.subr.mxu0 0.0
    %2183 = vmatpush1.msra.mxu0 0.0
    %2184 = vmatprep.subr.mxu0 0.0
    %2185 = vmatpush1.msra.mxu0 0.0
    %2186 = vmatprep.subr.mxu0 0.0
    %2187 = vmatpush1.msra.mxu0 0.0
    %2188 = vmatprep.subr.mxu0 0.0
    %2189 = vmatpush1.msra.mxu0 0.0
    %2190 = vmatprep.subr.mxu0 0.0
    %2191 = vmatpush1.msra.mxu0 0.0
    %2192 = vmatprep.subr.mxu0 0.0
    %2193 = vmatpush1.msra.mxu0 0.0
    %2194 = vmatprep.mubr.f32.mxu0 0.0
    %2195 = vmatmul.mubr.f32.gmra.mrb[0].mxu0 %v2125
    %v2196 = vpop.f32.mrb[0].mxu0
    %v2197 = vadd.f32 0.0, %v2196
    %v2198 = vpop.f32.mrb[0].mxu0
    %2199 = vmatprep.mubr.f32.mxu0 0.0
    %2200 = vmatmul.mubr.f32.gmra.mrb[0].mxu0 %v2128
    %v2201 = vpop.f32.mrb[0].mxu0
    %v2202 = vadd.f32 0.0, %v2201
    %v2203 = vpop.f32.mrb[0].mxu0
    %2204 = vdwg.mxu0
    %v2205 = vmax.f32 %v2197, 0.0
    %v2206 = vmax.f32 %v2202, 0.0
    %2208 = vrot.lane.b32.xlu0 %v2197, 96
    %v2209 = vpop.permute.xlu0 %2208
    %v2211 = vsel %vm492, %v2205, 0
    %v2213 = vsel %vm492, %v2209, 0
    %2215 = vmatprep.subr.mxu0 0.0
    %2216 = vmatpush1.xpose.msra.mxu0 %v2213
    %2217 = vmatprep.subr.mxu0 0.0
    %2218 = vmatpush1.xpose.msra.mxu0 0.0
    %2219 = vmatprep.subr.mxu0 0.0
    %2220 = vmatpush1.xpose.msra.mxu0 0.0
    %2221 = vmatprep.subr.mxu0 0.0
    %2222 = vmatpush1.xpose.msra.mxu0 0.0
    %2223 = vmatprep.subr.mxu0 0.0
    %2224 = vmatpush1.xpose.msra.mxu0 0.0
    %2225 = vmatprep.subr.mxu0 0.0
    %2226 = vmatpush1.xpose.msra.mxu0 0.0
    %2227 = vmatprep.subr.mxu0 0.0
    %2228 = vmatpush1.xpose.msra.mxu0 0.0
    %2229 = vmatprep.subr.mxu0 0.0
    %2230 = vmatpush1.xpose.msra.mxu0 0.0
    %2231 = vmatprep.subr.mxu0 0.0
    %2232 = vmatpush1.xpose.msra.mxu0 0.0
    %2233 = vmatprep.subr.mxu0 0.0
    %2234 = vmatpush1.xpose.msra.mxu0 0.0
    %2235 = vmatprep.subr.mxu0 0.0
    %2236 = vmatpush1.xpose.msra.mxu0 0.0
    %2237 = vmatprep.subr.mxu0 0.0
    %2238 = vmatpush1.xpose.msra.mxu0 0.0
    %2239 = vmatprep.subr.mxu0 0.0
    %2240 = vmatpush1.xpose.msra.mxu0 0.0
    %2241 = vmatprep.subr.mxu0 0.0
    %2242 = vmatpush1.xpose.msra.mxu0 0.0
    %2243 = vmatprep.subr.mxu0 0.0
    %2244 = vmatpush1.xpose.msra.mxu0 0.0
    %2245 = vmatprep.subr.mxu0 0.0
    %2246 = vmatpush1.xpose.msra.mxu0 0.0
    %2247 = vmatprep.subr.mxu0 0.0
    %2248 = vmatpush1.xpose.msra.mxu0 0.0
    %2249 = vmatprep.subr.mxu0 0.0
    %2250 = vmatpush1.xpose.msra.mxu0 0.0
    %2251 = vmatprep.subr.mxu0 0.0
    %2252 = vmatpush1.xpose.msra.mxu0 0.0
    %2253 = vmatprep.subr.mxu0 0.0
    %2254 = vmatpush1.xpose.msra.mxu0 0.0
    %2255 = vmatprep.subr.mxu0 0.0
    %2256 = vmatpush1.xpose.msra.mxu0 0.0
    %2257 = vmatprep.subr.mxu0 0.0
    %2258 = vmatpush1.xpose.msra.mxu0 0.0
    %2259 = vmatprep.subr.mxu0 0.0
    %2260 = vmatpush1.xpose.msra.mxu0 0.0
    %2261 = vmatprep.subr.mxu0 0.0
    %2262 = vmatpush1.xpose.msra.mxu0 0.0
    %2263 = vmatprep.subr.mxu0 0.0
    %2264 = vmatpush1.xpose.msra.mxu0 0.0
    %2265 = vmatprep.subr.mxu0 0.0
    %2266 = vmatpush1.xpose.msra.mxu0 0.0
    %2267 = vmatprep.subr.mxu0 0.0
    %2268 = vmatpush1.xpose.msra.mxu0 0.0
    %2269 = vmatprep.subr.mxu0 0.0
    %2270 = vmatpush1.xpose.msra.mxu0 0.0
    %2271 = vmatprep.subr.mxu0 0.0
    %2272 = vmatpush1.xpose.msra.mxu0 0.0
    %2273 = vmatprep.subr.mxu0 0.0
    %2274 = vmatpush1.xpose.msra.mxu0 0.0
    %2275 = vmatprep.subr.mxu0 0.0
    %2276 = vmatpush1.xpose.msra.mxu0 0.0
    %2277 = vmatprep.subr.mxu0 0.0
    %2278 = vmatpush1.xpose.msra.mxu0 0.0
    %2279 = vmatprep.mubr.f32.mxu0 0.0
    %2280 = vmatmul.mubr.f32.gmra.mrb[0].mxu0 %v2211
    %v2281 = vpop.f32.mrb[0].mxu0
    %v2282 = vadd.f32 0.0, %v2281
    %v2283 = vpop.f32.mrb[0].mxu0
    %2284 = vdwg.mxu0
    %v2285 = vmul.f32 %v2282, 0.35355338
    %v2286 = vadd.f32 %v2285, %v351
    %v2287 = vsel %vm492, %v2286, -inf
    %2288 = vmax.xlane.f32.xlu0 %v2287
    %v2289 = vpop.xlane.xlu0 %2288
    %v2290 = vsub.f32 %v2286, %v2289
    %v2291 = vmul.f32 %v2290, 1.442695
    %v2292 = vpow.pop %v2291
    %v2293 = vsel %vm492, %v2292, 0.0
    %2294 = vadd.xlane.f32.xlu0 %v2293
    %v2295 = vpop.xlane.xlu0 %2294
    %v2296 = vrcp.pop %v2295
    %v2297 = vmul.f32 %v2292, %v2296
    %2298 = vrot.lane.b32.xlu0 %v2197, 64
    %v2299 = vpop.permute.xlu0 %2298
    %v2302 = vsel %vm492, %v2297, 0
    %2304 = vmatprep.subr.mxu0 0.0
    %2305 = vmatpush1.msra.mxu0 %v2299
    %2306 = vmatprep.subr.mxu0 0.0
    %2307 = vmatpush1.msra.mxu0 0.0
    %2308 = vmatprep.subr.mxu0 0.0
    %2309 = vmatpush1.msra.mxu0 0.0
    %2310 = vmatprep.subr.mxu0 0.0
    %2311 = vmatpush1.msra.mxu0 0.0
    %2312 = vmatprep.subr.mxu0 0.0
    %2313 = vmatpush1.msra.mxu0 0.0
    %2314 = vmatprep.subr.mxu0 0.0
    %2315 = vmatpush1.msra.mxu0 0.0
    %2316 = vmatprep.subr.mxu0 0.0
    %2317 = vmatpush1.msra.mxu0 0.0
    %2318 = vmatprep.subr.mxu0 0.0
    %2319 = vmatpush1.msra.mxu0 0.0
    %2320 = vmatprep.subr.mxu0 0.0
    %2321 = vmatpush1.msra.mxu0 0.0
    %2322 = vmatprep.subr.mxu0 0.0
    %2323 = vmatpush1.msra.mxu0 0.0
    %2324 = vmatprep.subr.mxu0 0.0
    %2325 = vmatpush1.msra.mxu0 0.0
    %2326 = vmatprep.subr.mxu0 0.0
    %2327 = vmatpush1.msra.mxu0 0.0
    %2328 = vmatprep.subr.mxu0 0.0
    %2329 = vmatpush1.msra.mxu0 0.0
    %2330 = vmatprep.subr.mxu0 0.0
    %2331 = vmatpush1.msra.mxu0 0.0
    %2332 = vmatprep.subr.mxu0 0.0
    %2333 = vmatpush1.msra.mxu0 0.0
    %2334 = vmatprep.subr.mxu0 0.0
    %2335 = vmatpush1.msra.mxu0 0.0
    %2336 = vmatprep.subr.mxu0 0.0
    %2337 = vmatpush1.msra.mxu0 0.0
    %2338 = vmatprep.subr.mxu0 0.0
    %2339 = vmatpush1.msra.mxu0 0.0
    %2340 = vmatprep.subr.mxu0 0.0
    %2341 = vmatpush1.msra.mxu0 0.0
    %2342 = vmatprep.subr.mxu0 0.0
    %2343 = vmatpush1.msra.mxu0 0.0
    %2344 = vmatprep.subr.mxu0 0.0
    %2345 = vmatpush1.msra.mxu0 0.0
    %2346 = vmatprep.subr.mxu0 0.0
    %2347 = vmatpush1.msra.mxu0 0.0
    %2348 = vmatprep.subr.mxu0 0.0
    %2349 = vmatpush1.msra.mxu0 0.0
    %2350 = vmatprep.subr.mxu0 0.0
    %2351 = vmatpush1.msra.mxu0 0.0
    %2352 = vmatprep.subr.mxu0 0.0
    %2353 = vmatpush1.msra.mxu0 0.0
    %2354 = vmatprep.subr.mxu0 0.0
    %2355 = vmatpush1.msra.mxu0 0.0
    %2356 = vmatprep.subr.mxu0 0.0
    %2357 = vmatpush1.msra.mxu0 0.0
    %2358 = vmatprep.subr.mxu0 0.0
    %2359 = vmatpush1.msra.mxu0 0.0
    %2360 = vmatprep.subr.mxu0 0.0
    %2361 = vmatpush1.msra.mxu0 0.0
    %2362 = vmatprep.subr.mxu0 0.0
    %2363 = vmatpush1.msra.mxu0 0.0
    %2364 = vmatprep.subr.mxu0 0.0
    %2365 = vmatpush1.msra.mxu0 0.0
    %2366 = vmatprep.subr.mxu0 0.0
    %2367 = vmatpush1.msra.mxu0 0.0
    %2368 = vmatprep.mubr.f32.mxu0 0.0
    %2369 = vmatmul.mubr.f32.gmra.mrb[0].mxu0 %v2302
    %v2370 = vpop.f32.mrb[0].mxu0
    %v2371 = vadd.f32 0.0, %v2370
    %v2372 = vpop.f32.mrb[0].mxu0
    %2373 = vdwg.mxu0
    %2374 = vst.msk [vmem:[#allocation2] sm:$0xff] %vm492, %v2371
    %2375 = vrot.lane.b32.xlu0 %v2205, 120
    %v2376 = vpop.permute.xlu0 %2375
    %2377 = vrot.lane.b32.xlu0 %v2197, 88
    %v2378 = vpop.permute.xlu0 %2377
    %v2379 = vsel %vm492, %v2376, 0
    %v2381 = vsel %vm492, %v2378, 0
    %2383 = vmatprep.subr.mxu0 0.0
    %2384 = vmatpush1.xpose.msra.mxu0 %v2381
    %2385 = vmatprep.subr.mxu0 0.0
    %2386 = vmatpush1.xpose.msra.mxu0 0.0
    %2387 = vmatprep.subr.mxu0 0.0
    %2388 = vmatpush1.xpose.msra.mxu0 0.0
    %2389 = vmatprep.subr.mxu0 0.0
    %2390 = vmatpush1.xpose.msra.mxu0 0.0
    %2391 = vmatprep.subr.mxu0 0.0
    %2392 = vmatpush1.xpose.msra.mxu0 0.0
    %2393 = vmatprep.subr.mxu0 0.0
    %2394 = vmatpush1.xpose.msra.mxu0 0.0
    %2395 = vmatprep.subr.mxu0 0.0
    %2396 = vmatpush1.xpose.msra.mxu0 0.0
    %2397 = vmatprep.subr.mxu0 0.0
    %2398 = vmatpush1.xpose.msra.mxu0 0.0
    %2399 = vmatprep.subr.mxu0 0.0
    %2400 = vmatpush1.xpose.msra.mxu0 0.0
    %2401 = vmatprep.subr.mxu0 0.0
    %2402 = vmatpush1.xpose.msra.mxu0 0.0
    %2403 = vmatprep.subr.mxu0 0.0
    %2404 = vmatpush1.xpose.msra.mxu0 0.0
    %2405 = vmatprep.subr.mxu0 0.0
    %2406 = vmatpush1.xpose.msra.mxu0 0.0
    %2407 = vmatprep.subr.mxu0 0.0
    %2408 = vmatpush1.xpose.msra.mxu0 0.0
    %2409 = vmatprep.subr.mxu0 0.0
    %2410 = vmatpush1.xpose.msra.mxu0 0.0
    %2411 = vmatprep.subr.mxu0 0.0
    %2412 = vmatpush1.xpose.msra.mxu0 0.0
    %2413 = vmatprep.subr.mxu0 0.0
    %2414 = vmatpush1.xpose.msra.mxu0 0.0
    %2415 = vmatprep.subr.mxu0 0.0
    %2416 = vmatpush1.xpose.msra.mxu0 0.0
    %2417 = vmatprep.subr.mxu0 0.0
    %2418 = vmatpush1.xpose.msra.mxu0 0.0
    %2419 = vmatprep.subr.mxu0 0.0
    %2420 = vmatpush1.xpose.msra.mxu0 0.0
    %2421 = vmatprep.subr.mxu0 0.0
    %2422 = vmatpush1.xpose.msra.mxu0 0.0
    %2423 = vmatprep.subr.mxu0 0.0
    %2424 = vmatpush1.xpose.msra.mxu0 0.0
    %2425 = vmatprep.subr.mxu0 0.0
    %2426 = vmatpush1.xpose.msra.mxu0 0.0
    %2427 = vmatprep.subr.mxu0 0.0
    %2428 = vmatpush1.xpose.msra.mxu0 0.0
    %2429 = vmatprep.subr.mxu0 0.0
    %2430 = vmatpush1.xpose.msra.mxu0 0.0
    %2431 = vmatprep.subr.mxu0 0.0
    %2432 = vmatpush1.xpose.msra.mxu0 0.0
    %2433 = vmatprep.subr.mxu0 0.0
    %2434 = vmatpush1.xpose.msra.mxu0 0.0
    %2435 = vmatprep.subr.mxu0 0.0
    %2436 = vmatpush1.xpose.msra.mxu0 0.0
    %2437 = vmatprep.subr.mxu0 0.0
    %2438 = vmatpush1.xpose.msra.mxu0 0.0
    %2439 = vmatprep.subr.mxu0 0.0
    %2440 = vmatpush1.xpose.msra.mxu0 0.0
    %2441 = vmatprep.subr.mxu0 0.0
    %2442 = vmatpush1.xpose.msra.mxu0 0.0
    %2443 = vmatprep.subr.mxu0 0.0
    %2444 = vmatpush1.xpose.msra.mxu0 0.0
    %2445 = vmatprep.subr.mxu0 0.0
    %2446 = vmatpush1.xpose.msra.mxu0 0.0
    %2447 = vmatprep.mubr.f32.mxu0 0.0
    %2448 = vmatmul.mubr.f32.gmra.mrb[0].mxu0 %v2379
    %v2449 = vpop.f32.mrb[0].mxu0
    %v2450 = vadd.f32 0.0, %v2449
    %v2451 = vpop.f32.mrb[0].mxu0
    %2452 = vdwg.mxu0
    %v2453 = vmul.f32 %v2450, 0.35355338
    %v2454 = vadd.f32 %v2453, %v351
    %v2455 = vsel %vm492, %v2454, -inf
    %2456 = vmax.xlane.f32.xlu0 %v2455
    %v2457 = vpop.xlane.xlu0 %2456
    %v2458 = vsub.f32 %v2454, %v2457
    %v2459 = vmul.f32 %v2458, 1.442695
    %v2460 = vpow.pop %v2459
    %v2461 = vsel %vm492, %v2460, 0.0
    %2462 = vadd.xlane.f32.xlu0 %v2461
    %v2463 = vpop.xlane.xlu0 %2462
    %v2464 = vrcp.pop %v2463
    %v2465 = vmul.f32 %v2460, %v2464
    %2466 = vrot.lane.b32.xlu0 %v2197, 56
    %v2467 = vpop.permute.xlu0 %2466
    %v2470 = vsel %vm492, %v2465, 0
    %2472 = vmatprep.subr.mxu0 0.0
    %2473 = vmatpush1.msra.mxu0 %v2467
    %2474 = vmatprep.subr.mxu0 0.0
    %2475 = vmatpush1.msra.mxu0 0.0
    %2476 = vmatprep.subr.mxu0 0.0
    %2477 = vmatpush1.msra.mxu0 0.0
    %2478 = vmatprep.subr.mxu0 0.0
    %2479 = vmatpush1.msra.mxu0 0.0
    %2480 = vmatprep.subr.mxu0 0.0
    %2481 = vmatpush1.msra.mxu0 0.0
    %2482 = vmatprep.subr.mxu0 0.0
    %2483 = vmatpush1.msra.mxu0 0.0
    %2484 = vmatprep.subr.mxu0 0.0
    %2485 = vmatpush1.msra.mxu0 0.0
    %2486 = vmatprep.subr.mxu0 0.0
    %2487 = vmatpush1.msra.mxu0 0.0
    %2488 = vmatprep.subr.mxu0 0.0
    %2489 = vmatpush1.msra.mxu0 0.0
    %2490 = vmatprep.subr.mxu0 0.0
    %2491 = vmatpush1.msra.mxu0 0.0
    %2492 = vmatprep.subr.mxu0 0.0
    %2493 = vmatpush1.msra.mxu0 0.0
    %2494 = vmatprep.subr.mxu0 0.0
    %2495 = vmatpush1.msra.mxu0 0.0
    %2496 = vmatprep.subr.mxu0 0.0
    %2497 = vmatpush1.msra.mxu0 0.0
    %2498 = vmatprep.subr.mxu0 0.0
    %2499 = vmatpush1.msra.mxu0 0.0
    %2500 = vmatprep.subr.mxu0 0.0
    %2501 = vmatpush1.msra.mxu0 0.0
    %2502 = vmatprep.subr.mxu0 0.0
    %2503 = vmatpush1.msra.mxu0 0.0
    %2504 = vmatprep.subr.mxu0 0.0
    %2505 = vmatpush1.msra.mxu0 0.0
    %2506 = vmatprep.subr.mxu0 0.0
    %2507 = vmatpush1.msra.mxu0 0.0
    %2508 = vmatprep.subr.mxu0 0.0
    %2509 = vmatpush1.msra.mxu0 0.0
    %2510 = vmatprep.subr.mxu0 0.0
    %2511 = vmatpush1.msra.mxu0 0.0
    %2512 = vmatprep.subr.mxu0 0.0
    %2513 = vmatpush1.msra.mxu0 0.0
    %2514 = vmatprep.subr.mxu0 0.0
    %2515 = vmatpush1.msra.mxu0 0.0
    %2516 = vmatprep.subr.mxu0 0.0
    %2517 = vmatpush1.msra.mxu0 0.0
    %2518 = vmatprep.subr.mxu0 0.0
    %2519 = vmatpush1.msra.mxu0 0.0
    %2520 = vmatprep.subr.mxu0 0.0
    %2521 = vmatpush1.msra.mxu0 0.0
    %2522 = vmatprep.subr.mxu0 0.0
    %2523 = vmatpush1.msra.mxu0 0.0
    %2524 = vmatprep.subr.mxu0 0.0
    %2525 = vmatpush1.msra.mxu0 0.0
    %2526 = vmatprep.subr.mxu0 0.0
    %2527 = vmatpush1.msra.mxu0 0.0
    %2528 = vmatprep.subr.mxu0 0.0
    %2529 = vmatpush1.msra.mxu0 0.0
    %2530 = vmatprep.subr.mxu0 0.0
    %2531 = vmatpush1.msra.mxu0 0.0
    %2532 = vmatprep.subr.mxu0 0.0
    %2533 = vmatpush1.msra.mxu0 0.0
    %2534 = vmatprep.subr.mxu0 0.0
    %2535 = vmatpush1.msra.mxu0 0.0
    %2536 = vmatprep.mubr.f32.mxu0 0.0
    %2537 = vmatmul.mubr.f32.gmra.mrb[0].mxu0 %v2470
    %v2538 = vpop.f32.mrb[0].mxu0
    %v2539 = vadd.f32 0.0, %v2538
    %v2540 = vpop.f32.mrb[0].mxu0
    %2541 = vdwg.mxu0
    %2543 = vrot.lane.b32.xlu0 %v2539, 8
    %v2544 = vpop.permute.xlu0 %2543
    %2546 = vst.msk [vmem:[#allocation2] sm:$0xff] %vm829, %v2544
    %2547 = vrot.lane.b32.xlu0 %v2205, 112
    %v2548 = vpop.permute.xlu0 %2547
    %2549 = vrot.lane.b32.xlu0 %v2197, 80
    %v2550 = vpop.permute.xlu0 %2549
    %v2551 = vsel %vm492, %v2548, 0
    %v2553 = vsel %vm492, %v2550, 0
    %2555 = vmatprep.subr.mxu0 0.0
    %2556 = vmatpush1.xpose.msra.mxu0 %v2553
    %2557 = vmatprep.subr.mxu0 0.0
    %2558 = vmatpush1.xpose.msra.mxu0 0.0
    %2559 = vmatprep.subr.mxu0 0.0
    %2560 = vmatpush1.xpose.msra.mxu0 0.0
    %2561 = vmatprep.subr.mxu0 0.0
    %2562 = vmatpush1.xpose.msra.mxu0 0.0
    %2563 = vmatprep.subr.mxu0 0.0
    %2564 = vmatpush1.xpose.msra.mxu0 0.0
    %2565 = vmatprep.subr.mxu0 0.0
    %2566 = vmatpush1.xpose.msra.mxu0 0.0
    %2567 = vmatprep.subr.mxu0 0.0
    %2568 = vmatpush1.xpose.msra.mxu0 0.0
    %2569 = vmatprep.subr.mxu0 0.0
    %2570 = vmatpush1.xpose.msra.mxu0 0.0
    %2571 = vmatprep.subr.mxu0 0.0
    %2572 = vmatpush1.xpose.msra.mxu0 0.0
    %2573 = vmatprep.subr.mxu0 0.0
    %2574 = vmatpush1.xpose.msra.mxu0 0.0
    %2575 = vmatprep.subr.mxu0 0.0
    %2576 = vmatpush1.xpose.msra.mxu0 0.0
    %2577 = vmatprep.subr.mxu0 0.0
    %2578 = vmatpush1.xpose.msra.mxu0 0.0
    %2579 = vmatprep.subr.mxu0 0.0
    %2580 = vmatpush1.xpose.msra.mxu0 0.0
    %2581 = vmatprep.subr.mxu0 0.0
    %2582 = vmatpush1.xpose.msra.mxu0 0.0
    %2583 = vmatprep.subr.mxu0 0.0
    %2584 = vmatpush1.xpose.msra.mxu0 0.0
    %2585 = vmatprep.subr.mxu0 0.0
    %2586 = vmatpush1.xpose.msra.mxu0 0.0
    %2587 = vmatprep.subr.mxu0 0.0
    %2588 = vmatpush1.xpose.msra.mxu0 0.0
    %2589 = vmatprep.subr.mxu0 0.0
    %2590 = vmatpush1.xpose.msra.mxu0 0.0
    %2591 = vmatprep.subr.mxu0 0.0
    %2592 = vmatpush1.xpose.msra.mxu0 0.0
    %2593 = vmatprep.subr.mxu0 0.0
    %2594 = vmatpush1.xpose.msra.mxu0 0.0
    %2595 = vmatprep.subr.mxu0 0.0
    %2596 = vmatpush1.xpose.msra.mxu0 0.0
    %2597 = vmatprep.subr.mxu0 0.0
    %2598 = vmatpush1.xpose.msra.mxu0 0.0
    %2599 = vmatprep.subr.mxu0 0.0
    %2600 = vmatpush1.xpose.msra.mxu0 0.0
    %2601 = vmatprep.subr.mxu0 0.0
    %2602 = vmatpush1.xpose.msra.mxu0 0.0
    %2603 = vmatprep.subr.mxu0 0.0
    %2604 = vmatpush1.xpose.msra.mxu0 0.0
    %2605 = vmatprep.subr.mxu0 0.0
    %2606 = vmatpush1.xpose.msra.mxu0 0.0
    %2607 = vmatprep.subr.mxu0 0.0
    %2608 = vmatpush1.xpose.msra.mxu0 0.0
    %2609 = vmatprep.subr.mxu0 0.0
    %2610 = vmatpush1.xpose.msra.mxu0 0.0
    %2611 = vmatprep.subr.mxu0 0.0
    %2612 = vmatpush1.xpose.msra.mxu0 0.0
    %2613 = vmatprep.subr.mxu0 0.0
    %2614 = vmatpush1.xpose.msra.mxu0 0.0
    %2615 = vmatprep.subr.mxu0 0.0
    %2616 = vmatpush1.xpose.msra.mxu0 0.0
    %2617 = vmatprep.subr.mxu0 0.0
    %2618 = vmatpush1.xpose.msra.mxu0 0.0
    %2619 = vmatprep.mubr.f32.mxu0 0.0
    %2620 = vmatmul.mubr.f32.gmra.mrb[0].mxu0 %v2551
    %v2621 = vpop.f32.mrb[0].mxu0
    %v2622 = vadd.f32 0.0, %v2621
    %v2623 = vpop.f32.mrb[0].mxu0
    %2624 = vdwg.mxu0
    %v2625 = vmul.f32 %v2622, 0.35355338
    %v2626 = vadd.f32 %v2625, %v351
    %v2627 = vsel %vm492, %v2626, -inf
    %2628 = vmax.xlane.f32.xlu0 %v2627
    %v2629 = vpop.xlane.xlu0 %2628
    %v2630 = vsub.f32 %v2626, %v2629
    %v2631 = vmul.f32 %v2630, 1.442695
    %v2632 = vpow.pop %v2631
    %v2633 = vsel %vm492, %v2632, 0.0
    %2634 = vadd.xlane.f32.xlu0 %v2633
    %v2635 = vpop.xlane.xlu0 %2634
    %v2636 = vrcp.pop %v2635
    %v2637 = vmul.f32 %v2632, %v2636
    %2638 = vrot.lane.b32.xlu0 %v2197, 48
    %v2639 = vpop.permute.xlu0 %2638
    %v2642 = vsel %vm492, %v2637, 0
    %2644 = vmatprep.subr.mxu0 0.0
    %2645 = vmatpush1.msra.mxu0 %v2639
    %2646 = vmatprep.subr.mxu0 0.0
    %2647 = vmatpush1.msra.mxu0 0.0
    %2648 = vmatprep.subr.mxu0 0.0
    %2649 = vmatpush1.msra.mxu0 0.0
    %2650 = vmatprep.subr.mxu0 0.0
    %2651 = vmatpush1.msra.mxu0 0.0
    %2652 = vmatprep.subr.mxu0 0.0
    %2653 = vmatpush1.msra.mxu0 0.0
    %2654 = vmatprep.subr.mxu0 0.0
    %2655 = vmatpush1.msra.mxu0 0.0
    %2656 = vmatprep.subr.mxu0 0.0
    %2657 = vmatpush1.msra.mxu0 0.0
    %2658 = vmatprep.subr.mxu0 0.0
    %2659 = vmatpush1.msra.mxu0 0.0
    %2660 = vmatprep.subr.mxu0 0.0
    %2661 = vmatpush1.msra.mxu0 0.0
    %2662 = vmatprep.subr.mxu0 0.0
    %2663 = vmatpush1.msra.mxu0 0.0
    %2664 = vmatprep.subr.mxu0 0.0
    %2665 = vmatpush1.msra.mxu0 0.0
    %2666 = vmatprep.subr.mxu0 0.0
    %2667 = vmatpush1.msra.mxu0 0.0
    %2668 = vmatprep.subr.mxu0 0.0
    %2669 = vmatpush1.msra.mxu0 0.0
    %2670 = vmatprep.subr.mxu0 0.0
    %2671 = vmatpush1.msra.mxu0 0.0
    %2672 = vmatprep.subr.mxu0 0.0
    %2673 = vmatpush1.msra.mxu0 0.0
    %2674 = vmatprep.subr.mxu0 0.0
    %2675 = vmatpush1.msra.mxu0 0.0
    %2676 = vmatprep.subr.mxu0 0.0
    %2677 = vmatpush1.msra.mxu0 0.0
    %2678 = vmatprep.subr.mxu0 0.0
    %2679 = vmatpush1.msra.mxu0 0.0
    %2680 = vmatprep.subr.mxu0 0.0
    %2681 = vmatpush1.msra.mxu0 0.0
    %2682 = vmatprep.subr.mxu0 0.0
    %2683 = vmatpush1.msra.mxu0 0.0
    %2684 = vmatprep.subr.mxu0 0.0
    %2685 = vmatpush1.msra.mxu0 0.0
    %2686 = vmatprep.subr.mxu0 0.0
    %2687 = vmatpush1.msra.mxu0 0.0
    %2688 = vmatprep.subr.mxu0 0.0
    %2689 = vmatpush1.msra.mxu0 0.0
    %2690 = vmatprep.subr.mxu0 0.0
    %2691 = vmatpush1.msra.mxu0 0.0
    %2692 = vmatprep.subr.mxu0 0.0
    %2693 = vmatpush1.msra.mxu0 0.0
    %2694 = vmatprep.subr.mxu0 0.0
    %2695 = vmatpush1.msra.mxu0 0.0
    %2696 = vmatprep.subr.mxu0 0.0
    %2697 = vmatpush1.msra.mxu0 0.0
    %2698 = vmatprep.subr.mxu0 0.0
    %2699 = vmatpush1.msra.mxu0 0.0
    %2700 = vmatprep.subr.mxu0 0.0
    %2701 = vmatpush1.msra.mxu0 0.0
    %2702 = vmatprep.subr.mxu0 0.0
    %2703 = vmatpush1.msra.mxu0 0.0
    %2704 = vmatprep.subr.mxu0 0.0
    %2705 = vmatpush1.msra.mxu0 0.0
    %2706 = vmatprep.subr.mxu0 0.0
    %2707 = vmatpush1.msra.mxu0 0.0
    %2708 = vmatprep.mubr.f32.mxu0 0.0
    %2709 = vmatmul.mubr.f32.gmra.mrb[0].mxu0 %v2642
    %v2710 = vpop.f32.mrb[0].mxu0
    %v2711 = vadd.f32 0.0, %v2710
    %v2712 = vpop.f32.mrb[0].mxu0
    %2713 = vdwg.mxu0
    %2715 = vrot.lane.b32.xlu0 %v2711, 16
    %v2716 = vpop.permute.xlu0 %2715
    %2718 = vst.msk [vmem:[#allocation2] sm:$0xff] %vm1002, %v2716
    %2719 = vrot.lane.b32.xlu0 %v2205, 104
    %v2720 = vpop.permute.xlu0 %2719
    %2721 = vrot.lane.b32.xlu0 %v2197, 72
    %v2722 = vpop.permute.xlu0 %2721
    %v2723 = vsel %vm492, %v2720, 0
    %v2725 = vsel %vm492, %v2722, 0
    %2727 = vmatprep.subr.mxu0 0.0
    %2728 = vmatpush1.xpose.msra.mxu0 %v2725
    %2729 = vmatprep.subr.mxu0 0.0
    %2730 = vmatpush1.xpose.msra.mxu0 0.0
    %2731 = vmatprep.subr.mxu0 0.0
    %2732 = vmatpush1.xpose.msra.mxu0 0.0
    %2733 = vmatprep.subr.mxu0 0.0
    %2734 = vmatpush1.xpose.msra.mxu0 0.0
    %2735 = vmatprep.subr.mxu0 0.0
    %2736 = vmatpush1.xpose.msra.mxu0 0.0
    %2737 = vmatprep.subr.mxu0 0.0
    %2738 = vmatpush1.xpose.msra.mxu0 0.0
    %2739 = vmatprep.subr.mxu0 0.0
    %2740 = vmatpush1.xpose.msra.mxu0 0.0
    %2741 = vmatprep.subr.mxu0 0.0
    %2742 = vmatpush1.xpose.msra.mxu0 0.0
    %2743 = vmatprep.subr.mxu0 0.0
    %2744 = vmatpush1.xpose.msra.mxu0 0.0
    %2745 = vmatprep.subr.mxu0 0.0
    %2746 = vmatpush1.xpose.msra.mxu0 0.0
    %2747 = vmatprep.subr.mxu0 0.0
    %2748 = vmatpush1.xpose.msra.mxu0 0.0
    %2749 = vmatprep.subr.mxu0 0.0
    %2750 = vmatpush1.xpose.msra.mxu0 0.0
    %2751 = vmatprep.subr.mxu0 0.0
    %2752 = vmatpush1.xpose.msra.mxu0 0.0
    %2753 = vmatprep.subr.mxu0 0.0
    %2754 = vmatpush1.xpose.msra.mxu0 0.0
    %2755 = vmatprep.subr.mxu0 0.0
    %2756 = vmatpush1.xpose.msra.mxu0 0.0
    %2757 = vmatprep.subr.mxu0 0.0
    %2758 = vmatpush1.xpose.msra.mxu0 0.0
    %2759 = vmatprep.subr.mxu0 0.0
    %2760 = vmatpush1.xpose.msra.mxu0 0.0
    %2761 = vmatprep.subr.mxu0 0.0
    %2762 = vmatpush1.xpose.msra.mxu0 0.0
    %2763 = vmatprep.subr.mxu0 0.0
    %2764 = vmatpush1.xpose.msra.mxu0 0.0
    %2765 = vmatprep.subr.mxu0 0.0
    %2766 = vmatpush1.xpose.msra.mxu0 0.0
    %2767 = vmatprep.subr.mxu0 0.0
    %2768 = vmatpush1.xpose.msra.mxu0 0.0
    %2769 = vmatprep.subr.mxu0 0.0
    %2770 = vmatpush1.xpose.msra.mxu0 0.0
    %2771 = vmatprep.subr.mxu0 0.0
    %2772 = vmatpush1.xpose.msra.mxu0 0.0
    %2773 = vmatprep.subr.mxu0 0.0
    %2774 = vmatpush1.xpose.msra.mxu0 0.0
    %2775 = vmatprep.subr.mxu0 0.0
    %2776 = vmatpush1.xpose.msra.mxu0 0.0
    %2777 = vmatprep.subr.mxu0 0.0
    %2778 = vmatpush1.xpose.msra.mxu0 0.0
    %2779 = vmatprep.subr.mxu0 0.0
    %2780 = vmatpush1.xpose.msra.mxu0 0.0
    %2781 = vmatprep.subr.mxu0 0.0
    %2782 = vmatpush1.xpose.msra.mxu0 0.0
    %2783 = vmatprep.subr.mxu0 0.0
    %2784 = vmatpush1.xpose.msra.mxu0 0.0
    %2785 = vmatprep.subr.mxu0 0.0
    %2786 = vmatpush1.xpose.msra.mxu0 0.0
    %2787 = vmatprep.subr.mxu0 0.0
    %2788 = vmatpush1.xpose.msra.mxu0 0.0
    %2789 = vmatprep.subr.mxu0 0.0
    %2790 = vmatpush1.xpose.msra.mxu0 0.0
    %2791 = vmatprep.mubr.f32.mxu0 0.0
    %2792 = vmatmul.mubr.f32.gmra.mrb[0].mxu0 %v2723
    %v2793 = vpop.f32.mrb[0].mxu0
    %v2794 = vadd.f32 0.0, %v2793
    %v2795 = vpop.f32.mrb[0].mxu0
    %2796 = vdwg.mxu0
    %v2797 = vmul.f32 %v2794, 0.35355338
    %v2798 = vadd.f32 %v2797, %v351
    %v2799 = vsel %vm492, %v2798, -inf
    %2800 = vmax.xlane.f32.xlu0 %v2799
    %v2801 = vpop.xlane.xlu0 %2800
    %v2802 = vsub.f32 %v2798, %v2801
    %v2803 = vmul.f32 %v2802, 1.442695
    %v2804 = vpow.pop %v2803
    %v2805 = vsel %vm492, %v2804, 0.0
    %2806 = vadd.xlane.f32.xlu0 %v2805
    %v2807 = vpop.xlane.xlu0 %2806
    %v2808 = vrcp.pop %v2807
    %v2809 = vmul.f32 %v2804, %v2808
    %2810 = vrot.lane.b32.xlu0 %v2197, 40
    %v2811 = vpop.permute.xlu0 %2810
    %v2814 = vsel %vm492, %v2809, 0
    %2816 = vmatprep.subr.mxu0 0.0
    %2817 = vmatpush1.msra.mxu0 %v2811
    %2818 = vmatprep.subr.mxu0 0.0
    %2819 = vmatpush1.msra.mxu0 0.0
    %2820 = vmatprep.subr.mxu0 0.0
    %2821 = vmatpush1.msra.mxu0 0.0
    %2822 = vmatprep.subr.mxu0 0.0
    %2823 = vmatpush1.msra.mxu0 0.0
    %2824 = vmatprep.subr.mxu0 0.0
    %2825 = vmatpush1.msra.mxu0 0.0
    %2826 = vmatprep.subr.mxu0 0.0
    %2827 = vmatpush1.msra.mxu0 0.0
    %2828 = vmatprep.subr.mxu0 0.0
    %2829 = vmatpush1.msra.mxu0 0.0
    %2830 = vmatprep.subr.mxu0 0.0
    %2831 = vmatpush1.msra.mxu0 0.0
    %2832 = vmatprep.subr.mxu0 0.0
    %2833 = vmatpush1.msra.mxu0 0.0
    %2834 = vmatprep.subr.mxu0 0.0
    %2835 = vmatpush1.msra.mxu0 0.0
    %2836 = vmatprep.subr.mxu0 0.0
    %2837 = vmatpush1.msra.mxu0 0.0
    %2838 = vmatprep.subr.mxu0 0.0
    %2839 = vmatpush1.msra.mxu0 0.0
    %2840 = vmatprep.subr.mxu0 0.0
    %2841 = vmatpush1.msra.mxu0 0.0
    %2842 = vmatprep.subr.mxu0 0.0
    %2843 = vmatpush1.msra.mxu0 0.0
    %2844 = vmatprep.subr.mxu0 0.0
    %2845 = vmatpush1.msra.mxu0 0.0
    %2846 = vmatprep.subr.mxu0 0.0
    %2847 = vmatpush1.msra.mxu0 0.0
    %2848 = vmatprep.subr.mxu0 0.0
    %2849 = vmatpush1.msra.mxu0 0.0
    %2850 = vmatprep.subr.mxu0 0.0
    %2851 = vmatpush1.msra.mxu0 0.0
    %2852 = vmatprep.subr.mxu0 0.0
    %2853 = vmatpush1.msra.mxu0 0.0
    %2854 = vmatprep.subr.mxu0 0.0
    %2855 = vmatpush1.msra.mxu0 0.0
    %2856 = vmatprep.subr.mxu0 0.0
    %2857 = vmatpush1.msra.mxu0 0.0
    %2858 = vmatprep.subr.mxu0 0.0
    %2859 = vmatpush1.msra.mxu0 0.0
    %2860 = vmatprep.subr.mxu0 0.0
    %2861 = vmatpush1.msra.mxu0 0.0
    %2862 = vmatprep.subr.mxu0 0.0
    %2863 = vmatpush1.msra.mxu0 0.0
    %2864 = vmatprep.subr.mxu0 0.0
    %2865 = vmatpush1.msra.mxu0 0.0
    %2866 = vmatprep.subr.mxu0 0.0
    %2867 = vmatpush1.msra.mxu0 0.0
    %2868 = vmatprep.subr.mxu0 0.0
    %2869 = vmatpush1.msra.mxu0 0.0
    %2870 = vmatprep.subr.mxu0 0.0
    %2871 = vmatpush1.msra.mxu0 0.0
    %2872 = vmatprep.subr.mxu0 0.0
    %2873 = vmatpush1.msra.mxu0 0.0
    %2874 = vmatprep.subr.mxu0 0.0
    %2875 = vmatpush1.msra.mxu0 0.0
    %2876 = vmatprep.subr.mxu0 0.0
    %2877 = vmatpush1.msra.mxu0 0.0
    %2878 = vmatprep.subr.mxu0 0.0
    %2879 = vmatpush1.msra.mxu0 0.0
    %2880 = vmatprep.mubr.f32.mxu0 0.0
    %2881 = vmatmul.mubr.f32.gmra.mrb[0].mxu0 %v2814
    %v2882 = vpop.f32.mrb[0].mxu0
    %v2883 = vadd.f32 0.0, %v2882
    %v2884 = vpop.f32.mrb[0].mxu0
    %2885 = vdwg.mxu0
    %2887 = vrot.lane.b32.xlu0 %v2883, 24
    %v2888 = vpop.permute.xlu0 %2887
    %2890 = vst.msk [vmem:[#allocation2] sm:$0xff] %vm1175, %v2888
    %2892 = vrot.lane.b32.xlu0 %v2202, 96
    %v2893 = vpop.permute.xlu0 %2892
    %v2895 = vsel %vm492, %v2206, 0
    %v2897 = vsel %vm492, %v2893, 0
    %2899 = vmatprep.subr.mxu0 0.0
    %2900 = vmatpush1.xpose.msra.mxu0 %v2897
    %2901 = vmatprep.subr.mxu0 0.0
    %2902 = vmatpush1.xpose.msra.mxu0 0.0
    %2903 = vmatprep.subr.mxu0 0.0
    %2904 = vmatpush1.xpose.msra.mxu0 0.0
    %2905 = vmatprep.subr.mxu0 0.0
    %2906 = vmatpush1.xpose.msra.mxu0 0.0
    %2907 = vmatprep.subr.mxu0 0.0
    %2908 = vmatpush1.xpose.msra.mxu0 0.0
    %2909 = vmatprep.subr.mxu0 0.0
    %2910 = vmatpush1.xpose.msra.mxu0 0.0
    %2911 = vmatprep.subr.mxu0 0.0
    %2912 = vmatpush1.xpose.msra.mxu0 0.0
    %2913 = vmatprep.subr.mxu0 0.0
    %2914 = vmatpush1.xpose.msra.mxu0 0.0
    %2915 = vmatprep.subr.mxu0 0.0
    %2916 = vmatpush1.xpose.msra.mxu0 0.0
    %2917 = vmatprep.subr.mxu0 0.0
    %2918 = vmatpush1.xpose.msra.mxu0 0.0
    %2919 = vmatprep.subr.mxu0 0.0
    %2920 = vmatpush1.xpose.msra.mxu0 0.0
    %2921 = vmatprep.subr.mxu0 0.0
    %2922 = vmatpush1.xpose.msra.mxu0 0.0
    %2923 = vmatprep.subr.mxu0 0.0
    %2924 = vmatpush1.xpose.msra.mxu0 0.0
    %2925 = vmatprep.subr.mxu0 0.0
    %2926 = vmatpush1.xpose.msra.mxu0 0.0
    %2927 = vmatprep.subr.mxu0 0.0
    %2928 = vmatpush1.xpose.msra.mxu0 0.0
    %2929 = vmatprep.subr.mxu0 0.0
    %2930 = vmatpush1.xpose.msra.mxu0 0.0
    %2931 = vmatprep.subr.mxu0 0.0
    %2932 = vmatpush1.xpose.msra.mxu0 0.0
    %2933 = vmatprep.subr.mxu0 0.0
    %2934 = vmatpush1.xpose.msra.mxu0 0.0
    %2935 = vmatprep.subr.mxu0 0.0
    %2936 = vmatpush1.xpose.msra.mxu0 0.0
    %2937 = vmatprep.subr.mxu0 0.0
    %2938 = vmatpush1.xpose.msra.mxu0 0.0
    %2939 = vmatprep.subr.mxu0 0.0
    %2940 = vmatpush1.xpose.msra.mxu0 0.0
    %2941 = vmatprep.subr.mxu0 0.0
    %2942 = vmatpush1.xpose.msra.mxu0 0.0
    %2943 = vmatprep.subr.mxu0 0.0
    %2944 = vmatpush1.xpose.msra.mxu0 0.0
    %2945 = vmatprep.subr.mxu0 0.0
    %2946 = vmatpush1.xpose.msra.mxu0 0.0
    %2947 = vmatprep.subr.mxu0 0.0
    %2948 = vmatpush1.xpose.msra.mxu0 0.0
    %2949 = vmatprep.subr.mxu0 0.0
    %2950 = vmatpush1.xpose.msra.mxu0 0.0
    %2951 = vmatprep.subr.mxu0 0.0
    %2952 = vmatpush1.xpose.msra.mxu0 0.0
    %2953 = vmatprep.subr.mxu0 0.0
    %2954 = vmatpush1.xpose.msra.mxu0 0.0
    %2955 = vmatprep.subr.mxu0 0.0
    %2956 = vmatpush1.xpose.msra.mxu0 0.0
    %2957 = vmatprep.subr.mxu0 0.0
    %2958 = vmatpush1.xpose.msra.mxu0 0.0
    %2959 = vmatprep.subr.mxu0 0.0
    %2960 = vmatpush1.xpose.msra.mxu0 0.0
    %2961 = vmatprep.subr.mxu0 0.0
    %2962 = vmatpush1.xpose.msra.mxu0 0.0
    %2963 = vmatprep.mubr.f32.mxu0 0.0
    %2964 = vmatmul.mubr.f32.gmra.mrb[0].mxu0 %v2895
    %v2965 = vpop.f32.mrb[0].mxu0
    %v2966 = vadd.f32 0.0, %v2965
    %v2967 = vpop.f32.mrb[0].mxu0
    %2968 = vdwg.mxu0
    %v2969 = vmul.f32 %v2966, 0.35355338
    %v2970 = vadd.f32 %v2969, %v352
    %v2971 = vsel %vm492, %v2970, -inf
    %2972 = vmax.xlane.f32.xlu0 %v2971
    %v2973 = vpop.xlane.xlu0 %2972
    %v2974 = vsub.f32 %v2970, %v2973
    %v2975 = vmul.f32 %v2974, 1.442695
    %v2976 = vpow.pop %v2975
    %v2977 = vsel %vm492, %v2976, 0.0
    %2978 = vadd.xlane.f32.xlu0 %v2977
    %v2979 = vpop.xlane.xlu0 %2978
    %v2980 = vrcp.pop %v2979
    %v2981 = vmul.f32 %v2976, %v2980
    %2982 = vrot.lane.b32.xlu0 %v2202, 64
    %v2983 = vpop.permute.xlu0 %2982
    %v2986 = vsel %vm492, %v2981, 0
    %2988 = vmatprep.subr.mxu0 0.0
    %2989 = vmatpush1.msra.mxu0 %v2983
    %2990 = vmatprep.subr.mxu0 0.0
    %2991 = vmatpush1.msra.mxu0 0.0
    %2992 = vmatprep.subr.mxu0 0.0
    %2993 = vmatpush1.msra.mxu0 0.0
    %2994 = vmatprep.subr.mxu0 0.0
    %2995 = vmatpush1.msra.mxu0 0.0
    %2996 = vmatprep.subr.mxu0 0.0
    %2997 = vmatpush1.msra.mxu0 0.0
    %2998 = vmatprep.subr.mxu0 0.0
    %2999 = vmatpush1.msra.mxu0 0.0
    %3000 = vmatprep.subr.mxu0 0.0
    %3001 = vmatpush1.msra.mxu0 0.0
    %3002 = vmatprep.subr.mxu0 0.0
    %3003 = vmatpush1.msra.mxu0 0.0
    %3004 = vmatprep.subr.mxu0 0.0
    %3005 = vmatpush1.msra.mxu0 0.0
    %3006 = vmatprep.subr.mxu0 0.0
    %3007 = vmatpush1.msra.mxu0 0.0
    %3008 = vmatprep.subr.mxu0 0.0
    %3009 = vmatpush1.msra.mxu0 0.0
    %3010 = vmatprep.subr.mxu0 0.0
    %3011 = vmatpush1.msra.mxu0 0.0
    %3012 = vmatprep.subr.mxu0 0.0
    %3013 = vmatpush1.msra.mxu0 0.0
    %3014 = vmatprep.subr.mxu0 0.0
    %3015 = vmatpush1.msra.mxu0 0.0
    %3016 = vmatprep.subr.mxu0 0.0
    %3017 = vmatpush1.msra.mxu0 0.0
    %3018 = vmatprep.subr.mxu0 0.0
    %3019 = vmatpush1.msra.mxu0 0.0
    %3020 = vmatprep.subr.mxu0 0.0
    %3021 = vmatpush1.msra.mxu0 0.0
    %3022 = vmatprep.subr.mxu0 0.0
    %3023 = vmatpush1.msra.mxu0 0.0
    %3024 = vmatprep.subr.mxu0 0.0
    %3025 = vmatpush1.msra.mxu0 0.0
    %3026 = vmatprep.subr.mxu0 0.0
    %3027 = vmatpush1.msra.mxu0 0.0
    %3028 = vmatprep.subr.mxu0 0.0
    %3029 = vmatpush1.msra.mxu0 0.0
    %3030 = vmatprep.subr.mxu0 0.0
    %3031 = vmatpush1.msra.mxu0 0.0
    %3032 = vmatprep.subr.mxu0 0.0
    %3033 = vmatpush1.msra.mxu0 0.0
    %3034 = vmatprep.subr.mxu0 0.0
    %3035 = vmatpush1.msra.mxu0 0.0
    %3036 = vmatprep.subr.mxu0 0.0
    %3037 = vmatpush1.msra.mxu0 0.0
    %3038 = vmatprep.subr.mxu0 0.0
    %3039 = vmatpush1.msra.mxu0 0.0
    %3040 = vmatprep.subr.mxu0 0.0
    %3041 = vmatpush1.msra.mxu0 0.0
    %3042 = vmatprep.subr.mxu0 0.0
    %3043 = vmatpush1.msra.mxu0 0.0
    %3044 = vmatprep.subr.mxu0 0.0
    %3045 = vmatpush1.msra.mxu0 0.0
    %3046 = vmatprep.subr.mxu0 0.0
    %3047 = vmatpush1.msra.mxu0 0.0
    %3048 = vmatprep.subr.mxu0 0.0
    %3049 = vmatpush1.msra.mxu0 0.0
    %3050 = vmatprep.subr.mxu0 0.0
    %3051 = vmatpush1.msra.mxu0 0.0
    %3052 = vmatprep.mubr.f32.mxu0 0.0
    %3053 = vmatmul.mubr.f32.gmra.mrb[0].mxu0 %v2986
    %v3054 = vpop.f32.mrb[0].mxu0
    %v3055 = vadd.f32 0.0, %v3054
    %v3056 = vpop.f32.mrb[0].mxu0
    %3057 = vdwg.mxu0
    %3058 = vst.msk [vmem:[#allocation2 + $0x8] sm:$0xff] %vm492, %v3055
    %3059 = vrot.lane.b32.xlu0 %v2206, 120
    %v3060 = vpop.permute.xlu0 %3059
    %3061 = vrot.lane.b32.xlu0 %v2202, 88
    %v3062 = vpop.permute.xlu0 %3061
    %v3063 = vsel %vm492, %v3060, 0
    %v3065 = vsel %vm492, %v3062, 0
    %3067 = vmatprep.subr.mxu0 0.0
    %3068 = vmatpush1.xpose.msra.mxu0 %v3065
    %3069 = vmatprep.subr.mxu0 0.0
    %3070 = vmatpush1.xpose.msra.mxu0 0.0
    %3071 = vmatprep.subr.mxu0 0.0
    %3072 = vmatpush1.xpose.msra.mxu0 0.0
    %3073 = vmatprep.subr.mxu0 0.0
    %3074 = vmatpush1.xpose.msra.mxu0 0.0
    %3075 = vmatprep.subr.mxu0 0.0
    %3076 = vmatpush1.xpose.msra.mxu0 0.0
    %3077 = vmatprep.subr.mxu0 0.0
    %3078 = vmatpush1.xpose.msra.mxu0 0.0
    %3079 = vmatprep.subr.mxu0 0.0
    %3080 = vmatpush1.xpose.msra.mxu0 0.0
    %3081 = vmatprep.subr.mxu0 0.0
    %3082 = vmatpush1.xpose.msra.mxu0 0.0
    %3083 = vmatprep.subr.mxu0 0.0
    %3084 = vmatpush1.xpose.msra.mxu0 0.0
    %3085 = vmatprep.subr.mxu0 0.0
    %3086 = vmatpush1.xpose.msra.mxu0 0.0
    %3087 = vmatprep.subr.mxu0 0.0
    %3088 = vmatpush1.xpose.msra.mxu0 0.0
    %3089 = vmatprep.subr.mxu0 0.0
    %3090 = vmatpush1.xpose.msra.mxu0 0.0
    %3091 = vmatprep.subr.mxu0 0.0
    %3092 = vmatpush1.xpose.msra.mxu0 0.0
    %3093 = vmatprep.subr.mxu0 0.0
    %3094 = vmatpush1.xpose.msra.mxu0 0.0
    %3095 = vmatprep.subr.mxu0 0.0
    %3096 = vmatpush1.xpose.msra.mxu0 0.0
    %3097 = vmatprep.subr.mxu0 0.0
    %3098 = vmatpush1.xpose.msra.mxu0 0.0
    %3099 = vmatprep.subr.mxu0 0.0
    %3100 = vmatpush1.xpose.msra.mxu0 0.0
    %3101 = vmatprep.subr.mxu0 0.0
    %3102 = vmatpush1.xpose.msra.mxu0 0.0
    %3103 = vmatprep.subr.mxu0 0.0
    %3104 = vmatpush1.xpose.msra.mxu0 0.0
    %3105 = vmatprep.subr.mxu0 0.0
    %3106 = vmatpush1.xpose.msra.mxu0 0.0
    %3107 = vmatprep.subr.mxu0 0.0
    %3108 = vmatpush1.xpose.msra.mxu0 0.0
    %3109 = vmatprep.subr.mxu0 0.0
    %3110 = vmatpush1.xpose.msra.mxu0 0.0
    %3111 = vmatprep.subr.mxu0 0.0
    %3112 = vmatpush1.xpose.msra.mxu0 0.0
    %3113 = vmatprep.subr.mxu0 0.0
    %3114 = vmatpush1.xpose.msra.mxu0 0.0
    %3115 = vmatprep.subr.mxu0 0.0
    %3116 = vmatpush1.xpose.msra.mxu0 0.0
    %3117 = vmatprep.subr.mxu0 0.0
    %3118 = vmatpush1.xpose.msra.mxu0 0.0
    %3119 = vmatprep.subr.mxu0 0.0
    %3120 = vmatpush1.xpose.msra.mxu0 0.0
    %3121 = vmatprep.subr.mxu0 0.0
    %3122 = vmatpush1.xpose.msra.mxu0 0.0
    %3123 = vmatprep.subr.mxu0 0.0
    %3124 = vmatpush1.xpose.msra.mxu0 0.0
    %3125 = vmatprep.subr.mxu0 0.0
    %3126 = vmatpush1.xpose.msra.mxu0 0.0
    %3127 = vmatprep.subr.mxu0 0.0
    %3128 = vmatpush1.xpose.msra.mxu0 0.0
    %3129 = vmatprep.subr.mxu0 0.0
    %3130 = vmatpush1.xpose.msra.mxu0 0.0
    %3131 = vmatprep.mubr.f32.mxu0 0.0
    %3132 = vmatmul.mubr.f32.gmra.mrb[0].mxu0 %v3063
    %v3133 = vpop.f32.mrb[0].mxu0
    %v3134 = vadd.f32 0.0, %v3133
    %v3135 = vpop.f32.mrb[0].mxu0
    %3136 = vdwg.mxu0
    %v3137 = vmul.f32 %v3134, 0.35355338
    %v3138 = vadd.f32 %v3137, %v352
    %v3139 = vsel %vm492, %v3138, -inf
    %3140 = vmax.xlane.f32.xlu0 %v3139
    %v3141 = vpop.xlane.xlu0 %3140
    %v3142 = vsub.f32 %v3138, %v3141
    %v3143 = vmul.f32 %v3142, 1.442695
    %v3144 = vpow.pop %v3143
    %v3145 = vsel %vm492, %v3144, 0.0
    %3146 = vadd.xlane.f32.xlu0 %v3145
    %v3147 = vpop.xlane.xlu0 %3146
    %v3148 = vrcp.pop %v3147
    %v3149 = vmul.f32 %v3144, %v3148
    %3150 = vrot.lane.b32.xlu0 %v2202, 56
    %v3151 = vpop.permute.xlu0 %3150
    %v3154 = vsel %vm492, %v3149, 0
    %3156 = vmatprep.subr.mxu0 0.0
    %3157 = vmatpush1.msra.mxu0 %v3151
    %3158 = vmatprep.subr.mxu0 0.0
    %3159 = vmatpush1.msra.mxu0 0.0
    %3160 = vmatprep.subr.mxu0 0.0
    %3161 = vmatpush1.msra.mxu0 0.0
    %3162 = vmatprep.subr.mxu0 0.0
    %3163 = vmatpush1.msra.mxu0 0.0
    %3164 = vmatprep.subr.mxu0 0.0
    %3165 = vmatpush1.msra.mxu0 0.0
    %3166 = vmatprep.subr.mxu0 0.0
    %3167 = vmatpush1.msra.mxu0 0.0
    %3168 = vmatprep.subr.mxu0 0.0
    %3169 = vmatpush1.msra.mxu0 0.0
    %3170 = vmatprep.subr.mxu0 0.0
    %3171 = vmatpush1.msra.mxu0 0.0
    %3172 = vmatprep.subr.mxu0 0.0
    %3173 = vmatpush1.msra.mxu0 0.0
    %3174 = vmatprep.subr.mxu0 0.0
    %3175 = vmatpush1.msra.mxu0 0.0
    %3176 = vmatprep.subr.mxu0 0.0
    %3177 = vmatpush1.msra.mxu0 0.0
    %3178 = vmatprep.subr.mxu0 0.0
    %3179 = vmatpush1.msra.mxu0 0.0
    %3180 = vmatprep.subr.mxu0 0.0
    %3181 = vmatpush1.msra.mxu0 0.0
    %3182 = vmatprep.subr.mxu0 0.0
    %3183 = vmatpush1.msra.mxu0 0.0
    %3184 = vmatprep.subr.mxu0 0.0
    %3185 = vmatpush1.msra.mxu0 0.0
    %3186 = vmatprep.subr.mxu0 0.0
    %3187 = vmatpush1.msra.mxu0 0.0
    %3188 = vmatprep.subr.mxu0 0.0
    %3189 = vmatpush1.msra.mxu0 0.0
    %3190 = vmatprep.subr.mxu0 0.0
    %3191 = vmatpush1.msra.mxu0 0.0
    %3192 = vmatprep.subr.mxu0 0.0
    %3193 = vmatpush1.msra.mxu0 0.0
    %3194 = vmatprep.subr.mxu0 0.0
    %3195 = vmatpush1.msra.mxu0 0.0
    %3196 = vmatprep.subr.mxu0 0.0
    %3197 = vmatpush1.msra.mxu0 0.0
    %3198 = vmatprep.subr.mxu0 0.0
    %3199 = vmatpush1.msra.mxu0 0.0
    %3200 = vmatprep.subr.mxu0 0.0
    %3201 = vmatpush1.msra.mxu0 0.0
    %3202 = vmatprep.subr.mxu0 0.0
    %3203 = vmatpush1.msra.mxu0 0.0
    %3204 = vmatprep.subr.mxu0 0.0
    %3205 = vmatpush1.msra.mxu0 0.0
    %3206 = vmatprep.subr.mxu0 0.0
    %3207 = vmatpush1.msra.mxu0 0.0
    %3208 = vmatprep.subr.mxu0 0.0
    %3209 = vmatpush1.msra.mxu0 0.0
    %3210 = vmatprep.subr.mxu0 0.0
    %3211 = vmatpush1.msra.mxu0 0.0
    %3212 = vmatprep.subr.mxu0 0.0
    %3213 = vmatpush1.msra.mxu0 0.0
    %3214 = vmatprep.subr.mxu0 0.0
    %3215 = vmatpush1.msra.mxu0 0.0
    %3216 = vmatprep.subr.mxu0 0.0
    %3217 = vmatpush1.msra.mxu0 0.0
    %3218 = vmatprep.subr.mxu0 0.0
    %3219 = vmatpush1.msra.mxu0 0.0
    %3220 = vmatprep.mubr.f32.mxu0 0.0
    %3221 = vmatmul.mubr.f32.gmra.mrb[0].mxu0 %v3154
    %v3222 = vpop.f32.mrb[0].mxu0
    %v3223 = vadd.f32 0.0, %v3222
    %v3224 = vpop.f32.mrb[0].mxu0
    %3225 = vdwg.mxu0
    %3227 = vrot.lane.b32.xlu0 %v3223, 8
    %v3228 = vpop.permute.xlu0 %3227
    %3230 = vst.msk [vmem:[#allocation2 + $0x8] sm:$0xff] %vm829, %v3228
    %3231 = vrot.lane.b32.xlu0 %v2206, 112
    %v3232 = vpop.permute.xlu0 %3231
    %3233 = vrot.lane.b32.xlu0 %v2202, 80
    %v3234 = vpop.permute.xlu0 %3233
    %v3235 = vsel %vm492, %v3232, 0
    %v3237 = vsel %vm492, %v3234, 0
    %3239 = vmatprep.subr.mxu0 0.0
    %3240 = vmatpush1.xpose.msra.mxu0 %v3237
    %3241 = vmatprep.subr.mxu0 0.0
    %3242 = vmatpush1.xpose.msra.mxu0 0.0
    %3243 = vmatprep.subr.mxu0 0.0
    %3244 = vmatpush1.xpose.msra.mxu0 0.0
    %3245 = vmatprep.subr.mxu0 0.0
    %3246 = vmatpush1.xpose.msra.mxu0 0.0
    %3247 = vmatprep.subr.mxu0 0.0
    %3248 = vmatpush1.xpose.msra.mxu0 0.0
    %3249 = vmatprep.subr.mxu0 0.0
    %3250 = vmatpush1.xpose.msra.mxu0 0.0
    %3251 = vmatprep.subr.mxu0 0.0
    %3252 = vmatpush1.xpose.msra.mxu0 0.0
    %3253 = vmatprep.subr.mxu0 0.0
    %3254 = vmatpush1.xpose.msra.mxu0 0.0
    %3255 = vmatprep.subr.mxu0 0.0
    %3256 = vmatpush1.xpose.msra.mxu0 0.0
    %3257 = vmatprep.subr.mxu0 0.0
    %3258 = vmatpush1.xpose.msra.mxu0 0.0
    %3259 = vmatprep.subr.mxu0 0.0
    %3260 = vmatpush1.xpose.msra.mxu0 0.0
    %3261 = vmatprep.subr.mxu0 0.0
    %3262 = vmatpush1.xpose.msra.mxu0 0.0
    %3263 = vmatprep.subr.mxu0 0.0
    %3264 = vmatpush1.xpose.msra.mxu0 0.0
    %3265 = vmatprep.subr.mxu0 0.0
    %3266 = vmatpush1.xpose.msra.mxu0 0.0
    %3267 = vmatprep.subr.mxu0 0.0
    %3268 = vmatpush1.xpose.msra.mxu0 0.0
    %3269 = vmatprep.subr.mxu0 0.0
    %3270 = vmatpush1.xpose.msra.mxu0 0.0
    %3271 = vmatprep.subr.mxu0 0.0
    %3272 = vmatpush1.xpose.msra.mxu0 0.0
    %3273 = vmatprep.subr.mxu0 0.0
    %3274 = vmatpush1.xpose.msra.mxu0 0.0
    %3275 = vmatprep.subr.mxu0 0.0
    %3276 = vmatpush1.xpose.msra.mxu0 0.0
    %3277 = vmatprep.subr.mxu0 0.0
    %3278 = vmatpush1.xpose.msra.mxu0 0.0
    %3279 = vmatprep.subr.mxu0 0.0
    %3280 = vmatpush1.xpose.msra.mxu0 0.0
    %3281 = vmatprep.subr.mxu0 0.0
    %3282 = vmatpush1.xpose.msra.mxu0 0.0
    %3283 = vmatprep.subr.mxu0 0.0
    %3284 = vmatpush1.xpose.msra.mxu0 0.0
    %3285 = vmatprep.subr.mxu0 0.0
    %3286 = vmatpush1.xpose.msra.mxu0 0.0
    %3287 = vmatprep.subr.mxu0 0.0
    %3288 = vmatpush1.xpose.msra.mxu0 0.0
    %3289 = vmatprep.subr.mxu0 0.0
    %3290 = vmatpush1.xpose.msra.mxu0 0.0
    %3291 = vmatprep.subr.mxu0 0.0
    %3292 = vmatpush1.xpose.msra.mxu0 0.0
    %3293 = vmatprep.subr.mxu0 0.0
    %3294 = vmatpush1.xpose.msra.mxu0 0.0
    %3295 = vmatprep.subr.mxu0 0.0
    %3296 = vmatpush1.xpose.msra.mxu0 0.0
    %3297 = vmatprep.subr.mxu0 0.0
    %3298 = vmatpush1.xpose.msra.mxu0 0.0
    %3299 = vmatprep.subr.mxu0 0.0
    %3300 = vmatpush1.xpose.msra.mxu0 0.0
    %3301 = vmatprep.subr.mxu0 0.0
    %3302 = vmatpush1.xpose.msra.mxu0 0.0
    %3303 = vmatprep.mubr.f32.mxu0 0.0
    %3304 = vmatmul.mubr.f32.gmra.mrb[0].mxu0 %v3235
    %v3305 = vpop.f32.mrb[0].mxu0
    %v3306 = vadd.f32 0.0, %v3305
    %v3307 = vpop.f32.mrb[0].mxu0
    %3308 = vdwg.mxu0
    %v3309 = vmul.f32 %v3306, 0.35355338
    %v3310 = vadd.f32 %v3309, %v352
    %v3311 = vsel %vm492, %v3310, -inf
    %3312 = vmax.xlane.f32.xlu0 %v3311
    %v3313 = vpop.xlane.xlu0 %3312
    %v3314 = vsub.f32 %v3310, %v3313
    %v3315 = vmul.f32 %v3314, 1.442695
    %v3316 = vpow.pop %v3315
    %v3317 = vsel %vm492, %v3316, 0.0
    %3318 = vadd.xlane.f32.xlu0 %v3317
    %v3319 = vpop.xlane.xlu0 %3318
    %v3320 = vrcp.pop %v3319
    %v3321 = vmul.f32 %v3316, %v3320
    %3322 = vrot.lane.b32.xlu0 %v2202, 48
    %v3323 = vpop.permute.xlu0 %3322
    %v3326 = vsel %vm492, %v3321, 0
    %3328 = vmatprep.subr.mxu0 0.0
    %3329 = vmatpush1.msra.mxu0 %v3323
    %3330 = vmatprep.subr.mxu0 0.0
    %3331 = vmatpush1.msra.mxu0 0.0
    %3332 = vmatprep.subr.mxu0 0.0
    %3333 = vmatpush1.msra.mxu0 0.0
    %3334 = vmatprep.subr.mxu0 0.0
    %3335 = vmatpush1.msra.mxu0 0.0
    %3336 = vmatprep.subr.mxu0 0.0
    %3337 = vmatpush1.msra.mxu0 0.0
    %3338 = vmatprep.subr.mxu0 0.0
    %3339 = vmatpush1.msra.mxu0 0.0
    %3340 = vmatprep.subr.mxu0 0.0
    %3341 = vmatpush1.msra.mxu0 0.0
    %3342 = vmatprep.subr.mxu0 0.0
    %3343 = vmatpush1.msra.mxu0 0.0
    %3344 = vmatprep.subr.mxu0 0.0
    %3345 = vmatpush1.msra.mxu0 0.0
    %3346 = vmatprep.subr.mxu0 0.0
    %3347 = vmatpush1.msra.mxu0 0.0
    %3348 = vmatprep.subr.mxu0 0.0
    %3349 = vmatpush1.msra.mxu0 0.0
    %3350 = vmatprep.subr.mxu0 0.0
    %3351 = vmatpush1.msra.mxu0 0.0
    %3352 = vmatprep.subr.mxu0 0.0
    %3353 = vmatpush1.msra.mxu0 0.0
    %3354 = vmatprep.subr.mxu0 0.0
    %3355 = vmatpush1.msra.mxu0 0.0
    %3356 = vmatprep.subr.mxu0 0.0
    %3357 = vmatpush1.msra.mxu0 0.0
    %3358 = vmatprep.subr.mxu0 0.0
    %3359 = vmatpush1.msra.mxu0 0.0
    %3360 = vmatprep.subr.mxu0 0.0
    %3361 = vmatpush1.msra.mxu0 0.0
    %3362 = vmatprep.subr.mxu0 0.0
    %3363 = vmatpush1.msra.mxu0 0.0
    %3364 = vmatprep.subr.mxu0 0.0
    %3365 = vmatpush1.msra.mxu0 0.0
    %3366 = vmatprep.subr.mxu0 0.0
    %3367 = vmatpush1.msra.mxu0 0.0
    %3368 = vmatprep.subr.mxu0 0.0
    %3369 = vmatpush1.msra.mxu0 0.0
    %3370 = vmatprep.subr.mxu0 0.0
    %3371 = vmatpush1.msra.mxu0 0.0
    %3372 = vmatprep.subr.mxu0 0.0
    %3373 = vmatpush1.msra.mxu0 0.0
    %3374 = vmatprep.subr.mxu0 0.0
    %3375 = vmatpush1.msra.mxu0 0.0
    %3376 = vmatprep.subr.mxu0 0.0
    %3377 = vmatpush1.msra.mxu0 0.0
    %3378 = vmatprep.subr.mxu0 0.0
    %3379 = vmatpush1.msra.mxu0 0.0
    %3380 = vmatprep.subr.mxu0 0.0
    %3381 = vmatpush1.msra.mxu0 0.0
    %3382 = vmatprep.subr.mxu0 0.0
    %3383 = vmatpush1.msra.mxu0 0.0
    %3384 = vmatprep.subr.mxu0 0.0
    %3385 = vmatpush1.msra.mxu0 0.0
    %3386 = vmatprep.subr.mxu0 0.0
    %3387 = vmatpush1.msra.mxu0 0.0
    %3388 = vmatprep.subr.mxu0 0.0
    %3389 = vmatpush1.msra.mxu0 0.0
    %3390 = vmatprep.subr.mxu0 0.0
    %3391 = vmatpush1.msra.mxu0 0.0
    %3392 = vmatprep.mubr.f32.mxu0 0.0
    %3393 = vmatmul.mubr.f32.gmra.mrb[0].mxu0 %v3326
    %v3394 = vpop.f32.mrb[0].mxu0
    %v3395 = vadd.f32 0.0, %v3394
    %v3396 = vpop.f32.mrb[0].mxu0
    %3397 = vdwg.mxu0
    %3399 = vrot.lane.b32.xlu0 %v3395, 16
    %v3400 = vpop.permute.xlu0 %3399
    %3402 = vst.msk [vmem:[#allocation2 + $0x8] sm:$0xff] %vm1002, %v3400
    %3403 = vrot.lane.b32.xlu0 %v2206, 104
    %v3404 = vpop.permute.xlu0 %3403
    %3405 = vrot.lane.b32.xlu0 %v2202, 72
    %v3406 = vpop.permute.xlu0 %3405
    %v3407 = vsel %vm492, %v3404, 0
    %v3409 = vsel %vm492, %v3406, 0
    %3411 = vmatprep.subr.mxu0 0.0
    %3412 = vmatpush1.xpose.msra.mxu0 %v3409
    %3413 = vmatprep.subr.mxu0 0.0
    %3414 = vmatpush1.xpose.msra.mxu0 0.0
    %3415 = vmatprep.subr.mxu0 0.0
    %3416 = vmatpush1.xpose.msra.mxu0 0.0
    %3417 = vmatprep.subr.mxu0 0.0
    %3418 = vmatpush1.xpose.msra.mxu0 0.0
    %3419 = vmatprep.subr.mxu0 0.0
    %3420 = vmatpush1.xpose.msra.mxu0 0.0
    %3421 = vmatprep.subr.mxu0 0.0
    %3422 = vmatpush1.xpose.msra.mxu0 0.0
    %3423 = vmatprep.subr.mxu0 0.0
    %3424 = vmatpush1.xpose.msra.mxu0 0.0
    %3425 = vmatprep.subr.mxu0 0.0
    %3426 = vmatpush1.xpose.msra.mxu0 0.0
    %3427 = vmatprep.subr.mxu0 0.0
    %3428 = vmatpush1.xpose.msra.mxu0 0.0
    %3429 = vmatprep.subr.mxu0 0.0
    %3430 = vmatpush1.xpose.msra.mxu0 0.0
    %3431 = vmatprep.subr.mxu0 0.0
    %3432 = vmatpush1.xpose.msra.mxu0 0.0
    %3433 = vmatprep.subr.mxu0 0.0
    %3434 = vmatpush1.xpose.msra.mxu0 0.0
    %3435 = vmatprep.subr.mxu0 0.0
    %3436 = vmatpush1.xpose.msra.mxu0 0.0
    %3437 = vmatprep.subr.mxu0 0.0
    %3438 = vmatpush1.xpose.msra.mxu0 0.0
    %3439 = vmatprep.subr.mxu0 0.0
    %3440 = vmatpush1.xpose.msra.mxu0 0.0
    %3441 = vmatprep.subr.mxu0 0.0
    %3442 = vmatpush1.xpose.msra.mxu0 0.0
    %3443 = vmatprep.subr.mxu0 0.0
    %3444 = vmatpush1.xpose.msra.mxu0 0.0
    %3445 = vmatprep.subr.mxu0 0.0
    %3446 = vmatpush1.xpose.msra.mxu0 0.0
    %3447 = vmatprep.subr.mxu0 0.0
    %3448 = vmatpush1.xpose.msra.mxu0 0.0
    %3449 = vmatprep.subr.mxu0 0.0
    %3450 = vmatpush1.xpose.msra.mxu0 0.0
    %3451 = vmatprep.subr.mxu0 0.0
    %3452 = vmatpush1.xpose.msra.mxu0 0.0
    %3453 = vmatprep.subr.mxu0 0.0
    %3454 = vmatpush1.xpose.msra.mxu0 0.0
    %3455 = vmatprep.subr.mxu0 0.0
    %3456 = vmatpush1.xpose.msra.mxu0 0.0
    %3457 = vmatprep.subr.mxu0 0.0
    %3458 = vmatpush1.xpose.msra.mxu0 0.0
    %3459 = vmatprep.subr.mxu0 0.0
    %3460 = vmatpush1.xpose.msra.mxu0 0.0
    %3461 = vmatprep.subr.mxu0 0.0
    %3462 = vmatpush1.xpose.msra.mxu0 0.0
    %3463 = vmatprep.subr.mxu0 0.0
    %3464 = vmatpush1.xpose.msra.mxu0 0.0
    %3465 = vmatprep.subr.mxu0 0.0
    %3466 = vmatpush1.xpose.msra.mxu0 0.0
    %3467 = vmatprep.subr.mxu0 0.0
    %3468 = vmatpush1.xpose.msra.mxu0 0.0
    %3469 = vmatprep.subr.mxu0 0.0
    %3470 = vmatpush1.xpose.msra.mxu0 0.0
    %3471 = vmatprep.subr.mxu0 0.0
    %3472 = vmatpush1.xpose.msra.mxu0 0.0
    %3473 = vmatprep.subr.mxu0 0.0
    %3474 = vmatpush1.xpose.msra.mxu0 0.0
    %3475 = vmatprep.mubr.f32.mxu0 0.0
    %3476 = vmatmul.mubr.f32.gmra.mrb[0].mxu0 %v3407
    %v3477 = vpop.f32.mrb[0].mxu0
    %v3478 = vadd.f32 0.0, %v3477
    %v3479 = vpop.f32.mrb[0].mxu0
    %3480 = vdwg.mxu0
    %v3481 = vmul.f32 %v3478, 0.35355338
    %v3482 = vadd.f32 %v3481, %v352
    %v3483 = vsel %vm492, %v3482, -inf
    %3484 = vmax.xlane.f32.xlu0 %v3483
    %v3485 = vpop.xlane.xlu0 %3484
    %v3486 = vsub.f32 %v3482, %v3485
    %v3487 = vmul.f32 %v3486, 1.442695
    %v3488 = vpow.pop %v3487
    %v3489 = vsel %vm492, %v3488, 0.0
    %3490 = vadd.xlane.f32.xlu0 %v3489
    %v3491 = vpop.xlane.xlu0 %3490
    %v3492 = vrcp.pop %v3491
    %v3493 = vmul.f32 %v3488, %v3492
    %3494 = vrot.lane.b32.xlu0 %v2202, 40
    %v3495 = vpop.permute.xlu0 %3494
    %v3498 = vsel %vm492, %v3493, 0
    %3500 = vmatprep.subr.mxu0 0.0
    %3501 = vmatpush1.msra.mxu0 %v3495
    %3502 = vmatprep.subr.mxu0 0.0
    %3503 = vmatpush1.msra.mxu0 0.0
    %3504 = vmatprep.subr.mxu0 0.0
    %3505 = vmatpush1.msra.mxu0 0.0
    %3506 = vmatprep.subr.mxu0 0.0
    %3507 = vmatpush1.msra.mxu0 0.0
    %3508 = vmatprep.subr.mxu0 0.0
    %3509 = vmatpush1.msra.mxu0 0.0
    %3510 = vmatprep.subr.mxu0 0.0
    %3511 = vmatpush1.msra.mxu0 0.0
    %3512 = vmatprep.subr.mxu0 0.0
    %3513 = vmatpush1.msra.mxu0 0.0
    %3514 = vmatprep.subr.mxu0 0.0
    %3515 = vmatpush1.msra.mxu0 0.0
    %3516 = vmatprep.subr.mxu0 0.0
    %3517 = vmatpush1.msra.mxu0 0.0
    %3518 = vmatprep.subr.mxu0 0.0
    %3519 = vmatpush1.msra.mxu0 0.0
    %3520 = vmatprep.subr.mxu0 0.0
    %3521 = vmatpush1.msra.mxu0 0.0
    %3522 = vmatprep.subr.mxu0 0.0
    %3523 = vmatpush1.msra.mxu0 0.0
    %3524 = vmatprep.subr.mxu0 0.0
    %3525 = vmatpush1.msra.mxu0 0.0
    %3526 = vmatprep.subr.mxu0 0.0
    %3527 = vmatpush1.msra.mxu0 0.0
    %3528 = vmatprep.subr.mxu0 0.0
    %3529 = vmatpush1.msra.mxu0 0.0
    %3530 = vmatprep.subr.mxu0 0.0
    %3531 = vmatpush1.msra.mxu0 0.0
    %3532 = vmatprep.subr.mxu0 0.0
    %3533 = vmatpush1.msra.mxu0 0.0
    %3534 = vmatprep.subr.mxu0 0.0
    %3535 = vmatpush1.msra.mxu0 0.0
    %3536 = vmatprep.subr.mxu0 0.0
    %3537 = vmatpush1.msra.mxu0 0.0
    %3538 = vmatprep.subr.mxu0 0.0
    %3539 = vmatpush1.msra.mxu0 0.0
    %3540 = vmatprep.subr.mxu0 0.0
    %3541 = vmatpush1.msra.mxu0 0.0
    %3542 = vmatprep.subr.mxu0 0.0
    %3543 = vmatpush1.msra.mxu0 0.0
    %3544 = vmatprep.subr.mxu0 0.0
    %3545 = vmatpush1.msra.mxu0 0.0
    %3546 = vmatprep.subr.mxu0 0.0
    %3547 = vmatpush1.msra.mxu0 0.0
    %3548 = vmatprep.subr.mxu0 0.0
    %3549 = vmatpush1.msra.mxu0 0.0
    %3550 = vmatprep.subr.mxu0 0.0
    %3551 = vmatpush1.msra.mxu0 0.0
    %3552 = vmatprep.subr.mxu0 0.0
    %3553 = vmatpush1.msra.mxu0 0.0
    %3554 = vmatprep.subr.mxu0 0.0
    %3555 = vmatpush1.msra.mxu0 0.0
    %3556 = vmatprep.subr.mxu0 0.0
    %3557 = vmatpush1.msra.mxu0 0.0
    %3558 = vmatprep.subr.mxu0 0.0
    %3559 = vmatpush1.msra.mxu0 0.0
    %3560 = vmatprep.subr.mxu0 0.0
    %3561 = vmatpush1.msra.mxu0 0.0
    %3562 = vmatprep.subr.mxu0 0.0
    %3563 = vmatpush1.msra.mxu0 0.0
    %3564 = vmatprep.mubr.f32.mxu0 0.0
    %3565 = vmatmul.mubr.f32.gmra.mrb[0].mxu0 %v3498
    %v3566 = vpop.f32.mrb[0].mxu0
    %v3567 = vadd.f32 0.0, %v3566
    %v3568 = vpop.f32.mrb[0].mxu0
    %3569 = vdwg.mxu0
    %3571 = vrot.lane.b32.xlu0 %v3567, 24
    %v3572 = vpop.permute.xlu0 %3571
    %3574 = vst.msk [vmem:[#allocation2 + $0x8] sm:$0xff] %vm1175, %v3572
    %v3575 = vld [vmem:[#allocation2] sm:$0xff]
    %v3576 = vld [vmem:[#allocation2 + $0x8] sm:$0xff]
    %v3577 = vadd.f32 %v2122, %v3575
    %v3578 = vadd.f32 %v2123, %v3576
    %v3579 = vsel %vm374, %v3577, 0.0
    %3580 = vadd.xlane.f32.xlu0 %v3579
    %v3581 = vpop.xlane.xlu0 %3580
    %v3582 = vsel %vm374, %v3578, 0.0
    %3583 = vadd.xlane.f32.xlu0 %v3582
    %v3584 = vpop.xlane.xlu0 %3583
    %v3585 = vmul.f32 %v3581, %v381
    %v3586 = vmul.f32 %v3584, %v381
    %v3587 = vsub.f32 %v3577, %v3585
    %v3588 = vsub.f32 %v3578, %v3586
    %v3589 = vmul.f32 %v3587, %v3587
    %v3590 = vmul.f32 %v3588, %v3588
    %v3591 = vsel %vm374, %v3589, 0.0
    %3592 = vadd.xlane.f32.xlu0 %v3591
    %v3593 = vpop.xlane.xlu0 %3592
    %v3594 = vsel %vm374, %v3590, 0.0
    %3595 = vadd.xlane.f32.xlu0 %v3594
    %v3596 = vpop.xlane.xlu0 %3595
    %v3597 = vmul.f32 %v3593, %v381
    %v3598 = vmul.f32 %v3596, %v381
    %v3599 = vadd.f32 %v3597, 1e-05
    %v3600 = vadd.f32 %v3598, 1e-05
    %v3601 = vrsqrt.pop %v3599
    %v3602 = vrsqrt.pop %v3600
    %v3603 = vmul.f32 %v3587, %v3601
    %v3604 = vmul.f32 %v3588, %v3602
    %v3605 = vmul.f32 %v3603, %v2089
    %v3606 = vmul.f32 %v3604, %v2089
    %v3607 = vadd.f32 %v3605, %v2093
    %v3608 = vadd.f32 %v3606, %v2093
    %v3609 = vlaneseq
    %v3610 = vshrl.u32 %v3609, 7
    %v3611 = vsub.s32 2, %v3610
    %v3612 = vrot.slane %v2085, %v3611
    %v3614 = vsel %vm374, %v3607, 0
    %v3617 = vsel %vm374, %v3608, 0
    %3619 = vmatprep.subr.mxu0 0.0
    %3620 = vmatpush1.msra.mxu0 %v2075
    %3621 = vmatprep.subr.mxu0 0.0
    %3622 = vmatpush1.msra.mxu0 %v2076
    %3623 = vmatprep.subr.mxu0 0.0
    %3624 = vmatpush1.msra.mxu0 %v2077
    %3625 = vmatprep.subr.mxu0 0.0
    %3626 = vmatpush1.msra.mxu0 %v2078
    %3627 = vmatprep.subr.mxu0 0.0
    %3628 = vmatpush1.msra.mxu0 0.0
    %3629 = vmatprep.subr.mxu0 0.0
    %3630 = vmatpush1.msra.mxu0 0.0
    %3631 = vmatprep.subr.mxu0 0.0
    %3632 = vmatpush1.msra.mxu0 0.0
    %3633 = vmatprep.subr.mxu0 0.0
    %3634 = vmatpush1.msra.mxu0 0.0
    %3635 = vmatprep.subr.mxu0 0.0
    %3636 = vmatpush1.msra.mxu0 0.0
    %3637 = vmatprep.subr.mxu0 0.0
    %3638 = vmatpush1.msra.mxu0 0.0
    %3639 = vmatprep.subr.mxu0 0.0
    %3640 = vmatpush1.msra.mxu0 0.0
    %3641 = vmatprep.subr.mxu0 0.0
    %3642 = vmatpush1.msra.mxu0 0.0
    %3643 = vmatprep.subr.mxu0 0.0
    %3644 = vmatpush1.msra.mxu0 0.0
    %3645 = vmatprep.subr.mxu0 0.0
    %3646 = vmatpush1.msra.mxu0 0.0
    %3647 = vmatprep.subr.mxu0 0.0
    %3648 = vmatpush1.msra.mxu0 0.0
    %3649 = vmatprep.subr.mxu0 0.0
    %3650 = vmatpush1.msra.mxu0 0.0
    %3651 = vmatprep.subr.mxu0 0.0
    %3652 = vmatpush1.msra.mxu0 0.0
    %3653 = vmatprep.subr.mxu0 0.0
    %3654 = vmatpush1.msra.mxu0 0.0
    %3655 = vmatprep.subr.mxu0 0.0
    %3656 = vmatpush1.msra.mxu0 0.0
    %3657 = vmatprep.subr.mxu0 0.0
    %3658 = vmatpush1.msra.mxu0 0.0
    %3659 = vmatprep.subr.mxu0 0.0
    %3660 = vmatpush1.msra.mxu0 0.0
    %3661 = vmatprep.subr.mxu0 0.0
    %3662 = vmatpush1.msra.mxu0 0.0
    %3663 = vmatprep.subr.mxu0 0.0
    %3664 = vmatpush1.msra.mxu0 0.0
    %3665 = vmatprep.subr.mxu0 0.0
    %3666 = vmatpush1.msra.mxu0 0.0
    %3667 = vmatprep.subr.mxu0 0.0
    %3668 = vmatpush1.msra.mxu0 0.0
    %3669 = vmatprep.subr.mxu0 0.0
    %3670 = vmatpush1.msra.mxu0 0.0
    %3671 = vmatprep.subr.mxu0 0.0
    %3672 = vmatpush1.msra.mxu0 0.0
    %3673 = vmatprep.subr.mxu0 0.0
    %3674 = vmatpush1.msra.mxu0 0.0
    %3675 = vmatprep.subr.mxu0 0.0
    %3676 = vmatpush1.msra.mxu0 0.0
    %3677 = vmatprep.subr.mxu0 0.0
    %3678 = vmatpush1.msra.mxu0 0.0
    %3679 = vmatprep.subr.mxu0 0.0
    %3680 = vmatpush1.msra.mxu0 0.0
    %3681 = vmatprep.subr.mxu0 0.0
    %3682 = vmatpush1.msra.mxu0 0.0
    %3683 = vmatprep.mubr.f32.mxu0 0.0
    %3684 = vmatmul.mubr.f32.gmra.mrb[0].mxu0 %v3614
    %v3685 = vpop.f32.mrb[0].mxu0
    %v3686 = vadd.f32 %v3612, %v3685
    %v3687 = vpop.f32.mrb[0].mxu0
    %3688 = vmatprep.mubr.f32.mxu0 0.0
    %3689 = vmatmul.mubr.f32.gmra.mrb[0].mxu0 %v3617
    %v3690 = vpop.f32.mrb[0].mxu0
    %v3691 = vadd.f32 %v3612, %v3690
    %v3692 = vpop.f32.mrb[0].mxu0
    %3693 = vdwg.mxu0
    %v3694 = vmax.f32 %v3686, 0.0
    %v3695 = vmax.f32 %v3691, 0.0
    %v3696 = vlaneseq
    %v3697 = vshrl.u32 %v3696, 7
    %v3698 = vsub.s32 3, %v3697
    %v3699 = vrot.slane %v2085, %v3698
    %v3701 = vsel %vm374, %v3694, 0
    %v3704 = vsel %vm374, %v3695, 0
    %3706 = vmatprep.subr.mxu0 0.0
    %3707 = vmatpush1.msra.mxu0 %v2080
    %3708 = vmatprep.subr.mxu0 0.0
    %3709 = vmatpush1.msra.mxu0 %v2081
    %3710 = vmatprep.subr.mxu0 0.0
    %3711 = vmatpush1.msra.mxu0 %v2082
    %3712 = vmatprep.subr.mxu0 0.0
    %3713 = vmatpush1.msra.mxu0 %v2083
    %3714 = vmatprep.subr.mxu0 0.0
    %3715 = vmatpush1.msra.mxu0 0.0
    %3716 = vmatprep.subr.mxu0 0.0
    %3717 = vmatpush1.msra.mxu0 0.0
    %3718 = vmatprep.subr.mxu0 0.0
    %3719 = vmatpush1.msra.mxu0 0.0
    %3720 = vmatprep.subr.mxu0 0.0
    %3721 = vmatpush1.msra.mxu0 0.0
    %3722 = vmatprep.subr.mxu0 0.0
    %3723 = vmatpush1.msra.mxu0 0.0
    %3724 = vmatprep.subr.mxu0 0.0
    %3725 = vmatpush1.msra.mxu0 0.0
    %3726 = vmatprep.subr.mxu0 0.0
    %3727 = vmatpush1.msra.mxu0 0.0
    %3728 = vmatprep.subr.mxu0 0.0
    %3729 = vmatpush1.msra.mxu0 0.0
    %3730 = vmatprep.subr.mxu0 0.0
    %3731 = vmatpush1.msra.mxu0 0.0
    %3732 = vmatprep.subr.mxu0 0.0
    %3733 = vmatpush1.msra.mxu0 0.0
    %3734 = vmatprep.subr.mxu0 0.0
    %3735 = vmatpush1.msra.mxu0 0.0
    %3736 = vmatprep.subr.mxu0 0.0
    %3737 = vmatpush1.msra.mxu0 0.0
    %3738 = vmatprep.subr.mxu0 0.0
    %3739 = vmatpush1.msra.mxu0 0.0
    %3740 = vmatprep.subr.mxu0 0.0
    %3741 = vmatpush1.msra.mxu0 0.0
    %3742 = vmatprep.subr.mxu0 0.0
    %3743 = vmatpush1.msra.mxu0 0.0
    %3744 = vmatprep.subr.mxu0 0.0
    %3745 = vmatpush1.msra.mxu0 0.0
    %3746 = vmatprep.subr.mxu0 0.0
    %3747 = vmatpush1.msra.mxu0 0.0
    %3748 = vmatprep.subr.mxu0 0.0
    %3749 = vmatpush1.msra.mxu0 0.0
    %3750 = vmatprep.subr.mxu0 0.0
    %3751 = vmatpush1.msra.mxu0 0.0
    %3752 = vmatprep.subr.mxu0 0.0
    %3753 = vmatpush1.msra.mxu0 0.0
    %3754 = vmatprep.subr.mxu0 0.0
    %3755 = vmatpush1.msra.mxu0 0.0
    %3756 = vmatprep.subr.mxu0 0.0
    %3757 = vmatpush1.msra.mxu0 0.0
    %3758 = vmatprep.subr.mxu0 0.0
    %3759 = vmatpush1.msra.mxu0 0.0
    %3760 = vmatprep.subr.mxu0 0.0
    %3761 = vmatpush1.msra.mxu0 0.0
    %3762 = vmatprep.subr.mxu0 0.0
    %3763 = vmatpush1.msra.mxu0 0.0
    %3764 = vmatprep.subr.mxu0 0.0
    %3765 = vmatpush1.msra.mxu0 0.0
    %3766 = vmatprep.subr.mxu0 0.0
    %3767 = vmatpush1.msra.mxu0 0.0
    %3768 = vmatprep.subr.mxu0 0.0
    %3769 = vmatpush1.msra.mxu0 0.0
    %3770 = vmatprep.mubr.f32.mxu0 0.0
    %3771 = vmatmul.mubr.f32.gmra.mrb[0].mxu0 %v3701
    %v3772 = vpop.f32.mrb[0].mxu0
    %v3773 = vadd.f32 %v3699, %v3772
    %v3774 = vpop.f32.mrb[0].mxu0
    %3775 = vmatprep.mubr.f32.mxu0 0.0
    %3776 = vmatmul.mubr.f32.gmra.mrb[0].mxu0 %v3704
    %v3777 = vpop.f32.mrb[0].mxu0
    %v3778 = vadd.f32 %v3699, %v3777
    %v3779 = vpop.f32.mrb[0].mxu0
    %3780 = vdwg.mxu0
    %v3781 = vadd.f32 %v3577, %v3773
    %v3782 = vadd.f32 %v3578, %v3778
    %v3783 = vld [vmem:[%s8] sm:$0xff]
    %v3784 = vld [vmem:[%s8 + $0x8] sm:$0xff]
    %v3785 = vld [vmem:[%s8 + $0x10] sm:$0xff]
    %v3786 = vld [vmem:[%s8 + $0x18] sm:$0xff]
    %v3789 = vrot.slane %v3781, 7
    %v3790 = vrot.slane %v3782, 6
    %v3791 = vsel %vm326, %v3790, %v3789
    %v3792 = vsel %vm374, %v3791, 0
    %3794 = vmatprep.subr.mxu0 0.0
    %3795 = vmatpush1.msra.mxu0 %v3783
    %3796 = vmatprep.subr.mxu0 0.0
    %3797 = vmatpush1.msra.mxu0 %v3784
    %3798 = vmatprep.subr.mxu0 0.0
    %3799 = vmatpush1.msra.mxu0 %v3785
    %3800 = vmatprep.subr.mxu0 0.0
    %3801 = vmatpush1.msra.mxu0 %v3786
    %3802 = vmatprep.subr.mxu0 0.0
    %3803 = vmatpush1.msra.mxu0 0.0
    %3804 = vmatprep.subr.mxu0 0.0
    %3805 = vmatpush1.msra.mxu0 0.0
    %3806 = vmatprep.subr.mxu0 0.0
    %3807 = vmatpush1.msra.mxu0 0.0
    %3808 = vmatprep.subr.mxu0 0.0
    %3809 = vmatpush1.msra.mxu0 0.0
    %3810 = vmatprep.subr.mxu0 0.0
    %3811 = vmatpush1.msra.mxu0 0.0
    %3812 = vmatprep.subr.mxu0 0.0
    %3813 = vmatpush1.msra.mxu0 0.0
    %3814 = vmatprep.subr.mxu0 0.0
    %3815 = vmatpush1.msra.mxu0 0.0
    %3816 = vmatprep.subr.mxu0 0.0
    %3817 = vmatpush1.msra.mxu0 0.0
    %3818 = vmatprep.subr.mxu0 0.0
    %3819 = vmatpush1.msra.mxu0 0.0
    %3820 = vmatprep.subr.mxu0 0.0
    %3821 = vmatpush1.msra.mxu0 0.0
    %3822 = vmatprep.subr.mxu0 0.0
    %3823 = vmatpush1.msra.mxu0 0.0
    %3824 = vmatprep.subr.mxu0 0.0
    %3825 = vmatpush1.msra.mxu0 0.0
    %3826 = vmatprep.subr.mxu0 0.0
    %3827 = vmatpush1.msra.mxu0 0.0
    %3828 = vmatprep.subr.mxu0 0.0
    %3829 = vmatpush1.msra.mxu0 0.0
    %3830 = vmatprep.subr.mxu0 0.0
    %3831 = vmatpush1.msra.mxu0 0.0
    %3832 = vmatprep.subr.mxu0 0.0
    %3833 = vmatpush1.msra.mxu0 0.0
    %3834 = vmatprep.subr.mxu0 0.0
    %3835 = vmatpush1.msra.mxu0 0.0
    %3836 = vmatprep.subr.mxu0 0.0
    %3837 = vmatpush1.msra.mxu0 0.0
    %3838 = vmatprep.subr.mxu0 0.0
    %3839 = vmatpush1.msra.mxu0 0.0
    %3840 = vmatprep.subr.mxu0 0.0
    %3841 = vmatpush1.msra.mxu0 0.0
    %3842 = vmatprep.subr.mxu0 0.0
    %3843 = vmatpush1.msra.mxu0 0.0
    %3844 = vmatprep.subr.mxu0 0.0
    %3845 = vmatpush1.msra.mxu0 0.0
    %3846 = vmatprep.subr.mxu0 0.0
    %3847 = vmatpush1.msra.mxu0 0.0
    %3848 = vmatprep.subr.mxu0 0.0
    %3849 = vmatpush1.msra.mxu0 0.0
    %3850 = vmatprep.subr.mxu0 0.0
    %3851 = vmatpush1.msra.mxu0 0.0
    %3852 = vmatprep.subr.mxu0 0.0
    %3853 = vmatpush1.msra.mxu0 0.0
    %3854 = vmatprep.subr.mxu0 0.0
    %3855 = vmatpush1.msra.mxu0 0.0
    %3856 = vmatprep.subr.mxu0 0.0
    %3857 = vmatpush1.msra.mxu0 0.0
    %3858 = vmatprep.mubr.f32.mxu0 0.0
    %3859 = vmatmul.mubr.f32.gmra.mrb[0].mxu0 %v3792
    %v3860 = vpop.f32.mrb[0].mxu0
    %v3861 = vadd.f32 0.0, %v3860
    %v3862 = vpop.f32.mrb[0].mxu0
    %3863 = vdwg.mxu0
    %3864 = vst [vmem:[#allocation3] sm:$0x3] %v3861
    // Predicated region
    $region38: #{cosan_forward.1} parent=1 // pred_check
      _
    $region39: #{cosan_forward.1} parent=1 // pred_check_branch
      %3866 = sbr.rel (0) target = $region41
    $region40: #{cosan_forward.1} parent=1 // pred_region
      %s3868 = ssub.s32 32, 32
      %3869 = vsyncadd [#allocation4], %s3868
      %s3871 = sshll.u32 [#allocation3], 4
      %s3872 = int_to_ptr.vmem [resolvable:$true] %s3871
      %3874 = dma.vmem_to_hbm [thread:$0]  %s3872, 32, %s9, [#allocation4]
    $region41: #{cosan_forward.1} parent=1 // pred_fallthru
      _
    // Predicated region
    $region42: #{cosan_forward.1} parent=1 // pred_check
      _
    $region43: #{cosan_forward.1} parent=1 // pred_check_branch
      %3876 = sbr.rel (0) target = $region45
    $region44: #{cosan_forward.1} parent=1 // pred_region
      %3877 = dma.done [#allocation4], 32
    $region45: #{cosan_forward.1} parent=1 // pred_fallthru
      _
    %3878 = vsyncpa [#allocation4], 1

</llo_original>
